<compile_context>
chip_gen: v5e
topology: v5e:2x2
jax: 0.10.0
libtpu: 0.0.40
codegen_flags: <defaults>
</compile_context>

<pallas_src>
import math
import functools

import jax
import jax.numpy as jnp
import numpy as np
from jax import lax
from jax.experimental import pallas as pl
from jax.experimental.pallas import tpu as pltpu


_SQRT_2_OVER_PI = math.sqrt(2.0 / math.pi)


def _gelu_new(x):
    # GPT-2 "new" gelu (tanh approximation); dtype follows x (bf16 on v6e/v7x).
    return 0.5 * x * (1.0 + jnp.tanh(_SQRT_2_OVER_PI * (x + 0.044715 * x * x * x)))


def _masked_layernorm(x, m, inv_n, inv_nm1, w, b, eps):
    # torch.std_mean(x[..., mask == 1], -1, keepdim=True): mean and *unbiased*
    # std over the masked channel subset, then (x - mean) / (std + eps) * w + b
    # applied to ALL channels.  inv_n / inv_nm1 are hoisted (mask is constant).
    mean = jnp.sum(x * m, axis=-1, keepdims=True) * inv_n
    diff = (x - mean) * m
    var = jnp.sum(diff * diff, axis=-1, keepdims=True) * inv_nm1
    inv_std = pl.reciprocal(jnp.sqrt(var) + eps, approx=True)   # EUP slot
    return (x - mean) * inv_std * w + b


def gpt_block_kernel(x_ref, mask_ref, ln1w_ref, ln1b_ref, ln2w_ref, ln2b_ref,
                     wq_ref, bq_ref, wkv_ref, bkv_ref, wo_ref, bo_ref,
                     wfc_ref, bfc_ref, wproj_ref, bproj_ref,
                     out_ref,
                     k_cache, v_cache,
                     *, eps, num_heads, head_dim, gelu_bf16):
    f32 = jnp.float32
    bf16 = jnp.bfloat16
    TQ = x_ref.shape[1]          # q_block (== kv block size)
    H = x_ref.shape[2]
    n_ff = wfc_ref.shape[0]
    qi = pl.program_id(1)

    m = mask_ref[...]                                   # [1, H] f32
    # Hoisted mask scalars (mask is constant for the whole kernel).
    n = jnp.sum(m, axis=-1, keepdims=True)              # [1, 1]
    inv_n = 1.0 / n
    # Guard: unbiased std is undefined for a single active channel (torch would
    # give NaN); clamp so the kernel never produces inf/NaN from 1/(n-1).
    inv_nm1 = 1.0 / jnp.maximum(n - 1.0, 1.0)

    def mln(h, w_ref, b_ref):
        return _masked_layernorm(h, m, inv_n, inv_nm1, w_ref[...], b_ref[...], eps)

    # --- masked LN1 of this block; project Q and append K/V to the per-batch
    #     cache.  CORRECTNESS: relies on the q grid axis being "arbitrary"
    #     (sequential, ascending) so blocks 0..qi-1 are already cached. --------
    xb = x_ref[0]                                                     # [TQ, H] f32 residual
    hb = (mln(xb, ln1w_ref, ln1b_ref) * m).astype(bf16)

    q0 = pl.multiple_of(qi * TQ, TQ)
    kv = jnp.dot(hb, wkv_ref[...], preferred_element_type=f32) + bkv_ref[...]   # [TQ, 2H]
    k_cache[pl.ds(q0, TQ), :] = kv[:, :H].astype(bf16)                # lane-dense stores
    v_cache[pl.ds(q0, TQ), :] = kv[:, H:].astype(bf16)

    qb = jnp.dot(hb, wq_ref[...], preferred_element_type=f32) + bq_ref[...]     # [TQ, H]
    qb = (qb * (1.0 / math.sqrt(head_dim))).astype(bf16)              # pre-scaled Q

    # --- causal attention: per head, diagonal block first (triangular mask),
    #     then an un-masked online-softmax loop over key blocks 0..qi-1. -------
    rows = lax.broadcasted_iota(jnp.int32, (TQ, TQ), 0)
    cols = lax.broadcasted_iota(jnp.int32, (TQ, TQ), 1)
    diag_ok = cols <= rows
    neg = jnp.float32(-1e30)

    attn = jnp.zeros((TQ, H), f32)
    for h in range(num_heads):
        lo = h * head_dim
        qh = qb[:, lo:lo + head_dim]                                  # [TQ, hd] bf16
        kd = k_cache[pl.ds(q0, TQ), lo:lo + head_dim]
        vd = v_cache[pl.ds(q0, TQ), lo:lo + head_dim]
        s = lax.dot_general(qh, kd, (((1,), (1,)), ((), ())),
                            preferred_element_type=f32)               # [TQ, TQ]
        s = jnp.where(diag_ok, s, neg)
        m_i = jnp.max(s, axis=-1, keepdims=True)
        p = jnp.exp(s - m_i)
        l_i = jnp.sum(p, axis=-1, keepdims=True)
        acc = jnp.dot(p.astype(bf16), vd, preferred_element_type=f32)  # [TQ, hd]

        def kv_step(j, carry, _qh=qh, _lo=lo):
            m_prev, l_prev, acc_prev = carry
            k0 = pl.multiple_of(j * TQ, TQ)
            kj = k_cache[pl.ds(k0, TQ), _lo:_lo + head_dim]
            vj = v_cache[pl.ds(k0, TQ), _lo:_lo + head_dim]
            sj = lax.dot_general(_qh, kj, (((1,), (1,)), ((), ())),
                                 preferred_element_type=f32)
            m_new = jnp.maximum(m_prev, jnp.max(sj, axis=-1, keepdims=True))
            alpha = jnp.exp(m_prev - m_new)
            pj = jnp.exp(sj - m_new)
            l_new = alpha * l_prev + jnp.sum(pj, axis=-1, keepdims=True)
            acc_new = alpha * acc_prev + jnp.dot(pj.astype(bf16), vj,
                                                 preferred_element_type=f32)
            return m_new, l_new, acc_new

        m_i, l_i, acc = lax.fori_loop(0, qi, kv_step, (m_i, l_i, acc))
        ctx = (acc * pl.reciprocal(l_i, approx=True)).astype(bf16)    # [TQ, hd]
        # Per-head out-projection accumulate (no concatenation / packing scratch).
        attn = attn + jnp.dot(ctx, wo_ref[lo:lo + head_dim, :],
                              preferred_element_type=f32)
    attn = attn + bo_ref[...]
    h1 = attn + xb                                                    # residual 1

    # --- masked LN2 + GPT-2 MLP (gelu_new), fori_loop over FF chunks ---------
    h2 = (mln(h1, ln2w_ref, ln2b_ref) * m).astype(bf16)

    def ff_step(ci, proj):
        fc = jnp.dot(h2, wfc_ref[ci], preferred_element_type=f32) + bfc_ref[ci]
        if gelu_bf16:                 # bf16 EUP tanh on v6e/v7x; set False on v5e
            fc = fc.astype(bf16)
        g = _gelu_new(fc)
        return proj + jnp.dot(g.astype(bf16), wproj_ref[ci],
                              preferred_element_type=f32)

    proj = lax.fori_loop(0, n_ff, ff_step, jnp.zeros((TQ, H), f32), unroll=True)

    out_ref[0] = (h1 + proj + bproj_ref[...]).astype(out_ref.dtype)   # residual 2


def prepare_params(params, *, ff_chunk=512):
    """One-time conversion of module params into kernel-friendly layout/dtypes.

    Matmul weights are cast to bf16 (MXU native) ONCE here, not per call, and
    the MLP weights are reshaped chunk-major so the kernel's FF loop can select
    chunks with a cheap leading-dim dynamic index.
    """
    f32, bf16 = jnp.float32, jnp.bfloat16
    H = params["w_qkv"].shape[0]
    FF = params["w_fc"].shape[1]
    ff_chunk = int(min(ff_chunk, FF))
    assert FF % ff_chunk == 0
    n_ff = FF // ff_chunk
    return {
        "mask":   params["mask"].astype(f32),
        "ln1_w":  params["ln1_w"].astype(f32),
        "ln1_b":  params["ln1_b"].astype(f32),
        "ln2_w":  params["ln2_w"].astype(f32),
        "ln2_b":  params["ln2_b"].astype(f32),
        "w_q":    params["w_qkv"][:, :H].astype(bf16),
        "b_q":    params["b_qkv"][:, :H].astype(f32),
        "w_kv":   params["w_qkv"][:, H:].astype(bf16),
        "b_kv":   params["b_qkv"][:, H:].astype(f32),
        "w_o":    params["w_o"].astype(bf16),
        "b_o":    params["b_o"].astype(f32),
        # (n_ff, H, ff_chunk) / (n_ff, 1, ff_chunk) / (n_ff, ff_chunk, H)
        "w_fc":   params["w_fc"].reshape(H, n_ff, ff_chunk).transpose(1, 0, 2).astype(bf16),
        "b_fc":   params["b_fc"].reshape(n_ff, 1, ff_chunk).astype(f32),
        "w_proj": params["w_proj"].reshape(n_ff, ff_chunk, H).astype(bf16),
        "b_proj": params["b_proj"].astype(f32),
    }


_PARAM_KEYS = ("mask", "ln1_w", "ln1_b", "ln2_w", "ln2_b", "w_q", "b_q",
               "w_kv", "b_kv", "w_o", "b_o", "w_fc", "b_fc", "w_proj", "b_proj")


def gpt_sparse_dim(x, prep, *, num_heads, eps=1e-5, q_block=None, gelu_bf16=True):
    B, S, H = x.shape
    assert H % num_heads == 0
    HD = H // num_heads
    n_ff, _, ff_chunk = prep["w_fc"].shape

    if q_block is None:
        q_block = min(S, 256)            # >=256-row M tiles where S allows
    assert S % q_block == 0 and q_block % 8 == 0
    n_q = S // q_block

    def build(single_buffer_weights):
        def fixed(shape):
            idx = (lambda b, q, _r=len(shape): (0,) * _r)
            if single_buffer_weights:
                # Constant-index weights: single VMEM buffer (no double-buffer).
                return pl.BlockSpec(shape, idx, pipeline_mode=pl.Buffered(1))
            return pl.BlockSpec(shape, idx)

        in_specs = [
            pl.BlockSpec((1, q_block, H), lambda b, q: (b, q, 0)),    # x (this q block)
            fixed((1, H)),                                            # mask
            fixed((1, H)), fixed((1, H)),                             # ln1 w, b
            fixed((1, H)), fixed((1, H)),                             # ln2 w, b
            fixed((H, H)), fixed((1, H)),                             # w_q, b_q
            fixed((H, 2 * H)), fixed((1, 2 * H)),                     # w_kv, b_kv
            fixed((H, H)), fixed((1, H)),                             # w_o, b_o
            fixed((n_ff, H, ff_chunk)), fixed((n_ff, 1, ff_chunk)),   # w_fc, b_fc
            fixed((n_ff, ff_chunk, H)), fixed((1, H)),                # w_proj, b_proj
        ]

        # --- generation-aware VMEM budget (weights + I/O blocks + K/V cache
        #     scratch + in-kernel temporaries), clamped below physical VMEM. ---
        wfac = 1 if single_buffer_weights else 2
        weight_bytes = sum(int(prep[k].size) * prep[k].dtype.itemsize
                           for k in _PARAM_KEYS)
        io_bytes = 2 * 2 * (q_block * H * 4)                 # x + out, double-buffered
        cache_bytes = 2 * S * H * 2                          # K/V bf16 scratch
        temp_bytes = 4 * (10 * q_block * H + 4 * q_block * q_block
                          + 3 * q_block * ff_chunk + 4 * q_block * HD)
        est = wfac * weight_bytes + io_bytes + cache_bytes + temp_bytes + (8 << 20)
        try:
            cap = pltpu.get_tpu_info().vmem_capacity_bytes   # 64 MiB/TC on v7x
        except Exception:
            cap = 64 << 20                                   # conservative fallback
        vmem_limit = int(min(max(est, 32 << 20), cap - (2 << 20)))

        kernel = functools.partial(
            gpt_block_kernel, eps=eps, num_heads=num_heads, head_dim=HD,
            gelu_bf16=gelu_bf16)

        return pl.pallas_call(
            kernel,
            out_shape=jax.ShapeDtypeStruct((B, S, H), jnp.float32),
            grid=(B, n_q),
            in_specs=in_specs,
            out_specs=pl.BlockSpec((1, q_block, H), lambda b, q: (b, q, 0)),
            scratch_shapes=[pltpu.VMEM((S, H), jnp.bfloat16),   # K cache (per batch elem)
                            pltpu.VMEM((S, H), jnp.bfloat16)],  # V cache
            # q axis MUST be "arbitrary" (sequential, ascending): the K/V cache
            # of block qi is written at grid step qi and read by all later steps
            # of the same batch element.  b axis is megacore-parallel.
            compiler_params=pltpu.CompilerParams(
                dimension_semantics=("parallel", "arbitrary"),
                vmem_limit_bytes=vmem_limit),
        )

    args = (x, prep["mask"], prep["ln1_w"], prep["ln1_b"], prep["ln2_w"], prep["ln2_b"],
            prep["w_q"], prep["b_q"], prep["w_kv"], prep["b_kv"],
            prep["w_o"], prep["b_o"], prep["w_fc"], prep["b_fc"],
            prep["w_proj"], prep["b_proj"])
    try:
        return build(True)(*args)
    except Exception:
        # pl.Buffered(1) single-buffering not supported on this jax version:
        # fall back to default (double-buffered) weight specs.
        return build(False)(*args)


def reference(x, params, *, num_heads, eps=1e-5):
    # Pure-JAX f32 reference of the same math (mirrors the PyTorch forward).
    m = params["mask"][0]
    B, S, H = x.shape
    HD = H // num_heads

    def mln(h, w, b):
        n = jnp.sum(m)
        mean = jnp.sum(h * m, axis=-1, keepdims=True) / n
        diff = (h - mean) * m
        var = jnp.sum(diff * diff, axis=-1, keepdims=True) / (n - 1.0)
        return (h - mean) / (jnp.sqrt(var) + eps) * w + b

    h = mln(x, params["ln1_w"][0], params["ln1_b"][0]) * m
    qkv = h @ params["w_qkv"] + params["b_qkv"][0]
    q, k, v = qkv[..., :H], qkv[..., H:2 * H], qkv[..., 2 * H:]

    def split(t):
        return t.reshape(B, S, num_heads, HD).transpose(0, 2, 1, 3)

    q, k, v = split(q), split(k), split(v)
    s = jnp.einsum("bhqd,bhkd->bhqk", q, k) / math.sqrt(HD)
    causal = jnp.tril(jnp.ones((S, S), dtype=bool))
    s = jnp.where(causal, s, -1e9)
    p = jax.nn.softmax(s, axis=-1)
    a = jnp.einsum("bhqk,bhkd->bhqd", p, v).transpose(0, 2, 1, 3).reshape(B, S, H)
    a = a @ params["w_o"] + params["b_o"][0]
    h1 = a + x
    h2 = mln(h1, params["ln2_w"][0], params["ln2_b"][0]) * m
    fc = h2 @ params["w_fc"] + params["b_fc"][0]
    fc = 0.5 * fc * (1.0 + jnp.tanh(math.sqrt(2.0 / math.pi) * (fc + 0.044715 * fc ** 3)))
    proj = fc @ params["w_proj"] + params["b_proj"][0]
    return h1 + proj


if __name__ == "__main__":
    B, S, H = 2, 16, 32
    NUM_HEADS = 4
    FF = 4 * H
    EPS = 1e-5

    key = jax.random.PRNGKey(0)
    keys = jax.random.split(key, 16)
    f32 = jnp.float32

    def w(k, shape, scale=0.02):
        return (scale * jax.random.normal(k, shape)).astype(f32)

    mask = jax.random.bernoulli(keys[0], 0.75, (H,)).astype(f32)
    mask = mask.at[:4].set(1.0)              # ensure >=2 active dims (unbiased std)
    params = {
        "mask":   mask.reshape(1, H),
        "ln1_w":  (1.0 + w(keys[1], (1, H))).astype(f32),
        "ln1_b":  w(keys[2], (1, H)),
        "ln2_w":  (1.0 + w(keys[3], (1, H))).astype(f32),
        "ln2_b":  w(keys[4], (1, H)),
        "w_qkv":  w(keys[5], (H, 3 * H)),
        "b_qkv":  w(keys[6], (1, 3 * H)),
        "w_o":    w(keys[7], (H, H)),
        "b_o":    w(keys[8], (1, H)),
        "w_fc":   w(keys[9], (H, FF)),
        "b_fc":   w(keys[10], (1, FF)),
        "w_proj": w(keys[11], (FF, H)),
        "b_proj": w(keys[12], (1, H)),
    }
    x = jax.random.normal(keys[13], (B, S, H)).astype(f32)

    # ff_chunk=64 -> two FF chunks (exercises the MLP fori_loop); q_block=8 ->
    # two query blocks per batch element (exercises the causal K/V-cache growth
    # and the online-softmax key-block loop).
    prep = prepare_params(params, ff_chunk=64)
    out = gpt_sparse_dim(x, prep, num_heads=NUM_HEADS, eps=EPS, q_block=8)
    out = jax.block_until_ready(out)

    ref = jax.block_until_ready(reference(x, params, num_heads=NUM_HEADS, eps=EPS))
    assert out.shape == (B, S, H)
    # bf16 matmul inputs, bf16 gelu and EUP approx reciprocals vs. f32 reference.
    np.testing.assert_allclose(np.asarray(out), np.asarray(ref), rtol=1e-2, atol=1e-2)
    print("KERNEL_OK")
</pallas_src>

<mosaic_0001>
module attributes {stable_mosaic.version = 11 : i64} {
  func.func @gpt_block_kernel(%arg0: i32, %arg1: i32, %arg2: memref<1x8x32xf32, #tpu.memory_space<vmem>>, %arg3: memref<1x32xf32, #tpu.memory_space<vmem>>, %arg4: memref<1x32xf32, #tpu.memory_space<vmem>>, %arg5: memref<1x32xf32, #tpu.memory_space<vmem>>, %arg6: memref<1x32xf32, #tpu.memory_space<vmem>>, %arg7: memref<1x32xf32, #tpu.memory_space<vmem>>, %arg8: memref<32x32xbf16, #tpu.memory_space<vmem>>, %arg9: memref<1x32xf32, #tpu.memory_space<vmem>>, %arg10: memref<32x64xbf16, #tpu.memory_space<vmem>>, %arg11: memref<1x64xf32, #tpu.memory_space<vmem>>, %arg12: memref<32x32xbf16, #tpu.memory_space<vmem>>, %arg13: memref<1x32xf32, #tpu.memory_space<vmem>>, %arg14: memref<2x32x64xbf16, #tpu.memory_space<vmem>>, %arg15: memref<2x1x64xf32, #tpu.memory_space<vmem>>, %arg16: memref<2x64x32xbf16, #tpu.memory_space<vmem>>, %arg17: memref<1x32xf32, #tpu.memory_space<vmem>>, %arg18: memref<1x8x32xf32, #tpu.memory_space<vmem>>, %arg19: memref<16x32xbf16, #tpu.memory_space<vmem>>, %arg20: memref<16x32xbf16, #tpu.memory_space<vmem>>) attributes {dimension_semantics = [#tpu.dimension_semantics<parallel>, #tpu.dimension_semantics<arbitrary>], iteration_bounds = array<i64: 2, 2>, scalar_prefetch = 0 : i64, scratch_operands = 2 : i64, tpu.core_type = #tpu.core_type<tc>, window_params = [{transform_indices = @transform_0, window_bounds = array<i64: 1, 8, 32>}, {pipeline_mode = #tpu.pipeline_mode<synchronous>, transform_indices = @transform_1, window_bounds = array<i64: 1, 32>}, {pipeline_mode = #tpu.pipeline_mode<synchronous>, transform_indices = @transform_2, window_bounds = array<i64: 1, 32>}, {pipeline_mode = #tpu.pipeline_mode<synchronous>, transform_indices = @transform_3, window_bounds = array<i64: 1, 32>}, {pipeline_mode = #tpu.pipeline_mode<synchronous>, transform_indices = @transform_4, window_bounds = array<i64: 1, 32>}, {pipeline_mode = #tpu.pipeline_mode<synchronous>, transform_indices = @transform_5, window_bounds = array<i64: 1, 32>}, {pipeline_mode = #tpu.pipeline_mode<synchronous>, transform_indices = @transform_6, window_bounds = array<i64: 32, 32>}, {pipeline_mode = #tpu.pipeline_mode<synchronous>, transform_indices = @transform_7, window_bounds = array<i64: 1, 32>}, {pipeline_mode = #tpu.pipeline_mode<synchronous>, transform_indices = @transform_8, window_bounds = array<i64: 32, 64>}, {pipeline_mode = #tpu.pipeline_mode<synchronous>, transform_indices = @transform_9, window_bounds = array<i64: 1, 64>}, {pipeline_mode = #tpu.pipeline_mode<synchronous>, transform_indices = @transform_10, window_bounds = array<i64: 32, 32>}, {pipeline_mode = #tpu.pipeline_mode<synchronous>, transform_indices = @transform_11, window_bounds = array<i64: 1, 32>}, {pipeline_mode = #tpu.pipeline_mode<synchronous>, transform_indices = @transform_12, window_bounds = array<i64: 2, 32, 64>}, {pipeline_mode = #tpu.pipeline_mode<synchronous>, transform_indices = @transform_13, window_bounds = array<i64: 2, 1, 64>}, {pipeline_mode = #tpu.pipeline_mode<synchronous>, transform_indices = @transform_14, window_bounds = array<i64: 2, 64, 32>}, {pipeline_mode = #tpu.pipeline_mode<synchronous>, transform_indices = @transform_15, window_bounds = array<i64: 1, 32>}, {transform_indices = @transform_16, window_bounds = array<i64: 1, 8, 32>}]} {
    %c0 = arith.constant 0 : index
    %c0_0 = arith.constant 0 : index
    %0 = vector.load %arg3[%c0, %c0_0] : memref<1x32xf32, #tpu.memory_space<vmem>>, vector<1x32xf32>
    %cst = arith.constant dense<0.000000e+00> : vector<1xf32>
    %1 = vector.multi_reduction <add>, %0, %cst [1] : vector<1x32xf32> to vector<1xf32>
    %2 = vector.shape_cast %1 : vector<1xf32> to vector<1x1xf32>
    %cst_1 = arith.constant 1.000000e+00 : f32
    %3 = vector.broadcast %cst_1 : f32 to vector<1x1xf32>
    %4 = arith.divf %3, %2 : vector<1x1xf32>
    %cst_2 = arith.constant 1.000000e+00 : f32
    %5 = vector.broadcast %cst_2 : f32 to vector<1x1xf32>
    %6 = arith.subf %2, %5 : vector<1x1xf32>
    %cst_3 = arith.constant 1.000000e+00 : f32
    %7 = vector.broadcast %cst_3 : f32 to vector<1x1xf32>
    %8 = arith.maximumf %6, %7 : vector<1x1xf32>
    %cst_4 = arith.constant 1.000000e+00 : f32
    %9 = vector.broadcast %cst_4 : f32 to vector<1x1xf32>
    %10 = arith.divf %9, %8 : vector<1x1xf32>
    %c0_5 = arith.constant 0 : index
    %c0_6 = arith.constant 0 : index
    %c0_7 = arith.constant 0 : index
    %11 = vector.load %arg2[%c0_5, %c0_6, %c0_7] : memref<1x8x32xf32, #tpu.memory_space<vmem>>, vector<1x8x32xf32>
    %12 = vector.shape_cast %11 : vector<1x8x32xf32> to vector<8x32xf32>
    %c0_8 = arith.constant 0 : index
    %c0_9 = arith.constant 0 : index
    %13 = vector.load %arg4[%c0_8, %c0_9] : memref<1x32xf32, #tpu.memory_space<vmem>>, vector<1x32xf32>
    %c0_10 = arith.constant 0 : index
    %c0_11 = arith.constant 0 : index
    %14 = vector.load %arg5[%c0_10, %c0_11] : memref<1x32xf32, #tpu.memory_space<vmem>>, vector<1x32xf32>
    %15 = vector.broadcast %0 : vector<1x32xf32> to vector<8x32xf32>
    %16 = arith.mulf %12, %15 : vector<8x32xf32>
    %cst_12 = arith.constant dense<0.000000e+00> : vector<8xf32>
    %17 = vector.multi_reduction <add>, %16, %cst_12 [1] : vector<8x32xf32> to vector<8xf32>
    %18 = vector.shape_cast %17 : vector<8xf32> to vector<8x1xf32>
    %19 = vector.broadcast %4 : vector<1x1xf32> to vector<8x1xf32>
    %20 = arith.mulf %18, %19 : vector<8x1xf32>
    %21 = vector.broadcast %20 : vector<8x1xf32> to vector<8x32xf32>
    %22 = arith.subf %12, %21 : vector<8x32xf32>
    %23 = vector.broadcast %0 : vector<1x32xf32> to vector<8x32xf32>
    %24 = arith.mulf %22, %23 : vector<8x32xf32>
    %25 = arith.mulf %24, %24 : vector<8x32xf32>
    %cst_13 = arith.constant dense<0.000000e+00> : vector<8xf32>
    %26 = vector.multi_reduction <add>, %25, %cst_13 [1] : vector<8x32xf32> to vector<8xf32>
    %27 = vector.shape_cast %26 : vector<8xf32> to vector<8x1xf32>
    %28 = vector.broadcast %10 : vector<1x1xf32> to vector<8x1xf32>
    %29 = arith.mulf %27, %28 : vector<8x1xf32>
    %30 = math.sqrt %29 : vector<8x1xf32>
    %cst_14 = arith.constant 9.99999974E-6 : f32
    %31 = vector.broadcast %cst_14 : f32 to vector<8x1xf32>
    %32 = arith.addf %30, %31 : vector<8x1xf32>
    %33 = tpu.reciprocal %32 {approx = true} : vector<8x1xf32> -> vector<8x1xf32>
    %34 = vector.broadcast %20 : vector<8x1xf32> to vector<8x32xf32>
    %35 = arith.subf %12, %34 : vector<8x32xf32>
    %36 = vector.broadcast %33 : vector<8x1xf32> to vector<8x32xf32>
    %37 = arith.mulf %35, %36 : vector<8x32xf32>
    %38 = vector.broadcast %13 : vector<1x32xf32> to vector<8x32xf32>
    %39 = arith.mulf %37, %38 : vector<8x32xf32>
    %40 = vector.broadcast %14 : vector<1x32xf32> to vector<8x32xf32>
    %41 = arith.addf %39, %40 : vector<8x32xf32>
    %42 = vector.broadcast %0 : vector<1x32xf32> to vector<8x32xf32>
    %43 = arith.mulf %41, %42 : vector<8x32xf32>
    %44 = arith.truncf %43 : vector<8x32xf32> to vector<8x32xbf16>
    %c8_i32 = arith.constant 8 : i32
    %45 = arith.muli %arg1, %c8_i32 : i32
    %46 = tpu.assume_multiple %45, 8 : i32
    %c0_15 = arith.constant 0 : index
    %c0_16 = arith.constant 0 : index
    %47 = vector.load %arg10[%c0_15, %c0_16] : memref<32x64xbf16, #tpu.memory_space<vmem>>, vector<32x64xbf16>
    %cst_17 = arith.constant dense<0.000000e+00> : vector<8x64xf32>
    %48 = tpu.matmul %44, %47, %cst_17 {dimension_numbers = #tpu.dot_dimension_numbers<[1], [0], [0], [1], [0, 0, 1, 1], [], []>} : vector<8x32xbf16>, vector<32x64xbf16>, vector<8x64xf32> -> vector<8x64xf32>
    %c0_18 = arith.constant 0 : index
    %c0_19 = arith.constant 0 : index
    %49 = vector.load %arg11[%c0_18, %c0_19] : memref<1x64xf32, #tpu.memory_space<vmem>>, vector<1x64xf32>
    %50 = vector.broadcast %49 : vector<1x64xf32> to vector<8x64xf32>
    %51 = arith.addf %48, %50 : vector<8x64xf32>
    %52 = vector.extract_strided_slice %51 {offsets = [0, 0], sizes = [8, 32], strides = [1, 1]} : vector<8x64xf32> to vector<8x32xf32>
    %53 = arith.truncf %52 : vector<8x32xf32> to vector<8x32xbf16>
    %54 = arith.index_cast %46 : i32 to index
    %c0_20 = arith.constant 0 : index
    %55 = vector.load %arg19[%54, %c0_20] : memref<16x32xbf16, #tpu.memory_space<vmem>>, vector<8x32xbf16>
    tpu.vector_store %arg19[%54, %c0_20], %53 {strides = array<i32>} : memref<16x32xbf16, #tpu.memory_space<vmem>>, vector<8x32xbf16>,
    %56 = vector.extract_strided_slice %51 {offsets = [0, 32], sizes = [8, 32], strides = [1, 1]} : vector<8x64xf32> to vector<8x32xf32>
    %57 = arith.truncf %56 : vector<8x32xf32> to vector<8x32xbf16>
    %58 = arith.index_cast %46 : i32 to index
    %c0_21 = arith.constant 0 : index
    %59 = vector.load %arg20[%58, %c0_21] : memref<16x32xbf16, #tpu.memory_space<vmem>>, vector<8x32xbf16>
    tpu.vector_store %arg20[%58, %c0_21], %57 {strides = array<i32>} : memref<16x32xbf16, #tpu.memory_space<vmem>>, vector<8x32xbf16>,
    %c0_22 = arith.constant 0 : index
    %c0_23 = arith.constant 0 : index
    %60 = vector.load %arg8[%c0_22, %c0_23] : memref<32x32xbf16, #tpu.memory_space<vmem>>, vector<32x32xbf16>
    %cst_24 = arith.constant dense<0.000000e+00> : vector<8x32xf32>
    %61 = tpu.matmul %44, %60, %cst_24 {dimension_numbers = #tpu.dot_dimension_numbers<[1], [0], [0], [1], [0, 0, 1, 1], [], []>} : vector<8x32xbf16>, vector<32x32xbf16>, vector<8x32xf32> -> vector<8x32xf32>
    %c0_25 = arith.constant 0 : index
    %c0_26 = arith.constant 0 : index
    %62 = vector.load %arg9[%c0_25, %c0_26] : memref<1x32xf32, #tpu.memory_space<vmem>>, vector<1x32xf32>
    %63 = vector.broadcast %62 : vector<1x32xf32> to vector<8x32xf32>
    %64 = arith.addf %61, %63 : vector<8x32xf32>
    %cst_27 = arith.constant 0.353553385 : f32
    %65 = vector.broadcast %cst_27 : f32 to vector<8x32xf32>
    %66 = arith.mulf %64, %65 : vector<8x32xf32>
    %67 = arith.truncf %66 : vector<8x32xf32> to vector<8x32xbf16>
    %68 = tpu.iota {dimensions = array<i32: 0>} : vector<8x8xi32>
    %69 = tpu.iota {dimensions = array<i32: 1>} : vector<8x8xi32>
    %70 = arith.cmpi sle, %69, %68 : vector<8x8xi32>
    %cst_28 = arith.constant 0.000000e+00 : f32
    %71 = vector.broadcast %cst_28 : f32 to vector<8x32xf32>
    %72 = vector.extract_strided_slice %67 {offsets = [0, 0], sizes = [8, 8], strides = [1, 1]} : vector<8x32xbf16> to vector<8x8xbf16>
    %73 = arith.index_cast %46 : i32 to index
    %c0_29 = arith.constant 0 : index
    %74 = vector.load %arg19[%73, %c0_29] : memref<16x32xbf16, #tpu.memory_space<vmem>>, vector<8x8xbf16>
    %75 = arith.index_cast %46 : i32 to index
    %c0_30 = arith.constant 0 : index
    %76 = vector.load %arg20[%75, %c0_30] : memref<16x32xbf16, #tpu.memory_space<vmem>>, vector<8x8xbf16>
    %cst_31 = arith.constant dense<0.000000e+00> : vector<8x8xf32>
    %77 = tpu.matmul %72, %74, %cst_31 {dimension_numbers = #tpu.dot_dimension_numbers<[1], [1], [0], [0], [0, 0, 1, 0], [], []>} : vector<8x8xbf16>, vector<8x8xbf16>, vector<8x8xf32> -> vector<8x8xf32>
    %cst_32 = arith.constant -1.000000e+30 : f32
    %78 = vector.broadcast %cst_32 : f32 to vector<8x8xf32>
    %79 = arith.select %70, %77, %78 : vector<8x8xi1>, vector<8x8xf32>
    %cst_33 = arith.constant dense<0xFF800000> : vector<8xf32>
    %80 = vector.multi_reduction <maximumf>, %79, %cst_33 [1] : vector<8x8xf32> to vector<8xf32>
    %81 = vector.shape_cast %80 : vector<8xf32> to vector<8x1xf32>
    %82 = vector.broadcast %81 : vector<8x1xf32> to vector<8x8xf32>
    %83 = arith.subf %79, %82 : vector<8x8xf32>
    %84 = math.exp %83 : vector<8x8xf32>
    %cst_34 = arith.constant dense<0.000000e+00> : vector<8xf32>
    %85 = vector.multi_reduction <add>, %84, %cst_34 [1] : vector<8x8xf32> to vector<8xf32>
    %86 = vector.shape_cast %85 : vector<8xf32> to vector<8x1xf32>
    %87 = arith.truncf %84 : vector<8x8xf32> to vector<8x8xbf16>
    %cst_35 = arith.constant dense<0.000000e+00> : vector<8x8xf32>
    %88 = tpu.matmul %87, %76, %cst_35 {dimension_numbers = #tpu.dot_dimension_numbers<[1], [0], [0], [1], [0, 0, 1, 1], [], []>} : vector<8x8xbf16>, vector<8x8xbf16>, vector<8x8xf32> -> vector<8x8xf32>
    %c0_i32 = arith.constant 0 : i32
    %89 = arith.subi %arg1, %c0_i32 : i32
    %90 = arith.addi %c0_i32, %89 : i32
    %c1_i32 = arith.constant 1 : i32
    %91:3 = scf.for %arg21 = %c0_i32 to %90 step %c1_i32 iter_args(%arg22 = %81, %arg23 = %86, %arg24 = %88) -> (vector<8x1xf32>, vector<8x1xf32>, vector<8x8xf32>)  : i32 {
      %c8_i32_113 = arith.constant 8 : i32
      %280 = arith.muli %arg21, %c8_i32_113 : i32
      %281 = tpu.assume_multiple %280, 8 : i32
      %282 = arith.index_cast %281 : i32 to index
      %c0_114 = arith.constant 0 : index
      %283 = vector.load %arg19[%282, %c0_114] : memref<16x32xbf16, #tpu.memory_space<vmem>>, vector<8x8xbf16>
      %284 = arith.index_cast %281 : i32 to index
      %c0_115 = arith.constant 0 : index
      %285 = vector.load %arg20[%284, %c0_115] : memref<16x32xbf16, #tpu.memory_space<vmem>>, vector<8x8xbf16>
      %cst_116 = arith.constant dense<0.000000e+00> : vector<8x8xf32>
      %286 = tpu.matmul %72, %283, %cst_116 {dimension_numbers = #tpu.dot_dimension_numbers<[1], [1], [0], [0], [0, 0, 1, 0], [], []>} : vector<8x8xbf16>, vector<8x8xbf16>, vector<8x8xf32> -> vector<8x8xf32>
      %cst_117 = arith.constant dense<0xFF800000> : vector<8xf32>
      %287 = vector.multi_reduction <maximumf>, %286, %cst_117 [1] : vector<8x8xf32> to vector<8xf32>
      %288 = vector.shape_cast %287 : vector<8xf32> to vector<8x1xf32>
      %289 = arith.maximumf %arg22, %288 : vector<8x1xf32>
      %290 = arith.subf %arg22, %289 : vector<8x1xf32>
      %291 = math.exp %290 : vector<8x1xf32>
      %292 = vector.broadcast %289 : vector<8x1xf32> to vector<8x8xf32>
      %293 = arith.subf %286, %292 : vector<8x8xf32>
      %294 = math.exp %293 : vector<8x8xf32>
      %295 = arith.mulf %291, %arg23 : vector<8x1xf32>
      %cst_118 = arith.constant dense<0.000000e+00> : vector<8xf32>
      %296 = vector.multi_reduction <add>, %294, %cst_118 [1] : vector<8x8xf32> to vector<8xf32>
      %297 = vector.shape_cast %296 : vector<8xf32> to vector<8x1xf32>
      %298 = arith.addf %295, %297 : vector<8x1xf32>
      %299 = vector.broadcast %291 : vector<8x1xf32> to vector<8x8xf32>
      %300 = arith.mulf %299, %arg24 : vector<8x8xf32>
      %301 = arith.truncf %294 : vector<8x8xf32> to vector<8x8xbf16>
      %cst_119 = arith.constant dense<0.000000e+00> : vector<8x8xf32>
      %302 = tpu.matmul %301, %285, %cst_119 {dimension_numbers = #tpu.dot_dimension_numbers<[1], [0], [0], [1], [0, 0, 1, 1], [], []>} : vector<8x8xbf16>, vector<8x8xbf16>, vector<8x8xf32> -> vector<8x8xf32>
      %303 = arith.addf %300, %302 : vector<8x8xf32>
      scf.yield %289, %298, %303 : vector<8x1xf32>, vector<8x1xf32>, vector<8x8xf32>
    }
    %92 = tpu.reciprocal %91#1 {approx = true} : vector<8x1xf32> -> vector<8x1xf32>
    %93 = vector.broadcast %92 : vector<8x1xf32> to vector<8x8xf32>
    %94 = arith.mulf %91#2, %93 : vector<8x8xf32>
    %95 = arith.truncf %94 : vector<8x8xf32> to vector<8x8xbf16>
    %c0_36 = arith.constant 0 : index
    %c0_37 = arith.constant 0 : index
    %96 = vector.load %arg12[%c0_36, %c0_37] : memref<32x32xbf16, #tpu.memory_space<vmem>>, vector<8x32xbf16>
    %cst_38 = arith.constant dense<0.000000e+00> : vector<8x32xf32>
    %97 = tpu.matmul %95, %96, %cst_38 {dimension_numbers = #tpu.dot_dimension_numbers<[1], [0], [0], [1], [0, 0, 1, 1], [], []>} : vector<8x8xbf16>, vector<8x32xbf16>, vector<8x32xf32> -> vector<8x32xf32>
    %98 = arith.addf %71, %97 : vector<8x32xf32>
    %99 = vector.extract_strided_slice %67 {offsets = [0, 8], sizes = [8, 8], strides = [1, 1]} : vector<8x32xbf16> to vector<8x8xbf16>
    %100 = arith.index_cast %46 : i32 to index
    %c8 = arith.constant 8 : index
    %101 = vector.load %arg19[%100, %c8] : memref<16x32xbf16, #tpu.memory_space<vmem>>, vector<8x8xbf16>
    %102 = arith.index_cast %46 : i32 to index
    %c8_39 = arith.constant 8 : index
    %103 = vector.load %arg20[%102, %c8_39] : memref<16x32xbf16, #tpu.memory_space<vmem>>, vector<8x8xbf16>
    %cst_40 = arith.constant dense<0.000000e+00> : vector<8x8xf32>
    %104 = tpu.matmul %99, %101, %cst_40 {dimension_numbers = #tpu.dot_dimension_numbers<[1], [1], [0], [0], [0, 0, 1, 0], [], []>} : vector<8x8xbf16>, vector<8x8xbf16>, vector<8x8xf32> -> vector<8x8xf32>
    %cst_41 = arith.constant -1.000000e+30 : f32
    %105 = vector.broadcast %cst_41 : f32 to vector<8x8xf32>
    %106 = arith.select %70, %104, %105 : vector<8x8xi1>, vector<8x8xf32>
    %cst_42 = arith.constant dense<0xFF800000> : vector<8xf32>
    %107 = vector.multi_reduction <maximumf>, %106, %cst_42 [1] : vector<8x8xf32> to vector<8xf32>
    %108 = vector.shape_cast %107 : vector<8xf32> to vector<8x1xf32>
    %109 = vector.broadcast %108 : vector<8x1xf32> to vector<8x8xf32>
    %110 = arith.subf %106, %109 : vector<8x8xf32>
    %111 = math.exp %110 : vector<8x8xf32>
    %cst_43 = arith.constant dense<0.000000e+00> : vector<8xf32>
    %112 = vector.multi_reduction <add>, %111, %cst_43 [1] : vector<8x8xf32> to vector<8xf32>
    %113 = vector.shape_cast %112 : vector<8xf32> to vector<8x1xf32>
    %114 = arith.truncf %111 : vector<8x8xf32> to vector<8x8xbf16>
    %cst_44 = arith.constant dense<0.000000e+00> : vector<8x8xf32>
    %115 = tpu.matmul %114, %103, %cst_44 {dimension_numbers = #tpu.dot_dimension_numbers<[1], [0], [0], [1], [0, 0, 1, 1], [], []>} : vector<8x8xbf16>, vector<8x8xbf16>, vector<8x8xf32> -> vector<8x8xf32>
    %c0_i32_45 = arith.constant 0 : i32
    %116 = arith.subi %arg1, %c0_i32_45 : i32
    %117 = arith.addi %c0_i32_45, %116 : i32
    %c1_i32_46 = arith.constant 1 : i32
    %118:3 = scf.for %arg21 = %c0_i32_45 to %117 step %c1_i32_46 iter_args(%arg22 = %108, %arg23 = %113, %arg24 = %115) -> (vector<8x1xf32>, vector<8x1xf32>, vector<8x8xf32>)  : i32 {
      %c8_i32_113 = arith.constant 8 : i32
      %280 = arith.muli %arg21, %c8_i32_113 : i32
      %281 = tpu.assume_multiple %280, 8 : i32
      %282 = arith.index_cast %281 : i32 to index
      %c8_114 = arith.constant 8 : index
      %283 = vector.load %arg19[%282, %c8_114] : memref<16x32xbf16, #tpu.memory_space<vmem>>, vector<8x8xbf16>
      %284 = arith.index_cast %281 : i32 to index
      %c8_115 = arith.constant 8 : index
      %285 = vector.load %arg20[%284, %c8_115] : memref<16x32xbf16, #tpu.memory_space<vmem>>, vector<8x8xbf16>
      %cst_116 = arith.constant dense<0.000000e+00> : vector<8x8xf32>
      %286 = tpu.matmul %99, %283, %cst_116 {dimension_numbers = #tpu.dot_dimension_numbers<[1], [1], [0], [0], [0, 0, 1, 0], [], []>} : vector<8x8xbf16>, vector<8x8xbf16>, vector<8x8xf32> -> vector<8x8xf32>
      %cst_117 = arith.constant dense<0xFF800000> : vector<8xf32>
      %287 = vector.multi_reduction <maximumf>, %286, %cst_117 [1] : vector<8x8xf32> to vector<8xf32>
      %288 = vector.shape_cast %287 : vector<8xf32> to vector<8x1xf32>
      %289 = arith.maximumf %arg22, %288 : vector<8x1xf32>
      %290 = arith.subf %arg22, %289 : vector<8x1xf32>
      %291 = math.exp %290 : vector<8x1xf32>
      %292 = vector.broadcast %289 : vector<8x1xf32> to vector<8x8xf32>
      %293 = arith.subf %286, %292 : vector<8x8xf32>
      %294 = math.exp %293 : vector<8x8xf32>
      %295 = arith.mulf %291, %arg23 : vector<8x1xf32>
      %cst_118 = arith.constant dense<0.000000e+00> : vector<8xf32>
      %296 = vector.multi_reduction <add>, %294, %cst_118 [1] : vector<8x8xf32> to vector<8xf32>
      %297 = vector.shape_cast %296 : vector<8xf32> to vector<8x1xf32>
      %298 = arith.addf %295, %297 : vector<8x1xf32>
      %299 = vector.broadcast %291 : vector<8x1xf32> to vector<8x8xf32>
      %300 = arith.mulf %299, %arg24 : vector<8x8xf32>
      %301 = arith.truncf %294 : vector<8x8xf32> to vector<8x8xbf16>
      %cst_119 = arith.constant dense<0.000000e+00> : vector<8x8xf32>
      %302 = tpu.matmul %301, %285, %cst_119 {dimension_numbers = #tpu.dot_dimension_numbers<[1], [0], [0], [1], [0, 0, 1, 1], [], []>} : vector<8x8xbf16>, vector<8x8xbf16>, vector<8x8xf32> -> vector<8x8xf32>
      %303 = arith.addf %300, %302 : vector<8x8xf32>
      scf.yield %289, %298, %303 : vector<8x1xf32>, vector<8x1xf32>, vector<8x8xf32>
    }
    %119 = tpu.reciprocal %118#1 {approx = true} : vector<8x1xf32> -> vector<8x1xf32>
    %120 = vector.broadcast %119 : vector<8x1xf32> to vector<8x8xf32>
    %121 = arith.mulf %118#2, %120 : vector<8x8xf32>
    %122 = arith.truncf %121 : vector<8x8xf32> to vector<8x8xbf16>
    %c8_47 = arith.constant 8 : index
    %c0_48 = arith.constant 0 : index
    %123 = vector.load %arg12[%c8_47, %c0_48] : memref<32x32xbf16, #tpu.memory_space<vmem>>, vector<8x32xbf16>
    %cst_49 = arith.constant dense<0.000000e+00> : vector<8x32xf32>
    %124 = tpu.matmul %122, %123, %cst_49 {dimension_numbers = #tpu.dot_dimension_numbers<[1], [0], [0], [1], [0, 0, 1, 1], [], []>} : vector<8x8xbf16>, vector<8x32xbf16>, vector<8x32xf32> -> vector<8x32xf32>
    %125 = arith.addf %98, %124 : vector<8x32xf32>
    %126 = vector.extract_strided_slice %67 {offsets = [0, 16], sizes = [8, 8], strides = [1, 1]} : vector<8x32xbf16> to vector<8x8xbf16>
    %127 = arith.index_cast %46 : i32 to index
    %c16 = arith.constant 16 : index
    %128 = vector.load %arg19[%127, %c16] : memref<16x32xbf16, #tpu.memory_space<vmem>>, vector<8x8xbf16>
    %129 = arith.index_cast %46 : i32 to index
    %c16_50 = arith.constant 16 : index
    %130 = vector.load %arg20[%129, %c16_50] : memref<16x32xbf16, #tpu.memory_space<vmem>>, vector<8x8xbf16>
    %cst_51 = arith.constant dense<0.000000e+00> : vector<8x8xf32>
    %131 = tpu.matmul %126, %128, %cst_51 {dimension_numbers = #tpu.dot_dimension_numbers<[1], [1], [0], [0], [0, 0, 1, 0], [], []>} : vector<8x8xbf16>, vector<8x8xbf16>, vector<8x8xf32> -> vector<8x8xf32>
    %cst_52 = arith.constant -1.000000e+30 : f32
    %132 = vector.broadcast %cst_52 : f32 to vector<8x8xf32>
    %133 = arith.select %70, %131, %132 : vector<8x8xi1>, vector<8x8xf32>
    %cst_53 = arith.constant dense<0xFF800000> : vector<8xf32>
    %134 = vector.multi_reduction <maximumf>, %133, %cst_53 [1] : vector<8x8xf32> to vector<8xf32>
    %135 = vector.shape_cast %134 : vector<8xf32> to vector<8x1xf32>
    %136 = vector.broadcast %135 : vector<8x1xf32> to vector<8x8xf32>
    %137 = arith.subf %133, %136 : vector<8x8xf32>
    %138 = math.exp %137 : vector<8x8xf32>
    %cst_54 = arith.constant dense<0.000000e+00> : vector<8xf32>
    %139 = vector.multi_reduction <add>, %138, %cst_54 [1] : vector<8x8xf32> to vector<8xf32>
    %140 = vector.shape_cast %139 : vector<8xf32> to vector<8x1xf32>
    %141 = arith.truncf %138 : vector<8x8xf32> to vector<8x8xbf16>
    %cst_55 = arith.constant dense<0.000000e+00> : vector<8x8xf32>
    %142 = tpu.matmul %141, %130, %cst_55 {dimension_numbers = #tpu.dot_dimension_numbers<[1], [0], [0], [1], [0, 0, 1, 1], [], []>} : vector<8x8xbf16>, vector<8x8xbf16>, vector<8x8xf32> -> vector<8x8xf32>
    %c0_i32_56 = arith.constant 0 : i32
    %143 = arith.subi %arg1, %c0_i32_56 : i32
    %144 = arith.addi %c0_i32_56, %143 : i32
    %c1_i32_57 = arith.constant 1 : i32
    %145:3 = scf.for %arg21 = %c0_i32_56 to %144 step %c1_i32_57 iter_args(%arg22 = %135, %arg23 = %140, %arg24 = %142) -> (vector<8x1xf32>, vector<8x1xf32>, vector<8x8xf32>)  : i32 {
      %c8_i32_113 = arith.constant 8 : i32
      %280 = arith.muli %arg21, %c8_i32_113 : i32
      %281 = tpu.assume_multiple %280, 8 : i32
      %282 = arith.index_cast %281 : i32 to index
      %c16_114 = arith.constant 16 : index
      %283 = vector.load %arg19[%282, %c16_114] : memref<16x32xbf16, #tpu.memory_space<vmem>>, vector<8x8xbf16>
      %284 = arith.index_cast %281 : i32 to index
      %c16_115 = arith.constant 16 : index
      %285 = vector.load %arg20[%284, %c16_115] : memref<16x32xbf16, #tpu.memory_space<vmem>>, vector<8x8xbf16>
      %cst_116 = arith.constant dense<0.000000e+00> : vector<8x8xf32>
      %286 = tpu.matmul %126, %283, %cst_116 {dimension_numbers = #tpu.dot_dimension_numbers<[1], [1], [0], [0], [0, 0, 1, 0], [], []>} : vector<8x8xbf16>, vector<8x8xbf16>, vector<8x8xf32> -> vector<8x8xf32>
      %cst_117 = arith.constant dense<0xFF800000> : vector<8xf32>
      %287 = vector.multi_reduction <maximumf>, %286, %cst_117 [1] : vector<8x8xf32> to vector<8xf32>
      %288 = vector.shape_cast %287 : vector<8xf32> to vector<8x1xf32>
      %289 = arith.maximumf %arg22, %288 : vector<8x1xf32>
      %290 = arith.subf %arg22, %289 : vector<8x1xf32>
      %291 = math.exp %290 : vector<8x1xf32>
      %292 = vector.broadcast %289 : vector<8x1xf32> to vector<8x8xf32>
      %293 = arith.subf %286, %292 : vector<8x8xf32>
      %294 = math.exp %293 : vector<8x8xf32>
      %295 = arith.mulf %291, %arg23 : vector<8x1xf32>
      %cst_118 = arith.constant dense<0.000000e+00> : vector<8xf32>
      %296 = vector.multi_reduction <add>, %294, %cst_118 [1] : vector<8x8xf32> to vector<8xf32>
      %297 = vector.shape_cast %296 : vector<8xf32> to vector<8x1xf32>
      %298 = arith.addf %295, %297 : vector<8x1xf32>
      %299 = vector.broadcast %291 : vector<8x1xf32> to vector<8x8xf32>
      %300 = arith.mulf %299, %arg24 : vector<8x8xf32>
      %301 = arith.truncf %294 : vector<8x8xf32> to vector<8x8xbf16>
      %cst_119 = arith.constant dense<0.000000e+00> : vector<8x8xf32>
      %302 = tpu.matmul %301, %285, %cst_119 {dimension_numbers = #tpu.dot_dimension_numbers<[1], [0], [0], [1], [0, 0, 1, 1], [], []>} : vector<8x8xbf16>, vector<8x8xbf16>, vector<8x8xf32> -> vector<8x8xf32>
      %303 = arith.addf %300, %302 : vector<8x8xf32>
      scf.yield %289, %298, %303 : vector<8x1xf32>, vector<8x1xf32>, vector<8x8xf32>
    }
    %146 = tpu.reciprocal %145#1 {approx = true} : vector<8x1xf32> -> vector<8x1xf32>
    %147 = vector.broadcast %146 : vector<8x1xf32> to vector<8x8xf32>
    %148 = arith.mulf %145#2, %147 : vector<8x8xf32>
    %149 = arith.truncf %148 : vector<8x8xf32> to vector<8x8xbf16>
    %c16_58 = arith.constant 16 : index
    %c0_59 = arith.constant 0 : index
    %150 = vector.load %arg12[%c16_58, %c0_59] : memref<32x32xbf16, #tpu.memory_space<vmem>>, vector<8x32xbf16>
    %cst_60 = arith.constant dense<0.000000e+00> : vector<8x32xf32>
    %151 = tpu.matmul %149, %150, %cst_60 {dimension_numbers = #tpu.dot_dimension_numbers<[1], [0], [0], [1], [0, 0, 1, 1], [], []>} : vector<8x8xbf16>, vector<8x32xbf16>, vector<8x32xf32> -> vector<8x32xf32>
    %152 = arith.addf %125, %151 : vector<8x32xf32>
    %153 = vector.extract_strided_slice %67 {offsets = [0, 24], sizes = [8, 8], strides = [1, 1]} : vector<8x32xbf16> to vector<8x8xbf16>
    %154 = arith.index_cast %46 : i32 to index
    %c24 = arith.constant 24 : index
    %155 = vector.load %arg19[%154, %c24] : memref<16x32xbf16, #tpu.memory_space<vmem>>, vector<8x8xbf16>
    %156 = arith.index_cast %46 : i32 to index
    %c24_61 = arith.constant 24 : index
    %157 = vector.load %arg20[%156, %c24_61] : memref<16x32xbf16, #tpu.memory_space<vmem>>, vector<8x8xbf16>
    %cst_62 = arith.constant dense<0.000000e+00> : vector<8x8xf32>
    %158 = tpu.matmul %153, %155, %cst_62 {dimension_numbers = #tpu.dot_dimension_numbers<[1], [1], [0], [0], [0, 0, 1, 0], [], []>} : vector<8x8xbf16>, vector<8x8xbf16>, vector<8x8xf32> -> vector<8x8xf32>
    %cst_63 = arith.constant -1.000000e+30 : f32
    %159 = vector.broadcast %cst_63 : f32 to vector<8x8xf32>
    %160 = arith.select %70, %158, %159 : vector<8x8xi1>, vector<8x8xf32>
    %cst_64 = arith.constant dense<0xFF800000> : vector<8xf32>
    %161 = vector.multi_reduction <maximumf>, %160, %cst_64 [1] : vector<8x8xf32> to vector<8xf32>
    %162 = vector.shape_cast %161 : vector<8xf32> to vector<8x1xf32>
    %163 = vector.broadcast %162 : vector<8x1xf32> to vector<8x8xf32>
    %164 = arith.subf %160, %163 : vector<8x8xf32>
    %165 = math.exp %164 : vector<8x8xf32>
    %cst_65 = arith.constant dense<0.000000e+00> : vector<8xf32>
    %166 = vector.multi_reduction <add>, %165, %cst_65 [1] : vector<8x8xf32> to vector<8xf32>
    %167 = vector.shape_cast %166 : vector<8xf32> to vector<8x1xf32>
    %168 = arith.truncf %165 : vector<8x8xf32> to vector<8x8xbf16>
    %cst_66 = arith.constant dense<0.000000e+00> : vector<8x8xf32>
    %169 = tpu.matmul %168, %157, %cst_66 {dimension_numbers = #tpu.dot_dimension_numbers<[1], [0], [0], [1], [0, 0, 1, 1], [], []>} : vector<8x8xbf16>, vector<8x8xbf16>, vector<8x8xf32> -> vector<8x8xf32>
    %c0_i32_67 = arith.constant 0 : i32
    %170 = arith.subi %arg1, %c0_i32_67 : i32
    %171 = arith.addi %c0_i32_67, %170 : i32
    %c1_i32_68 = arith.constant 1 : i32
    %172:3 = scf.for %arg21 = %c0_i32_67 to %171 step %c1_i32_68 iter_args(%arg22 = %162, %arg23 = %167, %arg24 = %169) -> (vector<8x1xf32>, vector<8x1xf32>, vector<8x8xf32>)  : i32 {
      %c8_i32_113 = arith.constant 8 : i32
      %280 = arith.muli %arg21, %c8_i32_113 : i32
      %281 = tpu.assume_multiple %280, 8 : i32
      %282 = arith.index_cast %281 : i32 to index
      %c24_114 = arith.constant 24 : index
      %283 = vector.load %arg19[%282, %c24_114] : memref<16x32xbf16, #tpu.memory_space<vmem>>, vector<8x8xbf16>
      %284 = arith.index_cast %281 : i32 to index
      %c24_115 = arith.constant 24 : index
      %285 = vector.load %arg20[%284, %c24_115] : memref<16x32xbf16, #tpu.memory_space<vmem>>, vector<8x8xbf16>
      %cst_116 = arith.constant dense<0.000000e+00> : vector<8x8xf32>
      %286 = tpu.matmul %153, %283, %cst_116 {dimension_numbers = #tpu.dot_dimension_numbers<[1], [1], [0], [0], [0, 0, 1, 0], [], []>} : vector<8x8xbf16>, vector<8x8xbf16>, vector<8x8xf32> -> vector<8x8xf32>
      %cst_117 = arith.constant dense<0xFF800000> : vector<8xf32>
      %287 = vector.multi_reduction <maximumf>, %286, %cst_117 [1] : vector<8x8xf32> to vector<8xf32>
      %288 = vector.shape_cast %287 : vector<8xf32> to vector<8x1xf32>
      %289 = arith.maximumf %arg22, %288 : vector<8x1xf32>
      %290 = arith.subf %arg22, %289 : vector<8x1xf32>
      %291 = math.exp %290 : vector<8x1xf32>
      %292 = vector.broadcast %289 : vector<8x1xf32> to vector<8x8xf32>
      %293 = arith.subf %286, %292 : vector<8x8xf32>
      %294 = math.exp %293 : vector<8x8xf32>
      %295 = arith.mulf %291, %arg23 : vector<8x1xf32>
      %cst_118 = arith.constant dense<0.000000e+00> : vector<8xf32>
      %296 = vector.multi_reduction <add>, %294, %cst_118 [1] : vector<8x8xf32> to vector<8xf32>
      %297 = vector.shape_cast %296 : vector<8xf32> to vector<8x1xf32>
      %298 = arith.addf %295, %297 : vector<8x1xf32>
      %299 = vector.broadcast %291 : vector<8x1xf32> to vector<8x8xf32>
      %300 = arith.mulf %299, %arg24 : vector<8x8xf32>
      %301 = arith.truncf %294 : vector<8x8xf32> to vector<8x8xbf16>
      %cst_119 = arith.constant dense<0.000000e+00> : vector<8x8xf32>
      %302 = tpu.matmul %301, %285, %cst_119 {dimension_numbers = #tpu.dot_dimension_numbers<[1], [0], [0], [1], [0, 0, 1, 1], [], []>} : vector<8x8xbf16>, vector<8x8xbf16>, vector<8x8xf32> -> vector<8x8xf32>
      %303 = arith.addf %300, %302 : vector<8x8xf32>
      scf.yield %289, %298, %303 : vector<8x1xf32>, vector<8x1xf32>, vector<8x8xf32>
    }
    %173 = tpu.reciprocal %172#1 {approx = true} : vector<8x1xf32> -> vector<8x1xf32>
    %174 = vector.broadcast %173 : vector<8x1xf32> to vector<8x8xf32>
    %175 = arith.mulf %172#2, %174 : vector<8x8xf32>
    %176 = arith.truncf %175 : vector<8x8xf32> to vector<8x8xbf16>
    %c24_69 = arith.constant 24 : index
    %c0_70 = arith.constant 0 : index
    %177 = vector.load %arg12[%c24_69, %c0_70] : memref<32x32xbf16, #tpu.memory_space<vmem>>, vector<8x32xbf16>
    %cst_71 = arith.constant dense<0.000000e+00> : vector<8x32xf32>
    %178 = tpu.matmul %176, %177, %cst_71 {dimension_numbers = #tpu.dot_dimension_numbers<[1], [0], [0], [1], [0, 0, 1, 1], [], []>} : vector<8x8xbf16>, vector<8x32xbf16>, vector<8x32xf32> -> vector<8x32xf32>
    %179 = arith.addf %152, %178 : vector<8x32xf32>
    %c0_72 = arith.constant 0 : index
    %c0_73 = arith.constant 0 : index
    %180 = vector.load %arg13[%c0_72, %c0_73] : memref<1x32xf32, #tpu.memory_space<vmem>>, vector<1x32xf32>
    %181 = vector.broadcast %180 : vector<1x32xf32> to vector<8x32xf32>
    %182 = arith.addf %179, %181 : vector<8x32xf32>
    %183 = arith.addf %182, %12 : vector<8x32xf32>
    %c0_74 = arith.constant 0 : index
    %c0_75 = arith.constant 0 : index
    %184 = vector.load %arg6[%c0_74, %c0_75] : memref<1x32xf32, #tpu.memory_space<vmem>>, vector<1x32xf32>
    %c0_76 = arith.constant 0 : index
    %c0_77 = arith.constant 0 : index
    %185 = vector.load %arg7[%c0_76, %c0_77] : memref<1x32xf32, #tpu.memory_space<vmem>>, vector<1x32xf32>
    %186 = vector.broadcast %0 : vector<1x32xf32> to vector<8x32xf32>
    %187 = arith.mulf %183, %186 : vector<8x32xf32>
    %cst_78 = arith.constant dense<0.000000e+00> : vector<8xf32>
    %188 = vector.multi_reduction <add>, %187, %cst_78 [1] : vector<8x32xf32> to vector<8xf32>
    %189 = vector.shape_cast %188 : vector<8xf32> to vector<8x1xf32>
    %190 = vector.broadcast %4 : vector<1x1xf32> to vector<8x1xf32>
    %191 = arith.mulf %189, %190 : vector<8x1xf32>
    %192 = vector.broadcast %191 : vector<8x1xf32> to vector<8x32xf32>
    %193 = arith.subf %183, %192 : vector<8x32xf32>
    %194 = vector.broadcast %0 : vector<1x32xf32> to vector<8x32xf32>
    %195 = arith.mulf %193, %194 : vector<8x32xf32>
    %196 = arith.mulf %195, %195 : vector<8x32xf32>
    %cst_79 = arith.constant dense<0.000000e+00> : vector<8xf32>
    %197 = vector.multi_reduction <add>, %196, %cst_79 [1] : vector<8x32xf32> to vector<8xf32>
    %198 = vector.shape_cast %197 : vector<8xf32> to vector<8x1xf32>
    %199 = vector.broadcast %10 : vector<1x1xf32> to vector<8x1xf32>
    %200 = arith.mulf %198, %199 : vector<8x1xf32>
    %201 = math.sqrt %200 : vector<8x1xf32>
    %cst_80 = arith.constant 9.99999974E-6 : f32
    %202 = vector.broadcast %cst_80 : f32 to vector<8x1xf32>
    %203 = arith.addf %201, %202 : vector<8x1xf32>
    %204 = tpu.reciprocal %203 {approx = true} : vector<8x1xf32> -> vector<8x1xf32>
    %205 = vector.broadcast %191 : vector<8x1xf32> to vector<8x32xf32>
    %206 = arith.subf %183, %205 : vector<8x32xf32>
    %207 = vector.broadcast %204 : vector<8x1xf32> to vector<8x32xf32>
    %208 = arith.mulf %206, %207 : vector<8x32xf32>
    %209 = vector.broadcast %184 : vector<1x32xf32> to vector<8x32xf32>
    %210 = arith.mulf %208, %209 : vector<8x32xf32>
    %211 = vector.broadcast %185 : vector<1x32xf32> to vector<8x32xf32>
    %212 = arith.addf %210, %211 : vector<8x32xf32>
    %213 = vector.broadcast %0 : vector<1x32xf32> to vector<8x32xf32>
    %214 = arith.mulf %212, %213 : vector<8x32xf32>
    %215 = arith.truncf %214 : vector<8x32xf32> to vector<8x32xbf16>
    %cst_81 = arith.constant 0.000000e+00 : f32
    %216 = vector.broadcast %cst_81 : f32 to vector<8x32xf32>
    %c0_i32_82 = arith.constant 0 : i32
    %217 = arith.index_cast %c0_i32_82 : i32 to index
    %c0_83 = arith.constant 0 : index
    %c0_84 = arith.constant 0 : index
    %218 = vector.load %arg14[%217, %c0_83, %c0_84] : memref<2x32x64xbf16, #tpu.memory_space<vmem>>, vector<1x32x64xbf16>
    %219 = vector.shape_cast %218 : vector<1x32x64xbf16> to vector<32x64xbf16>
    %cst_85 = arith.constant dense<0.000000e+00> : vector<8x64xf32>
    %220 = tpu.matmul %215, %219, %cst_85 {dimension_numbers = #tpu.dot_dimension_numbers<[1], [0], [0], [1], [0, 0, 1, 1], [], []>} : vector<8x32xbf16>, vector<32x64xbf16>, vector<8x64xf32> -> vector<8x64xf32>
    %221 = arith.index_cast %c0_i32_82 : i32 to index
    %c0_86 = arith.constant 0 : index
    %c0_87 = arith.constant 0 : index
    %222 = vector.load %arg15[%221, %c0_86, %c0_87] : memref<2x1x64xf32, #tpu.memory_space<vmem>>, vector<1x1x64xf32>
    %223 = vector.shape_cast %222 : vector<1x1x64xf32> to vector<1x64xf32>
    %224 = vector.broadcast %223 : vector<1x64xf32> to vector<8x64xf32>
    %225 = arith.addf %220, %224 : vector<8x64xf32>
    %226 = arith.truncf %225 : vector<8x64xf32> to vector<8x64xbf16>
    %cst_88 = arith.constant 5.000000e-01 : bf16
    %227 = vector.broadcast %cst_88 : bf16 to vector<8x64xbf16>
    %228 = arith.mulf %227, %226 : vector<8x64xbf16>
    %cst_89 = arith.constant 4.467770e-02 : bf16
    %229 = vector.broadcast %cst_89 : bf16 to vector<8x64xbf16>
    %230 = arith.mulf %229, %226 : vector<8x64xbf16>
    %231 = arith.mulf %230, %226 : vector<8x64xbf16>
    %232 = arith.mulf %231, %226 : vector<8x64xbf16>
    %233 = arith.addf %226, %232 : vector<8x64xbf16>
    %cst_90 = arith.constant 7.968750e-01 : bf16
    %234 = vector.broadcast %cst_90 : bf16 to vector<8x64xbf16>
    %235 = arith.mulf %234, %233 : vector<8x64xbf16>
    %236 = math.tanh %235 : vector<8x64xbf16>
    %cst_91 = arith.constant 1.000000e+00 : bf16
    %237 = vector.broadcast %cst_91 : bf16 to vector<8x64xbf16>
    %238 = arith.addf %237, %236 : vector<8x64xbf16>
    %239 = arith.mulf %228, %238 : vector<8x64xbf16>
    %240 = arith.index_cast %c0_i32_82 : i32 to index
    %c0_92 = arith.constant 0 : index
    %c0_93 = arith.constant 0 : index
    %241 = vector.load %arg16[%240, %c0_92, %c0_93] : memref<2x64x32xbf16, #tpu.memory_space<vmem>>, vector<1x64x32xbf16>
    %242 = vector.shape_cast %241 : vector<1x64x32xbf16> to vector<64x32xbf16>
    %cst_94 = arith.constant dense<0.000000e+00> : vector<8x32xf32>
    %243 = tpu.matmul %239, %242, %cst_94 {dimension_numbers = #tpu.dot_dimension_numbers<[1], [0], [0], [1], [0, 0, 1, 1], [], []>} : vector<8x64xbf16>, vector<64x32xbf16>, vector<8x32xf32> -> vector<8x32xf32>
    %244 = arith.addf %216, %243 : vector<8x32xf32>
    %c1_i32_95 = arith.constant 1 : i32
    %245 = arith.index_cast %c1_i32_95 : i32 to index
    %c0_96 = arith.constant 0 : index
    %c0_97 = arith.constant 0 : index
    %246 = vector.load %arg14[%245, %c0_96, %c0_97] : memref<2x32x64xbf16, #tpu.memory_space<vmem>>, vector<1x32x64xbf16>
    %247 = vector.shape_cast %246 : vector<1x32x64xbf16> to vector<32x64xbf16>
    %cst_98 = arith.constant dense<0.000000e+00> : vector<8x64xf32>
    %248 = tpu.matmul %215, %247, %cst_98 {dimension_numbers = #tpu.dot_dimension_numbers<[1], [0], [0], [1], [0, 0, 1, 1], [], []>} : vector<8x32xbf16>, vector<32x64xbf16>, vector<8x64xf32> -> vector<8x64xf32>
    %249 = arith.index_cast %c1_i32_95 : i32 to index
    %c0_99 = arith.constant 0 : index
    %c0_100 = arith.constant 0 : index
    %250 = vector.load %arg15[%249, %c0_99, %c0_100] : memref<2x1x64xf32, #tpu.memory_space<vmem>>, vector<1x1x64xf32>
    %251 = vector.shape_cast %250 : vector<1x1x64xf32> to vector<1x64xf32>
    %252 = vector.broadcast %251 : vector<1x64xf32> to vector<8x64xf32>
    %253 = arith.addf %248, %252 : vector<8x64xf32>
    %254 = arith.truncf %253 : vector<8x64xf32> to vector<8x64xbf16>
    %cst_101 = arith.constant 5.000000e-01 : bf16
    %255 = vector.broadcast %cst_101 : bf16 to vector<8x64xbf16>
    %256 = arith.mulf %255, %254 : vector<8x64xbf16>
    %cst_102 = arith.constant 4.467770e-02 : bf16
    %257 = vector.broadcast %cst_102 : bf16 to vector<8x64xbf16>
    %258 = arith.mulf %257, %254 : vector<8x64xbf16>
    %259 = arith.mulf %258, %254 : vector<8x64xbf16>
    %260 = arith.mulf %259, %254 : vector<8x64xbf16>
    %261 = arith.addf %254, %260 : vector<8x64xbf16>
    %cst_103 = arith.constant 7.968750e-01 : bf16
    %262 = vector.broadcast %cst_103 : bf16 to vector<8x64xbf16>
    %263 = arith.mulf %262, %261 : vector<8x64xbf16>
    %264 = math.tanh %263 : vector<8x64xbf16>
    %cst_104 = arith.constant 1.000000e+00 : bf16
    %265 = vector.broadcast %cst_104 : bf16 to vector<8x64xbf16>
    %266 = arith.addf %265, %264 : vector<8x64xbf16>
    %267 = arith.mulf %256, %266 : vector<8x64xbf16>
    %268 = arith.index_cast %c1_i32_95 : i32 to index
    %c0_105 = arith.constant 0 : index
    %c0_106 = arith.constant 0 : index
    %269 = vector.load %arg16[%268, %c0_105, %c0_106] : memref<2x64x32xbf16, #tpu.memory_space<vmem>>, vector<1x64x32xbf16>
    %270 = vector.shape_cast %269 : vector<1x64x32xbf16> to vector<64x32xbf16>
    %cst_107 = arith.constant dense<0.000000e+00> : vector<8x32xf32>
    %271 = tpu.matmul %267, %270, %cst_107 {dimension_numbers = #tpu.dot_dimension_numbers<[1], [0], [0], [1], [0, 0, 1, 1], [], []>} : vector<8x64xbf16>, vector<64x32xbf16>, vector<8x32xf32> -> vector<8x32xf32>
    %272 = arith.addf %244, %271 : vector<8x32xf32>
    %c2_i32 = arith.constant 2 : i32
    %273 = arith.addf %183, %272 : vector<8x32xf32>
    %c0_108 = arith.constant 0 : index
    %c0_109 = arith.constant 0 : index
    %274 = vector.load %arg17[%c0_108, %c0_109] : memref<1x32xf32, #tpu.memory_space<vmem>>, vector<1x32xf32>
    %275 = vector.broadcast %274 : vector<1x32xf32> to vector<8x32xf32>
    %276 = arith.addf %273, %275 : vector<8x32xf32>
    %c0_110 = arith.constant 0 : index
    %c0_111 = arith.constant 0 : index
    %c0_112 = arith.constant 0 : index
    %277 = vector.load %arg18[%c0_110, %c0_111, %c0_112] : memref<1x8x32xf32, #tpu.memory_space<vmem>>, vector<1x8x32xf32>
    %278 = vector.shape_cast %277 : vector<1x8x32xf32> to vector<8x32xf32>
    %279 = vector.shape_cast %276 : vector<8x32xf32> to vector<1x8x32xf32>
    tpu.vector_store %arg18[%c0_110, %c0_111, %c0_112], %279 {strides = array<i32>} : memref<1x8x32xf32, #tpu.memory_space<vmem>>, vector<1x8x32xf32>,
    return
  }
  func.func @transform_0(%arg0: i32, %arg1: i32) -> (i32, i32, i32) {
    %c0_i32 = arith.constant 0 : i32
    %c0_i32_0 = arith.constant 0 : i32
    return %arg0, %arg1, %c0_i32 : i32, i32, i32
  }
  func.func @transform_1(%arg0: i32, %arg1: i32) -> (i32, i32) {
    %c0_i32 = arith.constant 0 : i32
    %c0_i32_0 = arith.constant 0 : i32
    %c0_i32_1 = arith.constant 0 : i32
    return %c0_i32, %c0_i32_0 : i32, i32
  }
  func.func @transform_2(%arg0: i32, %arg1: i32) -> (i32, i32) {
    %c0_i32 = arith.constant 0 : i32
    %c0_i32_0 = arith.constant 0 : i32
    %c0_i32_1 = arith.constant 0 : i32
    return %c0_i32, %c0_i32_0 : i32, i32
  }
  func.func @transform_3(%arg0: i32, %arg1: i32) -> (i32, i32) {
    %c0_i32 = arith.constant 0 : i32
    %c0_i32_0 = arith.constant 0 : i32
    %c0_i32_1 = arith.constant 0 : i32
    return %c0_i32, %c0_i32_0 : i32, i32
  }
  func.func @transform_4(%arg0: i32, %arg1: i32) -> (i32, i32) {
    %c0_i32 = arith.constant 0 : i32
    %c0_i32_0 = arith.constant 0 : i32
    %c0_i32_1 = arith.constant 0 : i32
    return %c0_i32, %c0_i32_0 : i32, i32
  }
  func.func @transform_5(%arg0: i32, %arg1: i32) -> (i32, i32) {
    %c0_i32 = arith.constant 0 : i32
    %c0_i32_0 = arith.constant 0 : i32
    %c0_i32_1 = arith.constant 0 : i32
    return %c0_i32, %c0_i32_0 : i32, i32
  }
  func.func @transform_6(%arg0: i32, %arg1: i32) -> (i32, i32) {
    %c0_i32 = arith.constant 0 : i32
    %c0_i32_0 = arith.constant 0 : i32
    %c0_i32_1 = arith.constant 0 : i32
    return %c0_i32, %c0_i32_0 : i32, i32
  }
  func.func @transform_7(%arg0: i32, %arg1: i32) -> (i32, i32) {
    %c0_i32 = arith.constant 0 : i32
    %c0_i32_0 = arith.constant 0 : i32
    %c0_i32_1 = arith.constant 0 : i32
    return %c0_i32, %c0_i32_0 : i32, i32
  }
  func.func @transform_8(%arg0: i32, %arg1: i32) -> (i32, i32) {
    %c0_i32 = arith.constant 0 : i32
    %c0_i32_0 = arith.constant 0 : i32
    %c0_i32_1 = arith.constant 0 : i32
    return %c0_i32, %c0_i32_0 : i32, i32
  }
  func.func @transform_9(%arg0: i32, %arg1: i32) -> (i32, i32) {
    %c0_i32 = arith.constant 0 : i32
    %c0_i32_0 = arith.constant 0 : i32
    %c0_i32_1 = arith.constant 0 : i32
    return %c0_i32, %c0_i32_0 : i32, i32
  }
  func.func @transform_10(%arg0: i32, %arg1: i32) -> (i32, i32) {
    %c0_i32 = arith.constant 0 : i32
    %c0_i32_0 = arith.constant 0 : i32
    %c0_i32_1 = arith.constant 0 : i32
    return %c0_i32, %c0_i32_0 : i32, i32
  }
  func.func @transform_11(%arg0: i32, %arg1: i32) -> (i32, i32) {
    %c0_i32 = arith.constant 0 : i32
    %c0_i32_0 = arith.constant 0 : i32
    %c0_i32_1 = arith.constant 0 : i32
    return %c0_i32, %c0_i32_0 : i32, i32
  }
  func.func @transform_12(%arg0: i32, %arg1: i32) -> (i32, i32, i32) {
    %c0_i32 = arith.constant 0 : i32
    %c0_i32_0 = arith.constant 0 : i32
    %c0_i32_1 = arith.constant 0 : i32
    %c0_i32_2 = arith.constant 0 : i32
    return %c0_i32, %c0_i32_0, %c0_i32_1 : i32, i32, i32
  }
  func.func @transform_13(%arg0: i32, %arg1: i32) -> (i32, i32, i32) {
    %c0_i32 = arith.constant 0 : i32
    %c0_i32_0 = arith.constant 0 : i32
    %c0_i32_1 = arith.constant 0 : i32
    %c0_i32_2 = arith.constant 0 : i32
    return %c0_i32, %c0_i32_0, %c0_i32_1 : i32, i32, i32
  }
  func.func @transform_14(%arg0: i32, %arg1: i32) -> (i32, i32, i32) {
    %c0_i32 = arith.constant 0 : i32
    %c0_i32_0 = arith.constant 0 : i32
    %c0_i32_1 = arith.constant 0 : i32
    %c0_i32_2 = arith.constant 0 : i32
    return %c0_i32, %c0_i32_0, %c0_i32_1 : i32, i32, i32
  }
  func.func @transform_15(%arg0: i32, %arg1: i32) -> (i32, i32) {
    %c0_i32 = arith.constant 0 : i32
    %c0_i32_0 = arith.constant 0 : i32
    %c0_i32_1 = arith.constant 0 : i32
    return %c0_i32, %c0_i32_0 : i32, i32
  }
  func.func @transform_16(%arg0: i32, %arg1: i32) -> (i32, i32, i32) {
    %c0_i32 = arith.constant 0 : i32
    %c0_i32_0 = arith.constant 0 : i32
    return %arg0, %arg1, %c0_i32 : i32, i32, i32
  }
}

module attributes {stable_mosaic.version = 11 : i64} {
  func.func @gpt_block_kernel(%arg0: i32, %arg1: i32, %arg2: memref<1x8x32xf32, #tpu.memory_space<vmem>>, %arg3: memref<1x32xf32, #tpu.memory_space<vmem>>, %arg4: memref<1x32xf32, #tpu.memory_space<vmem>>, %arg5: memref<1x32xf32, #tpu.memory_space<vmem>>, %arg6: memref<1x32xf32, #tpu.memory_space<vmem>>, %arg7: memref<1x32xf32, #tpu.memory_space<vmem>>, %arg8: memref<32x32xbf16, #tpu.memory_space<vmem>>, %arg9: memref<1x32xf32, #tpu.memory_space<vmem>>, %arg10: memref<32x64xbf16, #tpu.memory_space<vmem>>, %arg11: memref<1x64xf32, #tpu.memory_space<vmem>>, %arg12: memref<32x32xbf16, #tpu.memory_space<vmem>>, %arg13: memref<1x32xf32, #tpu.memory_space<vmem>>, %arg14: memref<2x32x64xbf16, #tpu.memory_space<vmem>>, %arg15: memref<2x1x64xf32, #tpu.memory_space<vmem>>, %arg16: memref<2x64x32xbf16, #tpu.memory_space<vmem>>, %arg17: memref<1x32xf32, #tpu.memory_space<vmem>>, %arg18: memref<1x8x32xf32, #tpu.memory_space<vmem>>, %arg19: memref<16x32xbf16, #tpu.memory_space<vmem>>, %arg20: memref<16x32xbf16, #tpu.memory_space<vmem>>) attributes {dimension_semantics = [#tpu.dimension_semantics<parallel>, #tpu.dimension_semantics<arbitrary>], iteration_bounds = array<i64: 2, 2>, scalar_prefetch = 0 : i64, scratch_operands = 2 : i64, tpu.core_type = #tpu.core_type<tc>, window_params = [{transform_indices = @transform_0, window_bounds = array<i64: 1, 8, 32>}, {pipeline_mode = #tpu.pipeline_mode<synchronous>, transform_indices = @transform_1, window_bounds = array<i64: 1, 32>}, {pipeline_mode = #tpu.pipeline_mode<synchronous>, transform_indices = @transform_2, window_bounds = array<i64: 1, 32>}, {pipeline_mode = #tpu.pipeline_mode<synchronous>, transform_indices = @transform_3, window_bounds = array<i64: 1, 32>}, {pipeline_mode = #tpu.pipeline_mode<synchronous>, transform_indices = @transform_4, window_bounds = array<i64: 1, 32>}, {pipeline_mode = #tpu.pipeline_mode<synchronous>, transform_indices = @transform_5, window_bounds = array<i64: 1, 32>}, {pipeline_mode = #tpu.pipeline_mode<synchronous>, transform_indices = @transform_6, window_bounds = array<i64: 32, 32>}, {pipeline_mode = #tpu.pipeline_mode<synchronous>, transform_indices = @transform_7, window_bounds = array<i64: 1, 32>}, {pipeline_mode = #tpu.pipeline_mode<synchronous>, transform_indices = @transform_8, window_bounds = array<i64: 32, 64>}, {pipeline_mode = #tpu.pipeline_mode<synchronous>, transform_indices = @transform_9, window_bounds = array<i64: 1, 64>}, {pipeline_mode = #tpu.pipeline_mode<synchronous>, transform_indices = @transform_10, window_bounds = array<i64: 32, 32>}, {pipeline_mode = #tpu.pipeline_mode<synchronous>, transform_indices = @transform_11, window_bounds = array<i64: 1, 32>}, {pipeline_mode = #tpu.pipeline_mode<synchronous>, transform_indices = @transform_12, window_bounds = array<i64: 2, 32, 64>}, {pipeline_mode = #tpu.pipeline_mode<synchronous>, transform_indices = @transform_13, window_bounds = array<i64: 2, 1, 64>}, {pipeline_mode = #tpu.pipeline_mode<synchronous>, transform_indices = @transform_14, window_bounds = array<i64: 2, 64, 32>}, {pipeline_mode = #tpu.pipeline_mode<synchronous>, transform_indices = @transform_15, window_bounds = array<i64: 1, 32>}, {transform_indices = @transform_16, window_bounds = array<i64: 1, 8, 32>}]} {
    %c0 = arith.constant 0 : index
    %c0_0 = arith.constant 0 : index
    %0 = vector.load %arg3[%c0, %c0_0] : memref<1x32xf32, #tpu.memory_space<vmem>>, vector<1x32xf32>
    %cst = arith.constant dense<0.000000e+00> : vector<1xf32>
    %1 = vector.multi_reduction <add>, %0, %cst [1] : vector<1x32xf32> to vector<1xf32>
    %2 = vector.shape_cast %1 : vector<1xf32> to vector<1x1xf32>
    %cst_1 = arith.constant 1.000000e+00 : f32
    %3 = vector.broadcast %cst_1 : f32 to vector<1x1xf32>
    %4 = arith.divf %3, %2 : vector<1x1xf32>
    %cst_2 = arith.constant 1.000000e+00 : f32
    %5 = vector.broadcast %cst_2 : f32 to vector<1x1xf32>
    %6 = arith.subf %2, %5 : vector<1x1xf32>
    %cst_3 = arith.constant 1.000000e+00 : f32
    %7 = vector.broadcast %cst_3 : f32 to vector<1x1xf32>
    %8 = arith.maximumf %6, %7 : vector<1x1xf32>
    %cst_4 = arith.constant 1.000000e+00 : f32
    %9 = vector.broadcast %cst_4 : f32 to vector<1x1xf32>
    %10 = arith.divf %9, %8 : vector<1x1xf32>
    %c0_5 = arith.constant 0 : index
    %c0_6 = arith.constant 0 : index
    %c0_7 = arith.constant 0 : index
    %11 = vector.load %arg2[%c0_5, %c0_6, %c0_7] : memref<1x8x32xf32, #tpu.memory_space<vmem>>, vector<1x8x32xf32>
    %12 = vector.shape_cast %11 : vector<1x8x32xf32> to vector<8x32xf32>
    %c0_8 = arith.constant 0 : index
    %c0_9 = arith.constant 0 : index
    %13 = vector.load %arg4[%c0_8, %c0_9] : memref<1x32xf32, #tpu.memory_space<vmem>>, vector<1x32xf32>
    %c0_10 = arith.constant 0 : index
    %c0_11 = arith.constant 0 : index
    %14 = vector.load %arg5[%c0_10, %c0_11] : memref<1x32xf32, #tpu.memory_space<vmem>>, vector<1x32xf32>
    %15 = vector.broadcast %0 : vector<1x32xf32> to vector<8x32xf32>
    %16 = arith.mulf %12, %15 : vector<8x32xf32>
    %cst_12 = arith.constant dense<0.000000e+00> : vector<8xf32>
    %17 = vector.multi_reduction <add>, %16, %cst_12 [1] : vector<8x32xf32> to vector<8xf32>
    %18 = vector.shape_cast %17 : vector<8xf32> to vector<8x1xf32>
    %19 = vector.broadcast %4 : vector<1x1xf32> to vector<8x1xf32>
    %20 = arith.mulf %18, %19 : vector<8x1xf32>
    %21 = vector.broadcast %20 : vector<8x1xf32> to vector<8x32xf32>
    %22 = arith.subf %12, %21 : vector<8x32xf32>
    %23 = vector.broadcast %0 : vector<1x32xf32> to vector<8x32xf32>
    %24 = arith.mulf %22, %23 : vector<8x32xf32>
    %25 = arith.mulf %24, %24 : vector<8x32xf32>
    %cst_13 = arith.constant dense<0.000000e+00> : vector<8xf32>
    %26 = vector.multi_reduction <add>, %25, %cst_13 [1] : vector<8x32xf32> to vector<8xf32>
    %27 = vector.shape_cast %26 : vector<8xf32> to vector<8x1xf32>
    %28 = vector.broadcast %10 : vector<1x1xf32> to vector<8x1xf32>
    %29 = arith.mulf %27, %28 : vector<8x1xf32>
    %30 = math.sqrt %29 : vector<8x1xf32>
    %cst_14 = arith.constant 9.99999974E-6 : f32
    %31 = vector.broadcast %cst_14 : f32 to vector<8x1xf32>
    %32 = arith.addf %30, %31 : vector<8x1xf32>
    %33 = tpu.reciprocal %32 {approx = true} : vector<8x1xf32> -> vector<8x1xf32>
    %34 = vector.broadcast %20 : vector<8x1xf32> to vector<8x32xf32>
    %35 = arith.subf %12, %34 : vector<8x32xf32>
    %36 = vector.broadcast %33 : vector<8x1xf32> to vector<8x32xf32>
    %37 = arith.mulf %35, %36 : vector<8x32xf32>
    %38 = vector.broadcast %13 : vector<1x32xf32> to vector<8x32xf32>
    %39 = arith.mulf %37, %38 : vector<8x32xf32>
    %40 = vector.broadcast %14 : vector<1x32xf32> to vector<8x32xf32>
    %41 = arith.addf %39, %40 : vector<8x32xf32>
    %42 = vector.broadcast %0 : vector<1x32xf32> to vector<8x32xf32>
    %43 = arith.mulf %41, %42 : vector<8x32xf32>
    %44 = arith.truncf %43 : vector<8x32xf32> to vector<8x32xbf16>
    %c8_i32 = arith.constant 8 : i32
    %45 = arith.muli %arg1, %c8_i32 : i32
    %46 = tpu.assume_multiple %45, 8 : i32
    %c0_15 = arith.constant 0 : index
    %c0_16 = arith.constant 0 : index
    %47 = vector.load %arg10[%c0_15, %c0_16] : memref<32x64xbf16, #tpu.memory_space<vmem>>, vector<32x64xbf16>
    %cst_17 = arith.constant dense<0.000000e+00> : vector<8x64xf32>
    %48 = tpu.matmul %44, %47, %cst_17 {dimension_numbers = #tpu.dot_dimension_numbers<[1], [0], [0], [1], [0, 0, 1, 1], [], []>} : vector<8x32xbf16>, vector<32x64xbf16>, vector<8x64xf32> -> vector<8x64xf32>
    %c0_18 = arith.constant 0 : index
    %c0_19 = arith.constant 0 : index
    %49 = vector.load %arg11[%c0_18, %c0_19] : memref<1x64xf32, #tpu.memory_space<vmem>>, vector<1x64xf32>
    %50 = vector.broadcast %49 : vector<1x64xf32> to vector<8x64xf32>
    %51 = arith.addf %48, %50 : vector<8x64xf32>
    %52 = vector.extract_strided_slice %51 {offsets = [0, 0], sizes = [8, 32], strides = [1, 1]} : vector<8x64xf32> to vector<8x32xf32>
    %53 = arith.truncf %52 : vector<8x32xf32> to vector<8x32xbf16>
    %54 = arith.index_cast %46 : i32 to index
    %c0_20 = arith.constant 0 : index
    %55 = vector.load %arg19[%54, %c0_20] : memref<16x32xbf16, #tpu.memory_space<vmem>>, vector<8x32xbf16>
    tpu.vector_store %arg19[%54, %c0_20], %53 {strides = array<i32>} : memref<16x32xbf16, #tpu.memory_space<vmem>>, vector<8x32xbf16>,
    %56 = vector.extract_strided_slice %51 {offsets = [0, 32], sizes = [8, 32], strides = [1, 1]} : vector<8x64xf32> to vector<8x32xf32>
    %57 = arith.truncf %56 : vector<8x32xf32> to vector<8x32xbf16>
    %58 = arith.index_cast %46 : i32 to index
    %c0_21 = arith.constant 0 : index
    %59 = vector.load %arg20[%58, %c0_21] : memref<16x32xbf16, #tpu.memory_space<vmem>>, vector<8x32xbf16>
    tpu.vector_store %arg20[%58, %c0_21], %57 {strides = array<i32>} : memref<16x32xbf16, #tpu.memory_space<vmem>>, vector<8x32xbf16>,
    %c0_22 = arith.constant 0 : index
    %c0_23 = arith.constant 0 : index
    %60 = vector.load %arg8[%c0_22, %c0_23] : memref<32x32xbf16, #tpu.memory_space<vmem>>, vector<32x32xbf16>
    %cst_24 = arith.constant dense<0.000000e+00> : vector<8x32xf32>
    %61 = tpu.matmul %44, %60, %cst_24 {dimension_numbers = #tpu.dot_dimension_numbers<[1], [0], [0], [1], [0, 0, 1, 1], [], []>} : vector<8x32xbf16>, vector<32x32xbf16>, vector<8x32xf32> -> vector<8x32xf32>
    %c0_25 = arith.constant 0 : index
    %c0_26 = arith.constant 0 : index
    %62 = vector.load %arg9[%c0_25, %c0_26] : memref<1x32xf32, #tpu.memory_space<vmem>>, vector<1x32xf32>
    %63 = vector.broadcast %62 : vector<1x32xf32> to vector<8x32xf32>
    %64 = arith.addf %61, %63 : vector<8x32xf32>
    %cst_27 = arith.constant 0.353553385 : f32
    %65 = vector.broadcast %cst_27 : f32 to vector<8x32xf32>
    %66 = arith.mulf %64, %65 : vector<8x32xf32>
    %67 = arith.truncf %66 : vector<8x32xf32> to vector<8x32xbf16>
    %68 = tpu.iota {dimensions = array<i32: 0>} : vector<8x8xi32>
    %69 = tpu.iota {dimensions = array<i32: 1>} : vector<8x8xi32>
    %70 = arith.cmpi sle, %69, %68 : vector<8x8xi32>
    %cst_28 = arith.constant 0.000000e+00 : f32
    %71 = vector.broadcast %cst_28 : f32 to vector<8x32xf32>
    %72 = vector.extract_strided_slice %67 {offsets = [0, 0], sizes = [8, 8], strides = [1, 1]} : vector<8x32xbf16> to vector<8x8xbf16>
    %73 = arith.index_cast %46 : i32 to index
    %c0_29 = arith.constant 0 : index
    %74 = vector.load %arg19[%73, %c0_29] : memref<16x32xbf16, #tpu.memory_space<vmem>>, vector<8x8xbf16>
    %75 = arith.index_cast %46 : i32 to index
    %c0_30 = arith.constant 0 : index
    %76 = vector.load %arg20[%75, %c0_30] : memref<16x32xbf16, #tpu.memory_space<vmem>>, vector<8x8xbf16>
    %cst_31 = arith.constant dense<0.000000e+00> : vector<8x8xf32>
    %77 = tpu.matmul %72, %74, %cst_31 {dimension_numbers = #tpu.dot_dimension_numbers<[1], [1], [0], [0], [0, 0, 1, 0], [], []>} : vector<8x8xbf16>, vector<8x8xbf16>, vector<8x8xf32> -> vector<8x8xf32>
    %cst_32 = arith.constant -1.000000e+30 : f32
    %78 = vector.broadcast %cst_32 : f32 to vector<8x8xf32>
    %79 = arith.select %70, %77, %78 : vector<8x8xi1>, vector<8x8xf32>
    %cst_33 = arith.constant dense<0xFF800000> : vector<8xf32>
    %80 = vector.multi_reduction <maximumf>, %79, %cst_33 [1] : vector<8x8xf32> to vector<8xf32>
    %81 = vector.shape_cast %80 : vector<8xf32> to vector<8x1xf32>
    %82 = vector.broadcast %81 : vector<8x1xf32> to vector<8x8xf32>
    %83 = arith.subf %79, %82 : vector<8x8xf32>
    %84 = math.exp %83 : vector<8x8xf32>
    %cst_34 = arith.constant dense<0.000000e+00> : vector<8xf32>
    %85 = vector.multi_reduction <add>, %84, %cst_34 [1] : vector<8x8xf32> to vector<8xf32>
    %86 = vector.shape_cast %85 : vector<8xf32> to vector<8x1xf32>
    %87 = arith.truncf %84 : vector<8x8xf32> to vector<8x8xbf16>
    %cst_35 = arith.constant dense<0.000000e+00> : vector<8x8xf32>
    %88 = tpu.matmul %87, %76, %cst_35 {dimension_numbers = #tpu.dot_dimension_numbers<[1], [0], [0], [1], [0, 0, 1, 1], [], []>} : vector<8x8xbf16>, vector<8x8xbf16>, vector<8x8xf32> -> vector<8x8xf32>
    %c0_i32 = arith.constant 0 : i32
    %89 = arith.subi %arg1, %c0_i32 : i32
    %90 = arith.addi %c0_i32, %89 : i32
    %c1_i32 = arith.constant 1 : i32
    %91:3 = scf.for %arg21 = %c0_i32 to %90 step %c1_i32 iter_args(%arg22 = %81, %arg23 = %86, %arg24 = %88) -> (vector<8x1xf32>, vector<8x1xf32>, vector<8x8xf32>)  : i32 {
      %c8_i32_113 = arith.constant 8 : i32
      %280 = arith.muli %arg21, %c8_i32_113 : i32
      %281 = tpu.assume_multiple %280, 8 : i32
      %282 = arith.index_cast %281 : i32 to index
      %c0_114 = arith.constant 0 : index
      %283 = vector.load %arg19[%282, %c0_114] : memref<16x32xbf16, #tpu.memory_space<vmem>>, vector<8x8xbf16>
      %284 = arith.index_cast %281 : i32 to index
      %c0_115 = arith.constant 0 : index
      %285 = vector.load %arg20[%284, %c0_115] : memref<16x32xbf16, #tpu.memory_space<vmem>>, vector<8x8xbf16>
      %cst_116 = arith.constant dense<0.000000e+00> : vector<8x8xf32>
      %286 = tpu.matmul %72, %283, %cst_116 {dimension_numbers = #tpu.dot_dimension_numbers<[1], [1], [0], [0], [0, 0, 1, 0], [], []>} : vector<8x8xbf16>, vector<8x8xbf16>, vector<8x8xf32> -> vector<8x8xf32>
      %cst_117 = arith.constant dense<0xFF800000> : vector<8xf32>
      %287 = vector.multi_reduction <maximumf>, %286, %cst_117 [1] : vector<8x8xf32> to vector<8xf32>
      %288 = vector.shape_cast %287 : vector<8xf32> to vector<8x1xf32>
      %289 = arith.maximumf %arg22, %288 : vector<8x1xf32>
      %290 = arith.subf %arg22, %289 : vector<8x1xf32>
      %291 = math.exp %290 : vector<8x1xf32>
      %292 = vector.broadcast %289 : vector<8x1xf32> to vector<8x8xf32>
      %293 = arith.subf %286, %292 : vector<8x8xf32>
      %294 = math.exp %293 : vector<8x8xf32>
      %295 = arith.mulf %291, %arg23 : vector<8x1xf32>
      %cst_118 = arith.constant dense<0.000000e+00> : vector<8xf32>
      %296 = vector.multi_reduction <add>, %294, %cst_118 [1] : vector<8x8xf32> to vector<8xf32>
      %297 = vector.shape_cast %296 : vector<8xf32> to vector<8x1xf32>
      %298 = arith.addf %295, %297 : vector<8x1xf32>
      %299 = vector.broadcast %291 : vector<8x1xf32> to vector<8x8xf32>
      %300 = arith.mulf %299, %arg24 : vector<8x8xf32>
      %301 = arith.truncf %294 : vector<8x8xf32> to vector<8x8xbf16>
      %cst_119 = arith.constant dense<0.000000e+00> : vector<8x8xf32>
      %302 = tpu.matmul %301, %285, %cst_119 {dimension_numbers = #tpu.dot_dimension_numbers<[1], [0], [0], [1], [0, 0, 1, 1], [], []>} : vector<8x8xbf16>, vector<8x8xbf16>, vector<8x8xf32> -> vector<8x8xf32>
      %303 = arith.addf %300, %302 : vector<8x8xf32>
      scf.yield %289, %298, %303 : vector<8x1xf32>, vector<8x1xf32>, vector<8x8xf32>
    }
    %92 = tpu.reciprocal %91#1 {approx = true} : vector<8x1xf32> -> vector<8x1xf32>
    %93 = vector.broadcast %92 : vector<8x1xf32> to vector<8x8xf32>
    %94 = arith.mulf %91#2, %93 : vector<8x8xf32>
    %95 = arith.truncf %94 : vector<8x8xf32> to vector<8x8xbf16>
    %c0_36 = arith.constant 0 : index
    %c0_37 = arith.constant 0 : index
    %96 = vector.load %arg12[%c0_36, %c0_37] : memref<32x32xbf16, #tpu.memory_space<vmem>>, vector<8x32xbf16>
    %cst_38 = arith.constant dense<0.000000e+00> : vector<8x32xf32>
    %97 = tpu.matmul %95, %96, %cst_38 {dimension_numbers = #tpu.dot_dimension_numbers<[1], [0], [0], [1], [0, 0, 1, 1], [], []>} : vector<8x8xbf16>, vector<8x32xbf16>, vector<8x32xf32> -> vector<8x32xf32>
    %98 = arith.addf %71, %97 : vector<8x32xf32>
    %99 = vector.extract_strided_slice %67 {offsets = [0, 8], sizes = [8, 8], strides = [1, 1]} : vector<8x32xbf16> to vector<8x8xbf16>
    %100 = arith.index_cast %46 : i32 to index
    %c8 = arith.constant 8 : index
    %101 = vector.load %arg19[%100, %c8] : memref<16x32xbf16, #tpu.memory_space<vmem>>, vector<8x8xbf16>
    %102 = arith.index_cast %46 : i32 to index
    %c8_39 = arith.constant 8 : index
    %103 = vector.load %arg20[%102, %c8_39] : memref<16x32xbf16, #tpu.memory_space<vmem>>, vector<8x8xbf16>
    %cst_40 = arith.constant dense<0.000000e+00> : vector<8x8xf32>
    %104 = tpu.matmul %99, %101, %cst_40 {dimension_numbers = #tpu.dot_dimension_numbers<[1], [1], [0], [0], [0, 0, 1, 0], [], []>} : vector<8x8xbf16>, vector<8x8xbf16>, vector<8x8xf32> -> vector<8x8xf32>
    %cst_41 = arith.constant -1.000000e+30 : f32
    %105 = vector.broadcast %cst_41 : f32 to vector<8x8xf32>
    %106 = arith.select %70, %104, %105 : vector<8x8xi1>, vector<8x8xf32>
    %cst_42 = arith.constant dense<0xFF800000> : vector<8xf32>
    %107 = vector.multi_reduction <maximumf>, %106, %cst_42 [1] : vector<8x8xf32> to vector<8xf32>
    %108 = vector.shape_cast %107 : vector<8xf32> to vector<8x1xf32>
    %109 = vector.broadcast %108 : vector<8x1xf32> to vector<8x8xf32>
    %110 = arith.subf %106, %109 : vector<8x8xf32>
    %111 = math.exp %110 : vector<8x8xf32>
    %cst_43 = arith.constant dense<0.000000e+00> : vector<8xf32>
    %112 = vector.multi_reduction <add>, %111, %cst_43 [1] : vector<8x8xf32> to vector<8xf32>
    %113 = vector.shape_cast %112 : vector<8xf32> to vector<8x1xf32>
    %114 = arith.truncf %111 : vector<8x8xf32> to vector<8x8xbf16>
    %cst_44 = arith.constant dense<0.000000e+00> : vector<8x8xf32>
    %115 = tpu.matmul %114, %103, %cst_44 {dimension_numbers = #tpu.dot_dimension_numbers<[1], [0], [0], [1], [0, 0, 1, 1], [], []>} : vector<8x8xbf16>, vector<8x8xbf16>, vector<8x8xf32> -> vector<8x8xf32>
    %c0_i32_45 = arith.constant 0 : i32
    %116 = arith.subi %arg1, %c0_i32_45 : i32
    %117 = arith.addi %c0_i32_45, %116 : i32
    %c1_i32_46 = arith.constant 1 : i32
    %118:3 = scf.for %arg21 = %c0_i32_45 to %117 step %c1_i32_46 iter_args(%arg22 = %108, %arg23 = %113, %arg24 = %115) -> (vector<8x1xf32>, vector<8x1xf32>, vector<8x8xf32>)  : i32 {
      %c8_i32_113 = arith.constant 8 : i32
      %280 = arith.muli %arg21, %c8_i32_113 : i32
      %281 = tpu.assume_multiple %280, 8 : i32
      %282 = arith.index_cast %281 : i32 to index
      %c8_114 = arith.constant 8 : index
      %283 = vector.load %arg19[%282, %c8_114] : memref<16x32xbf16, #tpu.memory_space<vmem>>, vector<8x8xbf16>
      %284 = arith.index_cast %281 : i32 to index
      %c8_115 = arith.constant 8 : index
      %285 = vector.load %arg20[%284, %c8_115] : memref<16x32xbf16, #tpu.memory_space<vmem>>, vector<8x8xbf16>
      %cst_116 = arith.constant dense<0.000000e+00> : vector<8x8xf32>
      %286 = tpu.matmul %99, %283, %cst_116 {dimension_numbers = #tpu.dot_dimension_numbers<[1], [1], [0], [0], [0, 0, 1, 0], [], []>} : vector<8x8xbf16>, vector<8x8xbf16>, vector<8x8xf32> -> vector<8x8xf32>
      %cst_117 = arith.constant dense<0xFF800000> : vector<8xf32>
      %287 = vector.multi_reduction <maximumf>, %286, %cst_117 [1] : vector<8x8xf32> to vector<8xf32>
      %288 = vector.shape_cast %287 : vector<8xf32> to vector<8x1xf32>
      %289 = arith.maximumf %arg22, %288 : vector<8x1xf32>
      %290 = arith.subf %arg22, %289 : vector<8x1xf32>
      %291 = math.exp %290 : vector<8x1xf32>
      %292 = vector.broadcast %289 : vector<8x1xf32> to vector<8x8xf32>
      %293 = arith.subf %286, %292 : vector<8x8xf32>
      %294 = math.exp %293 : vector<8x8xf32>
      %295 = arith.mulf %291, %arg23 : vector<8x1xf32>
      %cst_118 = arith.constant dense<0.000000e+00> : vector<8xf32>
      %296 = vector.multi_reduction <add>, %294, %cst_118 [1] : vector<8x8xf32> to vector<8xf32>
      %297 = vector.shape_cast %296 : vector<8xf32> to vector<8x1xf32>
      %298 = arith.addf %295, %297 : vector<8x1xf32>
      %299 = vector.broadcast %291 : vector<8x1xf32> to vector<8x8xf32>
      %300 = arith.mulf %299, %arg24 : vector<8x8xf32>
      %301 = arith.truncf %294 : vector<8x8xf32> to vector<8x8xbf16>
      %cst_119 = arith.constant dense<0.000000e+00> : vector<8x8xf32>
      %302 = tpu.matmul %301, %285, %cst_119 {dimension_numbers = #tpu.dot_dimension_numbers<[1], [0], [0], [1], [0, 0, 1, 1], [], []>} : vector<8x8xbf16>, vector<8x8xbf16>, vector<8x8xf32> -> vector<8x8xf32>
      %303 = arith.addf %300, %302 : vector<8x8xf32>
      scf.yield %289, %298, %303 : vector<8x1xf32>, vector<8x1xf32>, vector<8x8xf32>
    }
    %119 = tpu.reciprocal %118#1 {approx = true} : vector<8x1xf32> -> vector<8x1xf32>
    %120 = vector.broadcast %119 : vector<8x1xf32> to vector<8x8xf32>
    %121 = arith.mulf %118#2, %120 : vector<8x8xf32>
    %122 = arith.truncf %121 : vector<8x8xf32> to vector<8x8xbf16>
    %c8_47 = arith.constant 8 : index
    %c0_48 = arith.constant 0 : index
    %123 = vector.load %arg12[%c8_47, %c0_48] : memref<32x32xbf16, #tpu.memory_space<vmem>>, vector<8x32xbf16>
    %cst_49 = arith.constant dense<0.000000e+00> : vector<8x32xf32>
    %124 = tpu.matmul %122, %123, %cst_49 {dimension_numbers = #tpu.dot_dimension_numbers<[1], [0], [0], [1], [0, 0, 1, 1], [], []>} : vector<8x8xbf16>, vector<8x32xbf16>, vector<8x32xf32> -> vector<8x32xf32>
    %125 = arith.addf %98, %124 : vector<8x32xf32>
    %126 = vector.extract_strided_slice %67 {offsets = [0, 16], sizes = [8, 8], strides = [1, 1]} : vector<8x32xbf16> to vector<8x8xbf16>
    %127 = arith.index_cast %46 : i32 to index
    %c16 = arith.constant 16 : index
    %128 = vector.load %arg19[%127, %c16] : memref<16x32xbf16, #tpu.memory_space<vmem>>, vector<8x8xbf16>
    %129 = arith.index_cast %46 : i32 to index
    %c16_50 = arith.constant 16 : index
    %130 = vector.load %arg20[%129, %c16_50] : memref<16x32xbf16, #tpu.memory_space<vmem>>, vector<8x8xbf16>
    %cst_51 = arith.constant dense<0.000000e+00> : vector<8x8xf32>
    %131 = tpu.matmul %126, %128, %cst_51 {dimension_numbers = #tpu.dot_dimension_numbers<[1], [1], [0], [0], [0, 0, 1, 0], [], []>} : vector<8x8xbf16>, vector<8x8xbf16>, vector<8x8xf32> -> vector<8x8xf32>
    %cst_52 = arith.constant -1.000000e+30 : f32
    %132 = vector.broadcast %cst_52 : f32 to vector<8x8xf32>
    %133 = arith.select %70, %131, %132 : vector<8x8xi1>, vector<8x8xf32>
    %cst_53 = arith.constant dense<0xFF800000> : vector<8xf32>
    %134 = vector.multi_reduction <maximumf>, %133, %cst_53 [1] : vector<8x8xf32> to vector<8xf32>
    %135 = vector.shape_cast %134 : vector<8xf32> to vector<8x1xf32>
    %136 = vector.broadcast %135 : vector<8x1xf32> to vector<8x8xf32>
    %137 = arith.subf %133, %136 : vector<8x8xf32>
    %138 = math.exp %137 : vector<8x8xf32>
    %cst_54 = arith.constant dense<0.000000e+00> : vector<8xf32>
    %139 = vector.multi_reduction <add>, %138, %cst_54 [1] : vector<8x8xf32> to vector<8xf32>
    %140 = vector.shape_cast %139 : vector<8xf32> to vector<8x1xf32>
    %141 = arith.truncf %138 : vector<8x8xf32> to vector<8x8xbf16>
    %cst_55 = arith.constant dense<0.000000e+00> : vector<8x8xf32>
    %142 = tpu.matmul %141, %130, %cst_55 {dimension_numbers = #tpu.dot_dimension_numbers<[1], [0], [0], [1], [0, 0, 1, 1], [], []>} : vector<8x8xbf16>, vector<8x8xbf16>, vector<8x8xf32> -> vector<8x8xf32>
    %c0_i32_56 = arith.constant 0 : i32
    %143 = arith.subi %arg1, %c0_i32_56 : i32
    %144 = arith.addi %c0_i32_56, %143 : i32
    %c1_i32_57 = arith.constant 1 : i32
    %145:3 = scf.for %arg21 = %c0_i32_56 to %144 step %c1_i32_57 iter_args(%arg22 = %135, %arg23 = %140, %arg24 = %142) -> (vector<8x1xf32>, vector<8x1xf32>, vector<8x8xf32>)  : i32 {
      %c8_i32_113 = arith.constant 8 : i32
      %280 = arith.muli %arg21, %c8_i32_113 : i32
      %281 = tpu.assume_multiple %280, 8 : i32
      %282 = arith.index_cast %281 : i32 to index
      %c16_114 = arith.constant 16 : index
      %283 = vector.load %arg19[%282, %c16_114] : memref<16x32xbf16, #tpu.memory_space<vmem>>, vector<8x8xbf16>
      %284 = arith.index_cast %281 : i32 to index
      %c16_115 = arith.constant 16 : index
      %285 = vector.load %arg20[%284, %c16_115] : memref<16x32xbf16, #tpu.memory_space<vmem>>, vector<8x8xbf16>
      %cst_116 = arith.constant dense<0.000000e+00> : vector<8x8xf32>
      %286 = tpu.matmul %126, %283, %cst_116 {dimension_numbers = #tpu.dot_dimension_numbers<[1], [1], [0], [0], [0, 0, 1, 0], [], []>} : vector<8x8xbf16>, vector<8x8xbf16>, vector<8x8xf32> -> vector<8x8xf32>
      %cst_117 = arith.constant dense<0xFF800000> : vector<8xf32>
      %287 = vector.multi_reduction <maximumf>, %286, %cst_117 [1] : vector<8x8xf32> to vector<8xf32>
      %288 = vector.shape_cast %287 : vector<8xf32> to vector<8x1xf32>
      %289 = arith.maximumf %arg22, %288 : vector<8x1xf32>
      %290 = arith.subf %arg22, %289 : vector<8x1xf32>
      %291 = math.exp %290 : vector<8x1xf32>
      %292 = vector.broadcast %289 : vector<8x1xf32> to vector<8x8xf32>
      %293 = arith.subf %286, %292 : vector<8x8xf32>
      %294 = math.exp %293 : vector<8x8xf32>
      %295 = arith.mulf %291, %arg23 : vector<8x1xf32>
      %cst_118 = arith.constant dense<0.000000e+00> : vector<8xf32>
      %296 = vector.multi_reduction <add>, %294, %cst_118 [1] : vector<8x8xf32> to vector<8xf32>
      %297 = vector.shape_cast %296 : vector<8xf32> to vector<8x1xf32>
      %298 = arith.addf %295, %297 : vector<8x1xf32>
      %299 = vector.broadcast %291 : vector<8x1xf32> to vector<8x8xf32>
      %300 = arith.mulf %299, %arg24 : vector<8x8xf32>
      %301 = arith.truncf %294 : vector<8x8xf32> to vector<8x8xbf16>
      %cst_119 = arith.constant dense<0.000000e+00> : vector<8x8xf32>
      %302 = tpu.matmul %301, %285, %cst_119 {dimension_numbers = #tpu.dot_dimension_numbers<[1], [0], [0], [1], [0, 0, 1, 1], [], []>} : vector<8x8xbf16>, vector<8x8xbf16>, vector<8x8xf32> -> vector<8x8xf32>
      %303 = arith.addf %300, %302 : vector<8x8xf32>
      scf.yield %289, %298, %303 : vector<8x1xf32>, vector<8x1xf32>, vector<8x8xf32>
    }
    %146 = tpu.reciprocal %145#1 {approx = true} : vector<8x1xf32> -> vector<8x1xf32>
    %147 = vector.broadcast %146 : vector<8x1xf32> to vector<8x8xf32>
    %148 = arith.mulf %145#2, %147 : vector<8x8xf32>
    %149 = arith.truncf %148 : vector<8x8xf32> to vector<8x8xbf16>
    %c16_58 = arith.constant 16 : index
    %c0_59 = arith.constant 0 : index
    %150 = vector.load %arg12[%c16_58, %c0_59] : memref<32x32xbf16, #tpu.memory_space<vmem>>, vector<8x32xbf16>
    %cst_60 = arith.constant dense<0.000000e+00> : vector<8x32xf32>
    %151 = tpu.matmul %149, %150, %cst_60 {dimension_numbers = #tpu.dot_dimension_numbers<[1], [0], [0], [1], [0, 0, 1, 1], [], []>} : vector<8x8xbf16>, vector<8x32xbf16>, vector<8x32xf32> -> vector<8x32xf32>
    %152 = arith.addf %125, %151 : vector<8x32xf32>
    %153 = vector.extract_strided_slice %67 {offsets = [0, 24], sizes = [8, 8], strides = [1, 1]} : vector<8x32xbf16> to vector<8x8xbf16>
    %154 = arith.index_cast %46 : i32 to index
    %c24 = arith.constant 24 : index
    %155 = vector.load %arg19[%154, %c24] : memref<16x32xbf16, #tpu.memory_space<vmem>>, vector<8x8xbf16>
    %156 = arith.index_cast %46 : i32 to index
    %c24_61 = arith.constant 24 : index
    %157 = vector.load %arg20[%156, %c24_61] : memref<16x32xbf16, #tpu.memory_space<vmem>>, vector<8x8xbf16>
    %cst_62 = arith.constant dense<0.000000e+00> : vector<8x8xf32>
    %158 = tpu.matmul %153, %155, %cst_62 {dimension_numbers = #tpu.dot_dimension_numbers<[1], [1], [0], [0], [0, 0, 1, 0], [], []>} : vector<8x8xbf16>, vector<8x8xbf16>, vector<8x8xf32> -> vector<8x8xf32>
    %cst_63 = arith.constant -1.000000e+30 : f32
    %159 = vector.broadcast %cst_63 : f32 to vector<8x8xf32>
    %160 = arith.select %70, %158, %159 : vector<8x8xi1>, vector<8x8xf32>
    %cst_64 = arith.constant dense<0xFF800000> : vector<8xf32>
    %161 = vector.multi_reduction <maximumf>, %160, %cst_64 [1] : vector<8x8xf32> to vector<8xf32>
    %162 = vector.shape_cast %161 : vector<8xf32> to vector<8x1xf32>
    %163 = vector.broadcast %162 : vector<8x1xf32> to vector<8x8xf32>
    %164 = arith.subf %160, %163 : vector<8x8xf32>
    %165 = math.exp %164 : vector<8x8xf32>
    %cst_65 = arith.constant dense<0.000000e+00> : vector<8xf32>
    %166 = vector.multi_reduction <add>, %165, %cst_65 [1] : vector<8x8xf32> to vector<8xf32>
    %167 = vector.shape_cast %166 : vector<8xf32> to vector<8x1xf32>
    %168 = arith.truncf %165 : vector<8x8xf32> to vector<8x8xbf16>
    %cst_66 = arith.constant dense<0.000000e+00> : vector<8x8xf32>
    %169 = tpu.matmul %168, %157, %cst_66 {dimension_numbers = #tpu.dot_dimension_numbers<[1], [0], [0], [1], [0, 0, 1, 1], [], []>} : vector<8x8xbf16>, vector<8x8xbf16>, vector<8x8xf32> -> vector<8x8xf32>
    %c0_i32_67 = arith.constant 0 : i32
    %170 = arith.subi %arg1, %c0_i32_67 : i32
    %171 = arith.addi %c0_i32_67, %170 : i32
    %c1_i32_68 = arith.constant 1 : i32
    %172:3 = scf.for %arg21 = %c0_i32_67 to %171 step %c1_i32_68 iter_args(%arg22 = %162, %arg23 = %167, %arg24 = %169) -> (vector<8x1xf32>, vector<8x1xf32>, vector<8x8xf32>)  : i32 {
      %c8_i32_113 = arith.constant 8 : i32
      %280 = arith.muli %arg21, %c8_i32_113 : i32
      %281 = tpu.assume_multiple %280, 8 : i32
      %282 = arith.index_cast %281 : i32 to index
      %c24_114 = arith.constant 24 : index
      %283 = vector.load %arg19[%282, %c24_114] : memref<16x32xbf16, #tpu.memory_space<vmem>>, vector<8x8xbf16>
      %284 = arith.index_cast %281 : i32 to index
      %c24_115 = arith.constant 24 : index
      %285 = vector.load %arg20[%284, %c24_115] : memref<16x32xbf16, #tpu.memory_space<vmem>>, vector<8x8xbf16>
      %cst_116 = arith.constant dense<0.000000e+00> : vector<8x8xf32>
      %286 = tpu.matmul %153, %283, %cst_116 {dimension_numbers = #tpu.dot_dimension_numbers<[1], [1], [0], [0], [0, 0, 1, 0], [], []>} : vector<8x8xbf16>, vector<8x8xbf16>, vector<8x8xf32> -> vector<8x8xf32>
      %cst_117 = arith.constant dense<0xFF800000> : vector<8xf32>
      %287 = vector.multi_reduction <maximumf>, %286, %cst_117 [1] : vector<8x8xf32> to vector<8xf32>
      %288 = vector.shape_cast %287 : vector<8xf32> to vector<8x1xf32>
      %289 = arith.maximumf %arg22, %288 : vector<8x1xf32>
      %290 = arith.subf %arg22, %289 : vector<8x1xf32>
      %291 = math.exp %290 : vector<8x1xf32>
      %292 = vector.broadcast %289 : vector<8x1xf32> to vector<8x8xf32>
      %293 = arith.subf %286, %292 : vector<8x8xf32>
      %294 = math.exp %293 : vector<8x8xf32>
      %295 = arith.mulf %291, %arg23 : vector<8x1xf32>
      %cst_118 = arith.constant dense<0.000000e+00> : vector<8xf32>
      %296 = vector.multi_reduction <add>, %294, %cst_118 [1] : vector<8x8xf32> to vector<8xf32>
      %297 = vector.shape_cast %296 : vector<8xf32> to vector<8x1xf32>
      %298 = arith.addf %295, %297 : vector<8x1xf32>
      %299 = vector.broadcast %291 : vector<8x1xf32> to vector<8x8xf32>
      %300 = arith.mulf %299, %arg24 : vector<8x8xf32>
      %301 = arith.truncf %294 : vector<8x8xf32> to vector<8x8xbf16>
      %cst_119 = arith.constant dense<0.000000e+00> : vector<8x8xf32>
      %302 = tpu.matmul %301, %285, %cst_119 {dimension_numbers = #tpu.dot_dimension_numbers<[1], [0], [0], [1], [0, 0, 1, 1], [], []>} : vector<8x8xbf16>, vector<8x8xbf16>, vector<8x8xf32> -> vector<8x8xf32>
      %303 = arith.addf %300, %302 : vector<8x8xf32>
      scf.yield %289, %298, %303 : vector<8x1xf32>, vector<8x1xf32>, vector<8x8xf32>
    }
    %173 = tpu.reciprocal %172#1 {approx = true} : vector<8x1xf32> -> vector<8x1xf32>
    %174 = vector.broadcast %173 : vector<8x1xf32> to vector<8x8xf32>
    %175 = arith.mulf %172#2, %174 : vector<8x8xf32>
    %176 = arith.truncf %175 : vector<8x8xf32> to vector<8x8xbf16>
    %c24_69 = arith.constant 24 : index
    %c0_70 = arith.constant 0 : index
    %177 = vector.load %arg12[%c24_69, %c0_70] : memref<32x32xbf16, #tpu.memory_space<vmem>>, vector<8x32xbf16>
    %cst_71 = arith.constant dense<0.000000e+00> : vector<8x32xf32>
    %178 = tpu.matmul %176, %177, %cst_71 {dimension_numbers = #tpu.dot_dimension_numbers<[1], [0], [0], [1], [0, 0, 1, 1], [], []>} : vector<8x8xbf16>, vector<8x32xbf16>, vector<8x32xf32> -> vector<8x32xf32>
    %179 = arith.addf %152, %178 : vector<8x32xf32>
    %c0_72 = arith.constant 0 : index
    %c0_73 = arith.constant 0 : index
    %180 = vector.load %arg13[%c0_72, %c0_73] : memref<1x32xf32, #tpu.memory_space<vmem>>, vector<1x32xf32>
    %181 = vector.broadcast %180 : vector<1x32xf32> to vector<8x32xf32>
    %182 = arith.addf %179, %181 : vector<8x32xf32>
    %183 = arith.addf %182, %12 : vector<8x32xf32>
    %c0_74 = arith.constant 0 : index
    %c0_75 = arith.constant 0 : index
    %184 = vector.load %arg6[%c0_74, %c0_75] : memref<1x32xf32, #tpu.memory_space<vmem>>, vector<1x32xf32>
    %c0_76 = arith.constant 0 : index
    %c0_77 = arith.constant 0 : index
    %185 = vector.load %arg7[%c0_76, %c0_77] : memref<1x32xf32, #tpu.memory_space<vmem>>, vector<1x32xf32>
    %186 = vector.broadcast %0 : vector<1x32xf32> to vector<8x32xf32>
    %187 = arith.mulf %183, %186 : vector<8x32xf32>
    %cst_78 = arith.constant dense<0.000000e+00> : vector<8xf32>
    %188 = vector.multi_reduction <add>, %187, %cst_78 [1] : vector<8x32xf32> to vector<8xf32>
    %189 = vector.shape_cast %188 : vector<8xf32> to vector<8x1xf32>
    %190 = vector.broadcast %4 : vector<1x1xf32> to vector<8x1xf32>
    %191 = arith.mulf %189, %190 : vector<8x1xf32>
    %192 = vector.broadcast %191 : vector<8x1xf32> to vector<8x32xf32>
    %193 = arith.subf %183, %192 : vector<8x32xf32>
    %194 = vector.broadcast %0 : vector<1x32xf32> to vector<8x32xf32>
    %195 = arith.mulf %193, %194 : vector<8x32xf32>
    %196 = arith.mulf %195, %195 : vector<8x32xf32>
    %cst_79 = arith.constant dense<0.000000e+00> : vector<8xf32>
    %197 = vector.multi_reduction <add>, %196, %cst_79 [1] : vector<8x32xf32> to vector<8xf32>
    %198 = vector.shape_cast %197 : vector<8xf32> to vector<8x1xf32>
    %199 = vector.broadcast %10 : vector<1x1xf32> to vector<8x1xf32>
    %200 = arith.mulf %198, %199 : vector<8x1xf32>
    %201 = math.sqrt %200 : vector<8x1xf32>
    %cst_80 = arith.constant 9.99999974E-6 : f32
    %202 = vector.broadcast %cst_80 : f32 to vector<8x1xf32>
    %203 = arith.addf %201, %202 : vector<8x1xf32>
    %204 = tpu.reciprocal %203 {approx = true} : vector<8x1xf32> -> vector<8x1xf32>
    %205 = vector.broadcast %191 : vector<8x1xf32> to vector<8x32xf32>
    %206 = arith.subf %183, %205 : vector<8x32xf32>
    %207 = vector.broadcast %204 : vector<8x1xf32> to vector<8x32xf32>
    %208 = arith.mulf %206, %207 : vector<8x32xf32>
    %209 = vector.broadcast %184 : vector<1x32xf32> to vector<8x32xf32>
    %210 = arith.mulf %208, %209 : vector<8x32xf32>
    %211 = vector.broadcast %185 : vector<1x32xf32> to vector<8x32xf32>
    %212 = arith.addf %210, %211 : vector<8x32xf32>
    %213 = vector.broadcast %0 : vector<1x32xf32> to vector<8x32xf32>
    %214 = arith.mulf %212, %213 : vector<8x32xf32>
    %215 = arith.truncf %214 : vector<8x32xf32> to vector<8x32xbf16>
    %cst_81 = arith.constant 0.000000e+00 : f32
    %216 = vector.broadcast %cst_81 : f32 to vector<8x32xf32>
    %c0_i32_82 = arith.constant 0 : i32
    %217 = arith.index_cast %c0_i32_82 : i32 to index
    %c0_83 = arith.constant 0 : index
    %c0_84 = arith.constant 0 : index
    %218 = vector.load %arg14[%217, %c0_83, %c0_84] : memref<2x32x64xbf16, #tpu.memory_space<vmem>>, vector<1x32x64xbf16>
    %219 = vector.shape_cast %218 : vector<1x32x64xbf16> to vector<32x64xbf16>
    %cst_85 = arith.constant dense<0.000000e+00> : vector<8x64xf32>
    %220 = tpu.matmul %215, %219, %cst_85 {dimension_numbers = #tpu.dot_dimension_numbers<[1], [0], [0], [1], [0, 0, 1, 1], [], []>} : vector<8x32xbf16>, vector<32x64xbf16>, vector<8x64xf32> -> vector<8x64xf32>
    %221 = arith.index_cast %c0_i32_82 : i32 to index
    %c0_86 = arith.constant 0 : index
    %c0_87 = arith.constant 0 : index
    %222 = vector.load %arg15[%221, %c0_86, %c0_87] : memref<2x1x64xf32, #tpu.memory_space<vmem>>, vector<1x1x64xf32>
    %223 = vector.shape_cast %222 : vector<1x1x64xf32> to vector<1x64xf32>
    %224 = vector.broadcast %223 : vector<1x64xf32> to vector<8x64xf32>
    %225 = arith.addf %220, %224 : vector<8x64xf32>
    %226 = arith.truncf %225 : vector<8x64xf32> to vector<8x64xbf16>
    %cst_88 = arith.constant 5.000000e-01 : bf16
    %227 = vector.broadcast %cst_88 : bf16 to vector<8x64xbf16>
    %228 = arith.mulf %227, %226 : vector<8x64xbf16>
    %cst_89 = arith.constant 4.467770e-02 : bf16
    %229 = vector.broadcast %cst_89 : bf16 to vector<8x64xbf16>
    %230 = arith.mulf %229, %226 : vector<8x64xbf16>
    %231 = arith.mulf %230, %226 : vector<8x64xbf16>
    %232 = arith.mulf %231, %226 : vector<8x64xbf16>
    %233 = arith.addf %226, %232 : vector<8x64xbf16>
    %cst_90 = arith.constant 7.968750e-01 : bf16
    %234 = vector.broadcast %cst_90 : bf16 to vector<8x64xbf16>
    %235 = arith.mulf %234, %233 : vector<8x64xbf16>
    %236 = math.tanh %235 : vector<8x64xbf16>
    %cst_91 = arith.constant 1.000000e+00 : bf16
    %237 = vector.broadcast %cst_91 : bf16 to vector<8x64xbf16>
    %238 = arith.addf %237, %236 : vector<8x64xbf16>
    %239 = arith.mulf %228, %238 : vector<8x64xbf16>
    %240 = arith.index_cast %c0_i32_82 : i32 to index
    %c0_92 = arith.constant 0 : index
    %c0_93 = arith.constant 0 : index
    %241 = vector.load %arg16[%240, %c0_92, %c0_93] : memref<2x64x32xbf16, #tpu.memory_space<vmem>>, vector<1x64x32xbf16>
    %242 = vector.shape_cast %241 : vector<1x64x32xbf16> to vector<64x32xbf16>
    %cst_94 = arith.constant dense<0.000000e+00> : vector<8x32xf32>
    %243 = tpu.matmul %239, %242, %cst_94 {dimension_numbers = #tpu.dot_dimension_numbers<[1], [0], [0], [1], [0, 0, 1, 1], [], []>} : vector<8x64xbf16>, vector<64x32xbf16>, vector<8x32xf32> -> vector<8x32xf32>
    %244 = arith.addf %216, %243 : vector<8x32xf32>
    %c1_i32_95 = arith.constant 1 : i32
    %245 = arith.index_cast %c1_i32_95 : i32 to index
    %c0_96 = arith.constant 0 : index
    %c0_97 = arith.constant 0 : index
    %246 = vector.load %arg14[%245, %c0_96, %c0_97] : memref<2x32x64xbf16, #tpu.memory_space<vmem>>, vector<1x32x64xbf16>
    %247 = vector.shape_cast %246 : vector<1x32x64xbf16> to vector<32x64xbf16>
    %cst_98 = arith.constant dense<0.000000e+00> : vector<8x64xf32>
    %248 = tpu.matmul %215, %247, %cst_98 {dimension_numbers = #tpu.dot_dimension_numbers<[1], [0], [0], [1], [0, 0, 1, 1], [], []>} : vector<8x32xbf16>, vector<32x64xbf16>, vector<8x64xf32> -> vector<8x64xf32>
    %249 = arith.index_cast %c1_i32_95 : i32 to index
    %c0_99 = arith.constant 0 : index
    %c0_100 = arith.constant 0 : index
    %250 = vector.load %arg15[%249, %c0_99, %c0_100] : memref<2x1x64xf32, #tpu.memory_space<vmem>>, vector<1x1x64xf32>
    %251 = vector.shape_cast %250 : vector<1x1x64xf32> to vector<1x64xf32>
    %252 = vector.broadcast %251 : vector<1x64xf32> to vector<8x64xf32>
    %253 = arith.addf %248, %252 : vector<8x64xf32>
    %254 = arith.truncf %253 : vector<8x64xf32> to vector<8x64xbf16>
    %cst_101 = arith.constant 5.000000e-01 : bf16
    %255 = vector.broadcast %cst_101 : bf16 to vector<8x64xbf16>
    %256 = arith.mulf %255, %254 : vector<8x64xbf16>
    %cst_102 = arith.constant 4.467770e-02 : bf16
    %257 = vector.broadcast %cst_102 : bf16 to vector<8x64xbf16>
    %258 = arith.mulf %257, %254 : vector<8x64xbf16>
    %259 = arith.mulf %258, %254 : vector<8x64xbf16>
    %260 = arith.mulf %259, %254 : vector<8x64xbf16>
    %261 = arith.addf %254, %260 : vector<8x64xbf16>
    %cst_103 = arith.constant 7.968750e-01 : bf16
    %262 = vector.broadcast %cst_103 : bf16 to vector<8x64xbf16>
    %263 = arith.mulf %262, %261 : vector<8x64xbf16>
    %264 = math.tanh %263 : vector<8x64xbf16>
    %cst_104 = arith.constant 1.000000e+00 : bf16
    %265 = vector.broadcast %cst_104 : bf16 to vector<8x64xbf16>
    %266 = arith.addf %265, %264 : vector<8x64xbf16>
    %267 = arith.mulf %256, %266 : vector<8x64xbf16>
    %268 = arith.index_cast %c1_i32_95 : i32 to index
    %c0_105 = arith.constant 0 : index
    %c0_106 = arith.constant 0 : index
    %269 = vector.load %arg16[%268, %c0_105, %c0_106] : memref<2x64x32xbf16, #tpu.memory_space<vmem>>, vector<1x64x32xbf16>
    %270 = vector.shape_cast %269 : vector<1x64x32xbf16> to vector<64x32xbf16>
    %cst_107 = arith.constant dense<0.000000e+00> : vector<8x32xf32>
    %271 = tpu.matmul %267, %270, %cst_107 {dimension_numbers = #tpu.dot_dimension_numbers<[1], [0], [0], [1], [0, 0, 1, 1], [], []>} : vector<8x64xbf16>, vector<64x32xbf16>, vector<8x32xf32> -> vector<8x32xf32>
    %272 = arith.addf %244, %271 : vector<8x32xf32>
    %c2_i32 = arith.constant 2 : i32
    %273 = arith.addf %183, %272 : vector<8x32xf32>
    %c0_108 = arith.constant 0 : index
    %c0_109 = arith.constant 0 : index
    %274 = vector.load %arg17[%c0_108, %c0_109] : memref<1x32xf32, #tpu.memory_space<vmem>>, vector<1x32xf32>
    %275 = vector.broadcast %274 : vector<1x32xf32> to vector<8x32xf32>
    %276 = arith.addf %273, %275 : vector<8x32xf32>
    %c0_110 = arith.constant 0 : index
    %c0_111 = arith.constant 0 : index
    %c0_112 = arith.constant 0 : index
    %277 = vector.load %arg18[%c0_110, %c0_111, %c0_112] : memref<1x8x32xf32, #tpu.memory_space<vmem>>, vector<1x8x32xf32>
    %278 = vector.shape_cast %277 : vector<1x8x32xf32> to vector<8x32xf32>
    %279 = vector.shape_cast %276 : vector<8x32xf32> to vector<1x8x32xf32>
    tpu.vector_store %arg18[%c0_110, %c0_111, %c0_112], %279 {strides = array<i32>} : memref<1x8x32xf32, #tpu.memory_space<vmem>>, vector<1x8x32xf32>,
    return
  }
  func.func @transform_0(%arg0: i32, %arg1: i32) -> (i32, i32, i32) {
    %c0_i32 = arith.constant 0 : i32
    %c0_i32_0 = arith.constant 0 : i32
    return %arg0, %arg1, %c0_i32 : i32, i32, i32
  }
  func.func @transform_1(%arg0: i32, %arg1: i32) -> (i32, i32) {
    %c0_i32 = arith.constant 0 : i32
    %c0_i32_0 = arith.constant 0 : i32
    %c0_i32_1 = arith.constant 0 : i32
    return %c0_i32, %c0_i32_0 : i32, i32
  }
  func.func @transform_2(%arg0: i32, %arg1: i32) -> (i32, i32) {
    %c0_i32 = arith.constant 0 : i32
    %c0_i32_0 = arith.constant 0 : i32
    %c0_i32_1 = arith.constant 0 : i32
    return %c0_i32, %c0_i32_0 : i32, i32
  }
  func.func @transform_3(%arg0: i32, %arg1: i32) -> (i32, i32) {
    %c0_i32 = arith.constant 0 : i32
    %c0_i32_0 = arith.constant 0 : i32
    %c0_i32_1 = arith.constant 0 : i32
    return %c0_i32, %c0_i32_0 : i32, i32
  }
  func.func @transform_4(%arg0: i32, %arg1: i32) -> (i32, i32) {
    %c0_i32 = arith.constant 0 : i32
    %c0_i32_0 = arith.constant 0 : i32
    %c0_i32_1 = arith.constant 0 : i32
    return %c0_i32, %c0_i32_0 : i32, i32
  }
  func.func @transform_5(%arg0: i32, %arg1: i32) -> (i32, i32) {
    %c0_i32 = arith.constant 0 : i32
    %c0_i32_0 = arith.constant 0 : i32
    %c0_i32_1 = arith.constant 0 : i32
    return %c0_i32, %c0_i32_0 : i32, i32
  }
  func.func @transform_6(%arg0: i32, %arg1: i32) -> (i32, i32) {
    %c0_i32 = arith.constant 0 : i32
    %c0_i32_0 = arith.constant 0 : i32
    %c0_i32_1 = arith.constant 0 : i32
    return %c0_i32, %c0_i32_0 : i32, i32
  }
  func.func @transform_7(%arg0: i32, %arg1: i32) -> (i32, i32) {
    %c0_i32 = arith.constant 0 : i32
    %c0_i32_0 = arith.constant 0 : i32
    %c0_i32_1 = arith.constant 0 : i32
    return %c0_i32, %c0_i32_0 : i32, i32
  }
  func.func @transform_8(%arg0: i32, %arg1: i32) -> (i32, i32) {
    %c0_i32 = arith.constant 0 : i32
    %c0_i32_0 = arith.constant 0 : i32
    %c0_i32_1 = arith.constant 0 : i32
    return %c0_i32, %c0_i32_0 : i32, i32
  }
  func.func @transform_9(%arg0: i32, %arg1: i32) -> (i32, i32) {
    %c0_i32 = arith.constant 0 : i32
    %c0_i32_0 = arith.constant 0 : i32
    %c0_i32_1 = arith.constant 0 : i32
    return %c0_i32, %c0_i32_0 : i32, i32
  }
  func.func @transform_10(%arg0: i32, %arg1: i32) -> (i32, i32) {
    %c0_i32 = arith.constant 0 : i32
    %c0_i32_0 = arith.constant 0 : i32
    %c0_i32_1 = arith.constant 0 : i32
    return %c0_i32, %c0_i32_0 : i32, i32
  }
  func.func @transform_11(%arg0: i32, %arg1: i32) -> (i32, i32) {
    %c0_i32 = arith.constant 0 : i32
    %c0_i32_0 = arith.constant 0 : i32
    %c0_i32_1 = arith.constant 0 : i32
    return %c0_i32, %c0_i32_0 : i32, i32
  }
  func.func @transform_12(%arg0: i32, %arg1: i32) -> (i32, i32, i32) {
    %c0_i32 = arith.constant 0 : i32
    %c0_i32_0 = arith.constant 0 : i32
    %c0_i32_1 = arith.constant 0 : i32
    %c0_i32_2 = arith.constant 0 : i32
    return %c0_i32, %c0_i32_0, %c0_i32_1 : i32, i32, i32
  }
  func.func @transform_13(%arg0: i32, %arg1: i32) -> (i32, i32, i32) {
    %c0_i32 = arith.constant 0 : i32
    %c0_i32_0 = arith.constant 0 : i32
    %c0_i32_1 = arith.constant 0 : i32
    %c0_i32_2 = arith.constant 0 : i32
    return %c0_i32, %c0_i32_0, %c0_i32_1 : i32, i32, i32
  }
  func.func @transform_14(%arg0: i32, %arg1: i32) -> (i32, i32, i32) {
    %c0_i32 = arith.constant 0 : i32
    %c0_i32_0 = arith.constant 0 : i32
    %c0_i32_1 = arith.constant 0 : i32
    %c0_i32_2 = arith.constant 0 : i32
    return %c0_i32, %c0_i32_0, %c0_i32_1 : i32, i32, i32
  }
  func.func @transform_15(%arg0: i32, %arg1: i32) -> (i32, i32) {
    %c0_i32 = arith.constant 0 : i32
    %c0_i32_0 = arith.constant 0 : i32
    %c0_i32_1 = arith.constant 0 : i32
    return %c0_i32, %c0_i32_0 : i32, i32
  }
  func.func @transform_16(%arg0: i32, %arg1: i32) -> (i32, i32, i32) {
    %c0_i32 = arith.constant 0 : i32
    %c0_i32_0 = arith.constant 0 : i32
    return %arg0, %arg1, %c0_i32 : i32, i32, i32
  }
}

</mosaic_0001>

<llo_original>
// kernel: tpu_custom_call.1
$region0: #{tpu_custom_call.1}
  #allocation0 [shape = 'u32[]', space=smem, size = 0x4, offset = 0x4, fixed_abs, tag = 'smem constant byte address 0x4 - core index']
  #allocation1 [shape = 'u32[72,128]{1,0:T(1,128)}', space=vmem, size = 0x9000, scoped, tag = 'internal scratch']
  #allocation2 [shape = 'bf16[16,32]{1,0:T(8,128)(2,1)}', space=vmem, size = 0x1000, scoped, tag = 'scratch operand']
  #allocation3 [shape = 'bf16[16,32]{1,0:T(8,128)(2,1)}', space=vmem, size = 0x1000, scoped, tag = 'scratch operand']
  %s0 = inlined_call_operand.vmem [shape: f32[2,16,32], index: 0, kind: input, shape index: {}]
  %s1 = inlined_call_operand.hbm [shape: f32[1,32], index: 1, kind: input, shape index: {}]
  %s2 = inlined_call_operand.vmem [shape: f32[1,32], index: 2, kind: input, shape index: {}]
  %s3 = inlined_call_operand.hbm [shape: f32[1,32], index: 3, kind: input, shape index: {}]
  %s4 = inlined_call_operand.hbm [shape: f32[1,32], index: 4, kind: input, shape index: {}]
  %s5 = inlined_call_operand.hbm [shape: f32[1,32], index: 5, kind: input, shape index: {}]
  %s6 = inlined_call_operand.vmem [shape: bf16[32,32], index: 6, kind: input, shape index: {}]
  %s7 = inlined_call_operand.vmem [shape: f32[1,32], index: 7, kind: input, shape index: {}]
  %s8 = inlined_call_operand.vmem [shape: bf16[32,64], index: 8, kind: input, shape index: {}]
  %s9 = inlined_call_operand.vmem [shape: f32[1,64], index: 9, kind: input, shape index: {}]
  %s10 = inlined_call_operand.hbm [shape: bf16[32,32], index: 10, kind: input, shape index: {}]
  %s11 = inlined_call_operand.vmem [shape: f32[1,32], index: 11, kind: input, shape index: {}]
  %s12 = inlined_call_operand.vmem [shape: bf16[2,32,64], index: 12, kind: input, shape index: {}]
  %s13 = inlined_call_operand.vmem [shape: f32[2,1,64], index: 13, kind: input, shape index: {}]
  %s14 = inlined_call_operand.vmem [shape: bf16[2,64,32], index: 14, kind: input, shape index: {}]
  %s15 = inlined_call_operand.vmem [shape: f32[1,32], index: 15, kind: input, shape index: {}]
  %s16 = inlined_call_operand.hbm [shape: f32[2,16,32], index: 16, kind: output, shape index: {}]
  %s17 = sld [smem:[#allocation0]]
  $region145: #{tpu_custom_call.1} parent=0
    _
  %s19 = ssub.s32 1, %s17
  %s20 = scalar_select 0, %s19, %s17
  $region1: #{tpu_custom_call.1} parent=0
    #allocation4 [shape = 'u8[512]{0}', space=vmem, size = 0x400, scoped, tag = 'input window, operand 1, single buffered']
    #allocation5 [shape = 's32[2]{0}', space=sflag, size = 0x8, scoped, tag = 'scoped memory for tpu_custom_call.1']
    #allocation6 [shape = 's32[2]{0}', space=sflag, size = 0x8, scoped, tag = 'scoped memory for tpu_custom_call.1']
    #allocation7 [shape = 'u8[512]{0}', space=vmem, size = 0x400, scoped, tag = 'input window, operand 3, single buffered']
    #allocation8 [shape = 's32[1]{0}', space=sflag, size = 0x4, scoped, tag = 'scoped memory for tpu_custom_call.1']
    #allocation9 [shape = 'u8[512]{0}', space=vmem, size = 0x400, scoped, tag = 'input window, operand 4, single buffered']
    #allocation10 [shape = 'u8[512]{0}', space=vmem, size = 0x400, scoped, tag = 'input window, operand 5, single buffered']
    #allocation11 [shape = 's32[1]{0}', space=sflag, size = 0x4, scoped, tag = 'scoped memory for tpu_custom_call.1']
    #allocation12 [shape = 'u8[8192]{0}', space=vmem, size = 0x2000, scoped, tag = 'input window, operand 10, single buffered']
    #allocation13 [shape = 'u8[8192]{0}', space=vmem, size = 0x2000, scoped, tag = 'output window, operand 0']
    %21 = vsyncpa [#allocation5], 0
    %22 = vsyncpa [#allocation8], 0
    %23 = vsyncpa [#allocation11], 0
    %24 = vsyncpa [#allocation6], 0
    %s25 = scalar_lea.sflag [#allocation6], 1
    %26 = vsyncpa %s25, 0
    loop: start=0, step=1, limit=6
    $region2: #{tpu_custom_call.1} parent=1 // loop_pre_header
      _
    $region3: #{tpu_custom_call.1} parent=1 // loop_header
      %s28 = sphi 0, %s32
      %p29 = scmp.ge.s32.totalorder %s28, 6
      %s35 = sphi 0, %s47
      %s36 = sphi 0, %s43
      %s37 = sphi 0, %s35
      %s38 = sphi 0, %s36
      %s39 = sphi 0, %s37
      %s40 = sphi 0, %s38
      %s52 = sphi 0, %s54
      %s55 = sphi 0, %s52
      %s56 = sphi 0, %s55
      %s72 = sphi 0, %s56
      %s76 = sphi 0, %s76
      %s78 = sphi 0, %s76
      %s79 = sphi 0, %s78
      %s93 = sphi 0, %s79
      %s97 = sphi 0, %s97
      %s99 = sphi 0, %s97
      %s100 = sphi 0, %s99
      %s114 = sphi 0, %s100
      %s118 = sphi 0, %s118
      %s120 = sphi 0, %s118
      %s121 = sphi 0, %s120
      %s135 = sphi 0, %s121
      %s139 = sphi 0, %s139
      %s141 = sphi 0, %s139
      %s142 = sphi 0, %s141
      %s156 = sphi 0, %s142
      %s160 = sphi 0, %s160
      %s162 = sphi 0, %s160
      %s163 = sphi 0, %s162
      %s177 = sphi 0, %s163
      %s181 = sphi 0, %s181
      %s183 = sphi 0, %s181
      %s184 = sphi 0, %s183
      %s198 = sphi 0, %s184
      %s202 = sphi 0, %s202
      %s204 = sphi 0, %s202
      %s205 = sphi 0, %s204
      %s219 = sphi 0, %s205
      %s223 = sphi 0, %s223
      %s225 = sphi 0, %s223
      %s226 = sphi 0, %s225
      %s240 = sphi 0, %s226
      %s244 = sphi 0, %s244
      %s246 = sphi 0, %s244
      %s247 = sphi 0, %s246
      %s261 = sphi 0, %s247
      %s265 = sphi 0, %s265
      %s267 = sphi 0, %s265
      %s268 = sphi 0, %s267
      %s282 = sphi 0, %s268
      %s286 = sphi 0, %s286
      %s288 = sphi 0, %s286
      %s289 = sphi 0, %s288
      %s303 = sphi 0, %s289
      %s307 = sphi 0, %s307
      %s309 = sphi 0, %s307
      %s310 = sphi 0, %s309
      %s324 = sphi 0, %s310
      %s328 = sphi 0, %s328
      %s330 = sphi 0, %s328
      %s331 = sphi 0, %s330
      %s345 = sphi 0, %s331
      %s349 = sphi 0, %s349
      %s351 = sphi 0, %s349
      %s352 = sphi 0, %s351
      %s366 = sphi 0, %s352
      %s370 = sphi 0, %s370
      %s372 = sphi 0, %s370
      %s373 = sphi 0, %s372
      %s387 = sphi 0, %s373
      %s395 = sphi 0, %s397
      %s398 = sphi 0, %s395
      %s399 = sphi 0, %s398
      %s415 = sphi 0, %s399
    $region4: #{tpu_custom_call.1} parent=1 // loop_header_branch
      %31 = sbr.rel (%p29) target = $region8
    $region5: #{tpu_custom_call.1} parent=1 // loop_body
      %s33 = ssub.s32 %s28, 1
      %s34 = ssub.s32 %s28, 2
      %s41 = sadd.s32 1, %s36
      %p42 = scmp.ge.s32.totalorder %s41, 2
      %s43 = scalar_select %p42, 0, %s41
      %s44 = sadd.s32 1, %s35
      %s45 = scalar_select %p42, %s44, %s35
      %p46 = scmp.ge.s32.totalorder %s45, 2
      %s47 = scalar_select %p46, 0, %s45
      %s48 = ssub.s32 %s35, %s47
      %s49 = ssub.s32 %s36, %s43
      %s50 = sor.u32 %s48, %s49
      %p51 = scmp.eq.s32.totalorder %s50, 0
      %s53 = sadd.s32 %s52, 1
      %s54 = scalar_select %p51, %s52, %s53
      %p57 = pneg %p51
      %p58 = scmp.eq.s32.totalorder %s28, 3
      %p59 = por %p57, %p58
      %p60 = scmp.ne.s32.totalorder %s52, %s55
      %p61 = scmp.eq.s32.totalorder %s28, 0
      %p62 = por %p60, %p61
      %p63 = scmp.ne.s32.totalorder %s52, %s55
      %p64 = scmp.eq.s32.totalorder %s33, 3
      %p65 = por %p63, %p64
      %p66 = scmp.ne.s32.totalorder %s55, %s56
      %p67 = scmp.eq.s32.totalorder %s33, 0
      %p68 = por %p66, %p67
      %p69 = scmp.ne.s32.totalorder %s55, %s56
      %p70 = scmp.eq.s32.totalorder %s34, 3
      %p71 = por %p69, %p70
      %p73 = scmp.ne.s32.totalorder %s56, %s72
      %p74 = scmp.eq.s32.totalorder %s34, 0
      %p75 = por %p73, %p74
      %s77 = sadd.s32 %s76, 1
      %p80 = scmp.eq.s32.totalorder %s28, 3
      %p81 = scmp.ne.s32.totalorder %s76, %s78
      %p82 = scmp.eq.s32.totalorder %s28, 0
      %p83 = por %p81, %p82
      %p84 = scmp.ne.s32.totalorder %s76, %s78
      %p85 = scmp.eq.s32.totalorder %s33, 3
      %p86 = por %p84, %p85
      %p87 = scmp.ne.s32.totalorder %s78, %s79
      %p88 = scmp.eq.s32.totalorder %s33, 0
      %p89 = por %p87, %p88
      %p90 = scmp.ne.s32.totalorder %s78, %s79
      %p91 = scmp.eq.s32.totalorder %s34, 3
      %p92 = por %p90, %p91
      %p94 = scmp.ne.s32.totalorder %s79, %s93
      %p95 = scmp.eq.s32.totalorder %s34, 0
      %p96 = por %p94, %p95
      %s98 = sadd.s32 %s97, 1
      %p101 = scmp.eq.s32.totalorder %s28, 3
      %p102 = scmp.ne.s32.totalorder %s97, %s99
      %p103 = scmp.eq.s32.totalorder %s28, 0
      %p104 = por %p102, %p103
      %p105 = scmp.ne.s32.totalorder %s97, %s99
      %p106 = scmp.eq.s32.totalorder %s33, 3
      %p107 = por %p105, %p106
      %p108 = scmp.ne.s32.totalorder %s99, %s100
      %p109 = scmp.eq.s32.totalorder %s33, 0
      %p110 = por %p108, %p109
      %p111 = scmp.ne.s32.totalorder %s99, %s100
      %p112 = scmp.eq.s32.totalorder %s34, 3
      %p113 = por %p111, %p112
      %p115 = scmp.ne.s32.totalorder %s100, %s114
      %p116 = scmp.eq.s32.totalorder %s34, 0
      %p117 = por %p115, %p116
      %s119 = sadd.s32 %s118, 1
      %p122 = scmp.eq.s32.totalorder %s28, 3
      %p123 = scmp.ne.s32.totalorder %s118, %s120
      %p124 = scmp.eq.s32.totalorder %s28, 0
      %p125 = por %p123, %p124
      %p126 = scmp.ne.s32.totalorder %s118, %s120
      %p127 = scmp.eq.s32.totalorder %s33, 3
      %p128 = por %p126, %p127
      %p129 = scmp.ne.s32.totalorder %s120, %s121
      %p130 = scmp.eq.s32.totalorder %s33, 0
      %p131 = por %p129, %p130
      %p132 = scmp.ne.s32.totalorder %s120, %s121
      %p133 = scmp.eq.s32.totalorder %s34, 3
      %p134 = por %p132, %p133
      %p136 = scmp.ne.s32.totalorder %s121, %s135
      %p137 = scmp.eq.s32.totalorder %s34, 0
      %p138 = por %p136, %p137
      %s140 = sadd.s32 %s139, 1
      %p143 = scmp.eq.s32.totalorder %s28, 3
      %p144 = scmp.ne.s32.totalorder %s139, %s141
      %p145 = scmp.eq.s32.totalorder %s28, 0
      %p146 = por %p144, %p145
      %p147 = scmp.ne.s32.totalorder %s139, %s141
      %p148 = scmp.eq.s32.totalorder %s33, 3
      %p149 = por %p147, %p148
      %p150 = scmp.ne.s32.totalorder %s141, %s142
      %p151 = scmp.eq.s32.totalorder %s33, 0
      %p152 = por %p150, %p151
      %p153 = scmp.ne.s32.totalorder %s141, %s142
      %p154 = scmp.eq.s32.totalorder %s34, 3
      %p155 = por %p153, %p154
      %p157 = scmp.ne.s32.totalorder %s142, %s156
      %p158 = scmp.eq.s32.totalorder %s34, 0
      %p159 = por %p157, %p158
      %s161 = sadd.s32 %s160, 1
      %p164 = scmp.eq.s32.totalorder %s28, 3
      %p165 = scmp.ne.s32.totalorder %s160, %s162
      %p166 = scmp.eq.s32.totalorder %s28, 0
      %p167 = por %p165, %p166
      %p168 = scmp.ne.s32.totalorder %s160, %s162
      %p169 = scmp.eq.s32.totalorder %s33, 3
      %p170 = por %p168, %p169
      %p171 = scmp.ne.s32.totalorder %s162, %s163
      %p172 = scmp.eq.s32.totalorder %s33, 0
      %p173 = por %p171, %p172
      %p174 = scmp.ne.s32.totalorder %s162, %s163
      %p175 = scmp.eq.s32.totalorder %s34, 3
      %p176 = por %p174, %p175
      %p178 = scmp.ne.s32.totalorder %s163, %s177
      %p179 = scmp.eq.s32.totalorder %s34, 0
      %p180 = por %p178, %p179
      %s182 = sadd.s32 %s181, 1
      %p185 = scmp.eq.s32.totalorder %s28, 3
      %p186 = scmp.ne.s32.totalorder %s181, %s183
      %p187 = scmp.eq.s32.totalorder %s28, 0
      %p188 = por %p186, %p187
      %p189 = scmp.ne.s32.totalorder %s181, %s183
      %p190 = scmp.eq.s32.totalorder %s33, 3
      %p191 = por %p189, %p190
      %p192 = scmp.ne.s32.totalorder %s183, %s184
      %p193 = scmp.eq.s32.totalorder %s33, 0
      %p194 = por %p192, %p193
      %p195 = scmp.ne.s32.totalorder %s183, %s184
      %p196 = scmp.eq.s32.totalorder %s34, 3
      %p197 = por %p195, %p196
      %p199 = scmp.ne.s32.totalorder %s184, %s198
      %p200 = scmp.eq.s32.totalorder %s34, 0
      %p201 = por %p199, %p200
      %s203 = sadd.s32 %s202, 1
      %p206 = scmp.eq.s32.totalorder %s28, 3
      %p207 = scmp.ne.s32.totalorder %s202, %s204
      %p208 = scmp.eq.s32.totalorder %s28, 0
      %p209 = por %p207, %p208
      %p210 = scmp.ne.s32.totalorder %s202, %s204
      %p211 = scmp.eq.s32.totalorder %s33, 3
      %p212 = por %p210, %p211
      %p213 = scmp.ne.s32.totalorder %s204, %s205
      %p214 = scmp.eq.s32.totalorder %s33, 0
      %p215 = por %p213, %p214
      %p216 = scmp.ne.s32.totalorder %s204, %s205
      %p217 = scmp.eq.s32.totalorder %s34, 3
      %p218 = por %p216, %p217
      %p220 = scmp.ne.s32.totalorder %s205, %s219
      %p221 = scmp.eq.s32.totalorder %s34, 0
      %p222 = por %p220, %p221
      %s224 = sadd.s32 %s223, 1
      %p227 = scmp.eq.s32.totalorder %s28, 3
      %p228 = scmp.ne.s32.totalorder %s223, %s225
      %p229 = scmp.eq.s32.totalorder %s28, 0
      %p230 = por %p228, %p229
      %p231 = scmp.ne.s32.totalorder %s223, %s225
      %p232 = scmp.eq.s32.totalorder %s33, 3
      %p233 = por %p231, %p232
      %p234 = scmp.ne.s32.totalorder %s225, %s226
      %p235 = scmp.eq.s32.totalorder %s33, 0
      %p236 = por %p234, %p235
      %p237 = scmp.ne.s32.totalorder %s225, %s226
      %p238 = scmp.eq.s32.totalorder %s34, 3
      %p239 = por %p237, %p238
      %p241 = scmp.ne.s32.totalorder %s226, %s240
      %p242 = scmp.eq.s32.totalorder %s34, 0
      %p243 = por %p241, %p242
      %s245 = sadd.s32 %s244, 1
      %p248 = scmp.eq.s32.totalorder %s28, 3
      %p249 = scmp.ne.s32.totalorder %s244, %s246
      %p250 = scmp.eq.s32.totalorder %s28, 0
      %p251 = por %p249, %p250
      %p252 = scmp.ne.s32.totalorder %s244, %s246
      %p253 = scmp.eq.s32.totalorder %s33, 3
      %p254 = por %p252, %p253
      %p255 = scmp.ne.s32.totalorder %s246, %s247
      %p256 = scmp.eq.s32.totalorder %s33, 0
      %p257 = por %p255, %p256
      %p258 = scmp.ne.s32.totalorder %s246, %s247
      %p259 = scmp.eq.s32.totalorder %s34, 3
      %p260 = por %p258, %p259
      %p262 = scmp.ne.s32.totalorder %s247, %s261
      %p263 = scmp.eq.s32.totalorder %s34, 0
      %p264 = por %p262, %p263
      %s266 = sadd.s32 %s265, 1
      %p269 = scmp.eq.s32.totalorder %s28, 3
      %p270 = scmp.ne.s32.totalorder %s265, %s267
      %p271 = scmp.eq.s32.totalorder %s28, 0
      %p272 = por %p270, %p271
      %p273 = scmp.ne.s32.totalorder %s265, %s267
      %p274 = scmp.eq.s32.totalorder %s33, 3
      %p275 = por %p273, %p274
      %p276 = scmp.ne.s32.totalorder %s267, %s268
      %p277 = scmp.eq.s32.totalorder %s33, 0
      %p278 = por %p276, %p277
      %p279 = scmp.ne.s32.totalorder %s267, %s268
      %p280 = scmp.eq.s32.totalorder %s34, 3
      %p281 = por %p279, %p280
      %p283 = scmp.ne.s32.totalorder %s268, %s282
      %p284 = scmp.eq.s32.totalorder %s34, 0
      %p285 = por %p283, %p284
      %s287 = sadd.s32 %s286, 1
      %p290 = scmp.eq.s32.totalorder %s28, 3
      %p291 = scmp.ne.s32.totalorder %s286, %s288
      %p292 = scmp.eq.s32.totalorder %s28, 0
      %p293 = por %p291, %p292
      %p294 = scmp.ne.s32.totalorder %s286, %s288
      %p295 = scmp.eq.s32.totalorder %s33, 3
      %p296 = por %p294, %p295
      %p297 = scmp.ne.s32.totalorder %s288, %s289
      %p298 = scmp.eq.s32.totalorder %s33, 0
      %p299 = por %p297, %p298
      %p300 = scmp.ne.s32.totalorder %s288, %s289
      %p301 = scmp.eq.s32.totalorder %s34, 3
      %p302 = por %p300, %p301
      %p304 = scmp.ne.s32.totalorder %s289, %s303
      %p305 = scmp.eq.s32.totalorder %s34, 0
      %p306 = por %p304, %p305
      %s308 = sadd.s32 %s307, 1
      %p311 = scmp.eq.s32.totalorder %s28, 3
      %p312 = scmp.ne.s32.totalorder %s307, %s309
      %p313 = scmp.eq.s32.totalorder %s28, 0
      %p314 = por %p312, %p313
      %p315 = scmp.ne.s32.totalorder %s307, %s309
      %p316 = scmp.eq.s32.totalorder %s33, 3
      %p317 = por %p315, %p316
      %p318 = scmp.ne.s32.totalorder %s309, %s310
      %p319 = scmp.eq.s32.totalorder %s33, 0
      %p320 = por %p318, %p319
      %p321 = scmp.ne.s32.totalorder %s309, %s310
      %p322 = scmp.eq.s32.totalorder %s34, 3
      %p323 = por %p321, %p322
      %p325 = scmp.ne.s32.totalorder %s310, %s324
      %p326 = scmp.eq.s32.totalorder %s34, 0
      %p327 = por %p325, %p326
      %s329 = sadd.s32 %s328, 1
      %p332 = scmp.eq.s32.totalorder %s28, 3
      %p333 = scmp.ne.s32.totalorder %s328, %s330
      %p334 = scmp.eq.s32.totalorder %s28, 0
      %p335 = por %p333, %p334
      %p336 = scmp.ne.s32.totalorder %s328, %s330
      %p337 = scmp.eq.s32.totalorder %s33, 3
      %p338 = por %p336, %p337
      %p339 = scmp.ne.s32.totalorder %s330, %s331
      %p340 = scmp.eq.s32.totalorder %s33, 0
      %p341 = por %p339, %p340
      %p342 = scmp.ne.s32.totalorder %s330, %s331
      %p343 = scmp.eq.s32.totalorder %s34, 3
      %p344 = por %p342, %p343
      %p346 = scmp.ne.s32.totalorder %s331, %s345
      %p347 = scmp.eq.s32.totalorder %s34, 0
      %p348 = por %p346, %p347
      %s350 = sadd.s32 %s349, 1
      %p353 = scmp.eq.s32.totalorder %s28, 3
      %p354 = scmp.ne.s32.totalorder %s349, %s351
      %p355 = scmp.eq.s32.totalorder %s28, 0
      %p356 = por %p354, %p355
      %p357 = scmp.ne.s32.totalorder %s349, %s351
      %p358 = scmp.eq.s32.totalorder %s33, 3
      %p359 = por %p357, %p358
      %p360 = scmp.ne.s32.totalorder %s351, %s352
      %p361 = scmp.eq.s32.totalorder %s33, 0
      %p362 = por %p360, %p361
      %p363 = scmp.ne.s32.totalorder %s351, %s352
      %p364 = scmp.eq.s32.totalorder %s34, 3
      %p365 = por %p363, %p364
      %p367 = scmp.ne.s32.totalorder %s352, %s366
      %p368 = scmp.eq.s32.totalorder %s34, 0
      %p369 = por %p367, %p368
      %s371 = sadd.s32 %s370, 1
      %p374 = scmp.eq.s32.totalorder %s28, 3
      %p375 = scmp.ne.s32.totalorder %s370, %s372
      %p376 = scmp.eq.s32.totalorder %s28, 0
      %p377 = por %p375, %p376
      %p378 = scmp.ne.s32.totalorder %s370, %s372
      %p379 = scmp.eq.s32.totalorder %s33, 3
      %p380 = por %p378, %p379
      %p381 = scmp.ne.s32.totalorder %s372, %s373
      %p382 = scmp.eq.s32.totalorder %s33, 0
      %p383 = por %p381, %p382
      %p384 = scmp.ne.s32.totalorder %s372, %s373
      %p385 = scmp.eq.s32.totalorder %s34, 3
      %p386 = por %p384, %p385
      %p388 = scmp.ne.s32.totalorder %s373, %s387
      %p389 = scmp.eq.s32.totalorder %s34, 0
      %p390 = por %p388, %p389
      %s391 = ssub.s32 %s35, %s47
      %s392 = ssub.s32 %s36, %s43
      %s393 = sor.u32 %s391, %s392
      %p394 = scmp.eq.s32.totalorder %s393, 0
      %s396 = sadd.s32 %s395, 1
      %s397 = scalar_select %p394, %s395, %s396
      %p400 = pneg %p394
      %p401 = scmp.eq.s32.totalorder %s28, 3
      %p402 = por %p400, %p401
      %p403 = scmp.ne.s32.totalorder %s395, %s398
      %p404 = scmp.eq.s32.totalorder %s28, 0
      %p405 = por %p403, %p404
      %p406 = scmp.ne.s32.totalorder %s395, %s398
      %p407 = scmp.eq.s32.totalorder %s33, 3
      %p408 = por %p406, %p407
      %p409 = scmp.ne.s32.totalorder %s398, %s399
      %p410 = scmp.eq.s32.totalorder %s33, 0
      %p411 = por %p409, %p410
      %p412 = scmp.ne.s32.totalorder %s398, %s399
      %p413 = scmp.eq.s32.totalorder %s34, 3
      %p414 = por %p412, %p413
      %p416 = scmp.ne.s32.totalorder %s399, %s415
      %p417 = scmp.eq.s32.totalorder %s34, 0
      %p418 = por %p416, %p417
      %p419 = scmp.le.s32.totalorder 1, %s28
      %p420 = scmp.lt.s32.totalorder %s28, 5
      %p421 = pnand %p419, %p420
      %p422 = pneg %p421
      // Predicated region
      $region9: #{tpu_custom_call.1} parent=5 // pred_check
        _
      $region10: #{tpu_custom_call.1} parent=5 // pred_check_branch
        %424 = sbr.rel (%p421) target = $region12
      $region11: #{tpu_custom_call.1} parent=5 // pred_region
        %s425 = ssub.s32 %s28, 1
        // Predicated region
        $region13: #{tpu_custom_call.1} parent=11 // pred_check
          %p426 = pneg %p89
        $region14: #{tpu_custom_call.1} parent=11 // pred_check_branch
          %428 = sbr.rel (%p426) target = $region16
        $region15: #{tpu_custom_call.1} parent=11 // pred_region
          %430 = vsyncadd [#allocation5], 0
          %s432 = sshll.u32 %s1, 4
          %s433 = int_to_ptr.hbm [resolvable:$true] %s432
          %s434 = sshll.u32 [#allocation4], 4
          %s435 = int_to_ptr.vmem [resolvable:$true] %s434
          %437 = dma.hbm_to_vmem [thread:$0]  %s433, 16, %s435, [#allocation5]
        $region16: #{tpu_custom_call.1} parent=11 // pred_fallthru
          _
        // Predicated region
        $region17: #{tpu_custom_call.1} parent=11 // pred_check
          %p438 = pneg %p110
        $region18: #{tpu_custom_call.1} parent=11 // pred_check_branch
          %440 = sbr.rel (%p438) target = $region20
        $region19: #{tpu_custom_call.1} parent=11 // pred_region
          _
        $region20: #{tpu_custom_call.1} parent=11 // pred_fallthru
          _
        // Predicated region
        $region21: #{tpu_custom_call.1} parent=11 // pred_check
          %p441 = pneg %p131
        $region22: #{tpu_custom_call.1} parent=11 // pred_check_branch
          %443 = sbr.rel (%p441) target = $region24
        $region23: #{tpu_custom_call.1} parent=11 // pred_region
          %445 = vsyncadd [#allocation8], 0
          %s447 = sshll.u32 %s3, 4
          %s448 = int_to_ptr.hbm [resolvable:$true] %s447
          %s449 = sshll.u32 [#allocation7], 4
          %s450 = int_to_ptr.vmem [resolvable:$true] %s449
          %452 = dma.hbm_to_vmem [thread:$0]  %s448, 16, %s450, [#allocation8]
        $region24: #{tpu_custom_call.1} parent=11 // pred_fallthru
          _
        // Predicated region
        $region25: #{tpu_custom_call.1} parent=11 // pred_check
          %p453 = pneg %p152
        $region26: #{tpu_custom_call.1} parent=11 // pred_check_branch
          %455 = sbr.rel (%p453) target = $region28
        $region27: #{tpu_custom_call.1} parent=11 // pred_region
          %457 = vsyncadd [#allocation8], 0
          %s459 = sshll.u32 %s4, 4
          %s460 = int_to_ptr.hbm [resolvable:$true] %s459
          %s461 = sshll.u32 [#allocation9], 4
          %s462 = int_to_ptr.vmem [resolvable:$true] %s461
          %464 = dma.hbm_to_vmem [thread:$0]  %s460, 16, %s462, [#allocation8]
        $region28: #{tpu_custom_call.1} parent=11 // pred_fallthru
          _
        // Predicated region
        $region29: #{tpu_custom_call.1} parent=11 // pred_check
          %p465 = pneg %p173
        $region30: #{tpu_custom_call.1} parent=11 // pred_check_branch
          %467 = sbr.rel (%p465) target = $region32
        $region31: #{tpu_custom_call.1} parent=11 // pred_region
          %469 = vsyncadd [#allocation11], 0
          %s471 = sshll.u32 %s5, 4
          %s472 = int_to_ptr.hbm [resolvable:$true] %s471
          %s473 = sshll.u32 [#allocation10], 4
          %s474 = int_to_ptr.vmem [resolvable:$true] %s473
          %476 = dma.hbm_to_vmem [thread:$0]  %s472, 16, %s474, [#allocation11]
        $region32: #{tpu_custom_call.1} parent=11 // pred_fallthru
          _
        // Predicated region
        $region33: #{tpu_custom_call.1} parent=11 // pred_check
          %p477 = pneg %p194
        $region34: #{tpu_custom_call.1} parent=11 // pred_check_branch
          %479 = sbr.rel (%p477) target = $region36
        $region35: #{tpu_custom_call.1} parent=11 // pred_region
          _
        $region36: #{tpu_custom_call.1} parent=11 // pred_fallthru
          _
        // Predicated region
        $region37: #{tpu_custom_call.1} parent=11 // pred_check
          %p480 = pneg %p215
        $region38: #{tpu_custom_call.1} parent=11 // pred_check_branch
          %482 = sbr.rel (%p480) target = $region40
        $region39: #{tpu_custom_call.1} parent=11 // pred_region
          _
        $region40: #{tpu_custom_call.1} parent=11 // pred_fallthru
          _
        // Predicated region
        $region41: #{tpu_custom_call.1} parent=11 // pred_check
          %p483 = pneg %p236
        $region42: #{tpu_custom_call.1} parent=11 // pred_check_branch
          %485 = sbr.rel (%p483) target = $region44
        $region43: #{tpu_custom_call.1} parent=11 // pred_region
          _
        $region44: #{tpu_custom_call.1} parent=11 // pred_fallthru
          _
        // Predicated region
        $region45: #{tpu_custom_call.1} parent=11 // pred_check
          %p486 = pneg %p257
        $region46: #{tpu_custom_call.1} parent=11 // pred_check_branch
          %488 = sbr.rel (%p486) target = $region48
        $region47: #{tpu_custom_call.1} parent=11 // pred_region
          _
        $region48: #{tpu_custom_call.1} parent=11 // pred_fallthru
          _
        // Predicated region
        $region49: #{tpu_custom_call.1} parent=11 // pred_check
          %p489 = pneg %p278
        $region50: #{tpu_custom_call.1} parent=11 // pred_check_branch
          %491 = sbr.rel (%p489) target = $region52
        $region51: #{tpu_custom_call.1} parent=11 // pred_region
          %493 = vsyncadd [#allocation11], 0
          %s494 = sshll.u32 %s10, 4
          %s495 = int_to_ptr.hbm [resolvable:$true] %s494
          %s496 = sshll.u32 [#allocation12], 4
          %s497 = int_to_ptr.vmem [resolvable:$true] %s496
          %502 = dma.hbm_to_vmem [thread:$0]  %s495, 256, %s497, [#allocation11], 64, 64, 4
        $region52: #{tpu_custom_call.1} parent=11 // pred_fallthru
          _
        // Predicated region
        $region53: #{tpu_custom_call.1} parent=11 // pred_check
          %p503 = pneg %p299
        $region54: #{tpu_custom_call.1} parent=11 // pred_check_branch
          %505 = sbr.rel (%p503) target = $region56
        $region55: #{tpu_custom_call.1} parent=11 // pred_region
          _
        $region56: #{tpu_custom_call.1} parent=11 // pred_fallthru
          _
        // Predicated region
        $region57: #{tpu_custom_call.1} parent=11 // pred_check
          %p506 = pneg %p320
        $region58: #{tpu_custom_call.1} parent=11 // pred_check_branch
          %508 = sbr.rel (%p506) target = $region60
        $region59: #{tpu_custom_call.1} parent=11 // pred_region
          _
        $region60: #{tpu_custom_call.1} parent=11 // pred_fallthru
          _
        // Predicated region
        $region61: #{tpu_custom_call.1} parent=11 // pred_check
          %p509 = pneg %p341
        $region62: #{tpu_custom_call.1} parent=11 // pred_check_branch
          %511 = sbr.rel (%p509) target = $region64
        $region63: #{tpu_custom_call.1} parent=11 // pred_region
          _
        $region64: #{tpu_custom_call.1} parent=11 // pred_fallthru
          _
        // Predicated region
        $region65: #{tpu_custom_call.1} parent=11 // pred_check
          %p512 = pneg %p362
        $region66: #{tpu_custom_call.1} parent=11 // pred_check_branch
          %514 = sbr.rel (%p512) target = $region68
        $region67: #{tpu_custom_call.1} parent=11 // pred_region
          _
        $region68: #{tpu_custom_call.1} parent=11 // pred_fallthru
          _
        // Predicated region
        $region69: #{tpu_custom_call.1} parent=11 // pred_check
          %p515 = pneg %p383
        $region70: #{tpu_custom_call.1} parent=11 // pred_check_branch
          %517 = sbr.rel (%p515) target = $region72
        $region71: #{tpu_custom_call.1} parent=11 // pred_region
          _
        $region72: #{tpu_custom_call.1} parent=11 // pred_fallthru
          _
      $region12: #{tpu_custom_call.1} parent=5 // pred_fallthru
        _
      %p518 = scmp.lt.s32.totalorder %s28, 4
      // Predicated region
      $region73: #{tpu_custom_call.1} parent=5 // pred_check
        %p519 = pneg %p518
      $region74: #{tpu_custom_call.1} parent=5 // pred_check_branch
        %521 = sbr.rel (%p519) target = $region76
      $region75: #{tpu_custom_call.1} parent=5 // pred_region
        // Predicated region
        $region77: #{tpu_custom_call.1} parent=75 // pred_check
          %p522 = pneg %p62
        $region78: #{tpu_custom_call.1} parent=75 // pred_check_branch
          %524 = sbr.rel (%p522) target = $region80
        $region79: #{tpu_custom_call.1} parent=75 // pred_region
          %p525 = scmp.lt.s32.totalorder %s35, 1
          %s526 = scalar_select %p525, %s35, 1
          %p527 = scmp.lt.s32.totalorder %s36, 1
          %s528 = scalar_select %p527, %s36, 1
          %s529 = smul.addr %s526, 2
          %s530 = sadd.s32 %s528, %s529
          %s531 = smul.addr %s530, 8
          %s532 = scalar_lea.vmem %s0, %s531
        $region80: #{tpu_custom_call.1} parent=75 // pred_fallthru
          _
      $region76: #{tpu_custom_call.1} parent=5 // pred_fallthru
        _
      %p533 = scmp.le.s32.totalorder 1, %s28
      %p534 = scmp.lt.s32.totalorder %s28, 5
      %p535 = pnand %p533, %p534
      %p536 = pneg %p535
      // Predicated region
      $region81: #{tpu_custom_call.1} parent=5 // pred_check
        _
      $region82: #{tpu_custom_call.1} parent=5 // pred_check_branch
        %538 = sbr.rel (%p535) target = $region84
      $region83: #{tpu_custom_call.1} parent=5 // pred_region
        %s539 = ssub.s32 %s28, 1
        // Predicated region
        $region85: #{tpu_custom_call.1} parent=83 // pred_check
          %p540 = pneg %p89
        $region86: #{tpu_custom_call.1} parent=83 // pred_check_branch
          %542 = sbr.rel (%p540) target = $region88
        $region87: #{tpu_custom_call.1} parent=83 // pred_region
          %544 = dma.done [#allocation5], 16
        $region88: #{tpu_custom_call.1} parent=83 // pred_fallthru
          _
        // Predicated region
        $region89: #{tpu_custom_call.1} parent=83 // pred_check
          %p545 = pneg %p131
        $region90: #{tpu_custom_call.1} parent=83 // pred_check_branch
          %547 = sbr.rel (%p545) target = $region92
        $region91: #{tpu_custom_call.1} parent=83 // pred_region
          %549 = dma.done [#allocation8], 16
        $region92: #{tpu_custom_call.1} parent=83 // pred_fallthru
          _
        // Predicated region
        $region93: #{tpu_custom_call.1} parent=83 // pred_check
          %p550 = pneg %p152
        $region94: #{tpu_custom_call.1} parent=83 // pred_check_branch
          %552 = sbr.rel (%p550) target = $region96
        $region95: #{tpu_custom_call.1} parent=83 // pred_region
          %554 = dma.done [#allocation8], 16
        $region96: #{tpu_custom_call.1} parent=83 // pred_fallthru
          _
        // Predicated region
        $region97: #{tpu_custom_call.1} parent=83 // pred_check
          %p555 = pneg %p173
        $region98: #{tpu_custom_call.1} parent=83 // pred_check_branch
          %557 = sbr.rel (%p555) target = $region100
        $region99: #{tpu_custom_call.1} parent=83 // pred_region
          %559 = dma.done [#allocation11], 16
        $region100: #{tpu_custom_call.1} parent=83 // pred_fallthru
          _
        // Predicated region
        $region101: #{tpu_custom_call.1} parent=83 // pred_check
          %p560 = pneg %p278
        $region102: #{tpu_custom_call.1} parent=83 // pred_check_branch
          %562 = sbr.rel (%p560) target = $region104
        $region103: #{tpu_custom_call.1} parent=83 // pred_region
          %564 = dma.done [#allocation11], 256
        $region104: #{tpu_custom_call.1} parent=83 // pred_fallthru
          _
        %p565 = scmp.lt.s32.totalorder %s37, 1
        %s566 = scalar_select %p565, %s37, 1
        %p567 = scmp.lt.s32.totalorder %s38, 1
        %s568 = scalar_select %p567, %s38, 1
        %s569 = smul.addr %s566, 2
        %s570 = sadd.s32 %s568, %s569
        %s571 = smul.addr %s570, 8
        %s572 = scalar_lea.vmem %s0, %s571
        %p573 = pneg %p68
        %p574 = pneg %p65
        %p575 = pneg %p89
        %p576 = pneg %p86
        %p577 = pneg %p110
        %p578 = pneg %p107
        %p579 = pneg %p131
        %p580 = pneg %p128
        %p581 = pneg %p152
        %p582 = pneg %p149
        %p583 = pneg %p173
        %p584 = pneg %p170
        %p585 = pneg %p194
        %p586 = pneg %p191
        %p587 = pneg %p215
        %p588 = pneg %p212
        %p589 = pneg %p236
        %p590 = pneg %p233
        %p591 = pneg %p257
        %p592 = pneg %p254
        %p593 = pneg %p278
        %p594 = pneg %p275
        %p595 = pneg %p299
        %p596 = pneg %p296
        %p597 = pneg %p320
        %p598 = pneg %p317
        %p599 = pneg %p341
        %p600 = pneg %p338
        %p601 = pneg %p362
        %p602 = pneg %p359
        %p603 = pneg %p383
        %p604 = pneg %p380
        %p605 = pneg %p411
        %p606 = pneg %p408
        %s607 = sand.u32 %s398, 1
        %s608 = scalar_lea.sflag [#allocation6], %s607
        %s609 = sand.u32 %s398, 1
        %s610 = smul.addr %s609, 8
        %s611 = scalar_lea.vmem [#allocation13], %s610
        %p612 = scmp.lt.s32.totalorder %s37, 1
        %s613 = scalar_select %p612, %s37, 1
        %p614 = scmp.lt.s32.totalorder %s38, 1
        %s615 = scalar_select %p614, %s38, 1
        %s616 = smul.addr %s613, 2
        %s617 = sadd.s32 %s615, %s616
        %s618 = smul.addr %s617, 8
        %s619 = scalar_lea.vmem %s0, %s618
        %v621 = vld [vmem:[#allocation4] sm:$0x1]
        %vm622 = vcmask 253952
        %v623 = vsel %vm622, %v621, 0.0
        %624 = vadd.xlane.f32.xlu0 %v623
        %v625 = vpop.xlane.xlu0 %624
        %v626 = vrcp.pop %v625
        %v627 = vmul.f32 %v625, %v626
        %v628 = vsub.f32 1.0, %v627
        %v629 = vmul.f32 %v626, %v628
        %v630 = vadd.f32 %v626, %v629
        %vm631 = vweird.f32 %v625
        %vm632 = vweird.f32 %v626
        %vm633 = vmor %vm631, %vm632
        %v634 = vsel %vm633, %v626, %v630
        %v635 = vand.u32 2147483647, %v625
        %vm636 = vcmp.eq.f32.partialorder %v635, 8.507059e+37
        %v637 = vand.u32 %v625, 2147483648
        %v638 = vor.u32 1.1754944e-38, %v637
        %v639 = vsel %vm636, %v638, %v634
        %v640 = vmul.f32 1.0, %v639
        %v641 = vsub.f32 %v625, 1.0
        %v642 = vmax.f32 %v641, 1.0
        %v643 = vrcp.pop %v642
        %v644 = vmul.f32 %v642, %v643
        %v645 = vsub.f32 1.0, %v644
        %v646 = vmul.f32 %v643, %v645
        %v647 = vadd.f32 %v643, %v646
        %vm648 = vweird.f32 %v642
        %vm649 = vweird.f32 %v643
        %vm650 = vmor %vm648, %vm649
        %v651 = vsel %vm650, %v643, %v647
        %v652 = vand.u32 2147483647, %v642
        %vm653 = vcmp.eq.f32.partialorder %v652, 8.507059e+37
        %v654 = vand.u32 %v642, 2147483648
        %v655 = vor.u32 1.1754944e-38, %v654
        %v656 = vsel %vm653, %v655, %v651
        %v657 = vmul.f32 1.0, %v656
        %v658 = vld [vmem:[%s619] sm:$0xff]
        %v659 = vld [vmem:[%s2] sm:$0x1]
        %v660 = vld [vmem:[#allocation7] sm:$0x1]
        %v662 = vperm.slane %v621, 0
        %v664 = vmul.f32 %v658, %v662
        %vm665 = vcmask 261120
        %v666 = vsel %vm665, %v664, 0.0
        %667 = vadd.xlane.f32.xlu0 %v666
        %v668 = vpop.xlane.xlu0 %667
        %v669 = vperm.slane %v640, 0
        %v670 = vmul.f32 %v668, %v669
        %v671 = vsub.f32 %v658, %v670
        %v672 = vmul.f32 %v671, %v662
        %v673 = vmul.f32 %v672, %v672
        %v674 = vsel %vm665, %v673, 0.0
        %675 = vadd.xlane.f32.xlu0 %v674
        %v676 = vpop.xlane.xlu0 %675
        %v677 = vperm.slane %v657, 0
        %v678 = vmul.f32 %v676, %v677
        %v679 = vrsqrt.pop %v678
        %v680 = vmul.f32 %v679, %v678
        %v681 = vmul.f32 %v680, %v679
        %v682 = vmul.f32 0.5, %v681
        %v683 = vsub.f32 1.5, %v682
        %v684 = vmul.f32 %v679, %v683
        %v685 = vmul.f32 %v678, %v684
        %vm686 = vcmp.eq.f32.partialorder %v678, inf
        %v687 = vsel %vm686, %v678, %v685
        %vm688 = vcmp.eq.f32.partialorder %v678, 0.0
        %v689 = vand.u32 %v678, 2147483648
        %v690 = vsel %vm688, %v689, %v687
        %v691 = vadd.f32 %v690, 1e-05
        %v692 = vrcp.pop %v691
        %v693 = vmul.f32 %v671, %v692
        %v695 = vperm.slane %v659, 0
        %v697 = vmul.f32 %v693, %v695
        %v699 = vperm.slane %v660, 0
        %v701 = vadd.f32 %v697, %v699
        %v702 = vmul.f32 %v701, %v662
        %v703 = vpack.c.bf16 %v702, %v702
        %s704 = smul.u32 %s38, 8
        %v705 = vld [vmem:[%s8] sm:$0xf]
        %v706 = vld [vmem:[%s8 + $0x4] sm:$0xf]
        %v707 = vld [vmem:[%s8 + $0x8] sm:$0xf]
        %v708 = vld [vmem:[%s8 + $0xc] sm:$0xf]
        %v709 = vld [vmem:[%s9] sm:$0x1]
        %v711 = vperm.slane %v709, 0
        %v717 = vunpack.c.l.b16 %v705
        %v718 = vunpack.c.l.b16 %v706
        %v719 = vunpack.c.l.b16 %v707
        %v720 = vunpack.c.l.b16 %v708
        %v721 = vpack.c.b16 %v718, %v717
        %v722 = vpack.c.b16 %v720, %v719
        %v726 = vsel %vm665, %v703, 0
        %728 = vmatpush.bf16.msra.mxu0 0
        %729 = vmatpush.bf16.msra.mxu0 0
        %730 = vmatpush.bf16.msra.mxu0 0
        %731 = vmatpush.bf16.msra.mxu0 0
        %732 = vmatpush.bf16.msra.mxu0 0
        %733 = vmatpush.bf16.msra.mxu0 0
        %734 = vmatpush.bf16.msra.mxu0 %v722
        %735 = vmatpush.bf16.msra.mxu0 %v721
        %736 = vmatmul.bf16.gmra.mxu0 %v726
        %v737 = vpop.f32.mrf.mxu0
        %v738 = vadd.f32 %v711, %v737
        %v739 = vpop.f32.mrf.mxu0
        %740 = vdwg.mxu0
        %v741 = vpack.c.bf16 %v738, %v738
        %s742 = sshra.s32 %s704, 3
        %s743 = sand.u32 %s704, 7
        %s744 = smul.addr %s742, 4
        %s745 = scalar_lea.vmem [#allocation2], %s744
        %vm746 = vcmask 257024
        %747 = vst.msk [vmem:[%s745] sm:$0xf] %vm746, %v741
        %749 = vrot.lane.b32.xlu0 %v741, 96
        %v750 = vpop.permute.xlu0 %749
        %s752 = smul.addr %s742, 4
        %s753 = scalar_lea.vmem [#allocation3], %s752
        %754 = vst.msk [vmem:[%s753] sm:$0xf] %vm746, %v750
        %v755 = vld [vmem:[%s6] sm:$0xf]
        %v756 = vld [vmem:[%s6 + $0x4] sm:$0xf]
        %v757 = vld [vmem:[%s6 + $0x8] sm:$0xf]
        %v758 = vld [vmem:[%s6 + $0xc] sm:$0xf]
        %v759 = vld [vmem:[%s7] sm:$0x1]
        %v761 = vperm.slane %v759, 0
        %v767 = vunpack.c.l.b16 %v755
        %v768 = vunpack.c.l.b16 %v756
        %v769 = vunpack.c.l.b16 %v757
        %v770 = vunpack.c.l.b16 %v758
        %v771 = vpack.c.b16 %v768, %v767
        %v772 = vpack.c.b16 %v770, %v769
        %775 = vmatpush.bf16.msra.mxu0 0
        %776 = vmatpush.bf16.msra.mxu0 0
        %777 = vmatpush.bf16.msra.mxu0 0
        %778 = vmatpush.bf16.msra.mxu0 0
        %779 = vmatpush.bf16.msra.mxu0 0
        %780 = vmatpush.bf16.msra.mxu0 0
        %781 = vmatpush.bf16.msra.mxu0 %v772
        %782 = vmatpush.bf16.msra.mxu0 %v771
        %783 = vmatmul.bf16.gmra.mxu0 %v726
        %v784 = vpop.f32.mrf.mxu0
        %v785 = vadd.f32 %v761, %v784
        %v786 = vpop.f32.mrf.mxu0
        %787 = vdwg.mxu0
        %v788 = vmul.f32 %v785, 0.35355338
        %v789 = vpack.c.bf16 %v788, %v788
        %v790 = vlaneseq
        %v791 = vshrl.u32 %v790, 7
        %v792 = vlaneseq
        %v793 = vand.u32 %v792, 127
        %vm794 = vcmp.le.s32.totalorder %v793, %v791
        %v795 = vld [vmem:[%s745] sm:$0xf]
        %v796 = vld [vmem:[%s753] sm:$0xf]
        %vm797 = vcmask 64512
        %v799 = vsel %vm797, %v789, 0
        %v802 = vsel %vm797, %v795, 0
        %804 = vmatpush.bf16.xpose.msra.mxu0 0
        %805 = vmatpush.bf16.xpose.msra.mxu0 0
        %806 = vmatpush.bf16.xpose.msra.mxu0 0
        %807 = vmatpush.bf16.xpose.msra.mxu0 0
        %808 = vmatpush.bf16.xpose.msra.mxu0 0
        %809 = vmatpush.bf16.xpose.msra.mxu0 0
        %810 = vmatpush.bf16.xpose.msra.mxu0 0
        %811 = vmatpush.bf16.xpose.msra.mxu0 %v802
        %812 = vmatmul.bf16.gmra.mxu0 %v799
        %v813 = vpop.f32.mrf.mxu0
        %v814 = vadd.f32 0.0, %v813
        %v815 = vpop.f32.mrf.mxu0
        %816 = vdwg.mxu0
        %v817 = vsel %vm794, %v814, -1e+30
        %v818 = vsel %vm797, %v817, -inf
        %819 = vmax.xlane.f32.xlu0 %v818
        %v820 = vpop.xlane.xlu0 %819
        %v821 = vsub.f32 %v817, %v820
        %v822 = vmul.f32 %v821, 1.442695
        %v823 = vpow.pop %v822
        %v824 = vsel %vm797, %v823, 0.0
        %825 = vadd.xlane.f32.xlu0 %v824
        %v826 = vpop.xlane.xlu0 %825
        %v827 = vpack.c.bf16 %v823, %v823
        %v829 = vsel %vm797, %v827, 0
        %vm831 = vcmask 1043456
        %v833 = vsel %vm831, %v796, 0
        %835 = vmatpush.bf16.msra.mxu0 0
        %836 = vmatpush.bf16.msra.mxu0 0
        %837 = vmatpush.bf16.msra.mxu0 0
        %838 = vmatpush.bf16.msra.mxu0 0
        %839 = vmatpush.bf16.msra.mxu0 0
        %840 = vmatpush.bf16.msra.mxu0 0
        %841 = vmatpush.bf16.msra.mxu0 0
        %842 = vmatpush.bf16.msra.mxu0 %v833
        %843 = vmatmul.bf16.gmra.mxu0 %v829
        %v844 = vpop.f32.mrf.mxu0
        %v845 = vadd.f32 0.0, %v844
        %v846 = vpop.f32.mrf.mxu0
        %847 = vdwg.mxu0
        // While loop
        $region105: #{tpu_custom_call.1} parent=83 // loop_pre_header
          _
        $region106: #{tpu_custom_call.1} parent=83 // loop_header
          %s849 = sphi 0, %s851
          %p850 = scmp.ge.s32.totalorder %s849, %s38
          %v854 = vphi %v820, %v885
          %v855 = vphi %v826, %v896
          %v856 = vphi %v845, %v918
        $region107: #{tpu_custom_call.1} parent=83 // loop_header_branch
          %853 = sbr.rel (%p850) target = $region111
        $region108: #{tpu_custom_call.1} parent=83 // loop_body
          %s857 = smul.u32 %s849, 8
          %s858 = sshra.s32 %s857, 3
          %s859 = sand.u32 %s857, 7
          %s860 = smul.addr %s858, 4
          %s861 = scalar_lea.vmem [#allocation2], %s860
          %v862 = vld [vmem:[%s861] sm:$0xf]
          %s863 = smul.addr %s858, 4
          %s864 = scalar_lea.vmem [#allocation3], %s863
          %v865 = vld [vmem:[%s864] sm:$0xf]
          %v867 = vsel %vm797, %v862, 0
          %869 = vmatpush.bf16.xpose.msra.mxu0 0
          %870 = vmatpush.bf16.xpose.msra.mxu0 0
          %871 = vmatpush.bf16.xpose.msra.mxu0 0
          %872 = vmatpush.bf16.xpose.msra.mxu0 0
          %873 = vmatpush.bf16.xpose.msra.mxu0 0
          %874 = vmatpush.bf16.xpose.msra.mxu0 0
          %875 = vmatpush.bf16.xpose.msra.mxu0 0
          %876 = vmatpush.bf16.xpose.msra.mxu0 %v867
          %877 = vmatmul.bf16.gmra.mxu0 %v799
          %v878 = vpop.f32.mrf.mxu0
          %v879 = vadd.f32 0.0, %v878
          %v880 = vpop.f32.mrf.mxu0
          %881 = vdwg.mxu0
          %v882 = vsel %vm797, %v879, -inf
          %883 = vmax.xlane.f32.xlu0 %v882
          %v884 = vpop.xlane.xlu0 %883
          %v885 = vmax.f32 %v854, %v884
          %v886 = vsub.f32 %v854, %v885
          %v887 = vmul.f32 %v886, 1.442695
          %v888 = vpow.pop %v887
          %v889 = vsub.f32 %v879, %v885
          %v890 = vmul.f32 %v889, 1.442695
          %v891 = vpow.pop %v890
          %v892 = vmul.f32 %v888, %v855
          %v893 = vsel %vm797, %v891, 0.0
          %894 = vadd.xlane.f32.xlu0 %v893
          %v895 = vpop.xlane.xlu0 %894
          %v896 = vadd.f32 %v892, %v895
          %v897 = vmul.f32 %v888, %v856
          %v898 = vpack.c.bf16 %v891, %v891
          %v900 = vsel %vm797, %v898, 0
          %v903 = vsel %vm831, %v865, 0
          %905 = vmatpush.bf16.msra.mxu0 0
          %906 = vmatpush.bf16.msra.mxu0 0
          %907 = vmatpush.bf16.msra.mxu0 0
          %908 = vmatpush.bf16.msra.mxu0 0
          %909 = vmatpush.bf16.msra.mxu0 0
          %910 = vmatpush.bf16.msra.mxu0 0
          %911 = vmatpush.bf16.msra.mxu0 0
          %912 = vmatpush.bf16.msra.mxu0 %v903
          %913 = vmatmul.bf16.gmra.mxu0 %v900
          %v914 = vpop.f32.mrf.mxu0
          %v915 = vadd.f32 0.0, %v914
          %v916 = vpop.f32.mrf.mxu0
          %917 = vdwg.mxu0
          %v918 = vadd.f32 %v897, %v915
        $region109: #{tpu_custom_call.1} parent=83 // loop_footer
          %s851 = sadd.s32 %s849, 1
        $region110: #{tpu_custom_call.1} parent=83 // loop_footer_branch
          %848 = sbr.rel target = $region106
        $region111: #{tpu_custom_call.1} parent=83 // loop_exit
          _
        %v919 = vrcp.pop %v855
        %v920 = vmul.f32 %v856, %v919
        %v921 = vpack.c.bf16 %v920, %v920
        %v922 = vld [vmem:[#allocation12] sm:$0xf]
        %v924 = vunpack.c.l.b16 %v789
        %v925 = vpack.c.b16 %v924, %v924
        %926 = vrot.lane.b32.xlu0 %v925, 120
        %v927 = vpop.permute.xlu0 %926
        %v929 = vunpack.c.l.b16 %v795
        %v930 = vpack.c.b16 %v929, %v929
        %931 = vrot.lane.b32.xlu0 %v930, 120
        %v932 = vpop.permute.xlu0 %931
        %v934 = vsel %vm797, %v927, 0
        %v937 = vsel %vm797, %v932, 0
        %939 = vmatpush.bf16.xpose.msra.mxu0 0
        %940 = vmatpush.bf16.xpose.msra.mxu0 0
        %941 = vmatpush.bf16.xpose.msra.mxu0 0
        %942 = vmatpush.bf16.xpose.msra.mxu0 0
        %943 = vmatpush.bf16.xpose.msra.mxu0 0
        %944 = vmatpush.bf16.xpose.msra.mxu0 0
        %945 = vmatpush.bf16.xpose.msra.mxu0 0
        %946 = vmatpush.bf16.xpose.msra.mxu0 %v937
        %947 = vmatmul.bf16.gmra.mxu0 %v934
        %v948 = vpop.f32.mrf.mxu0
        %v949 = vadd.f32 0.0, %v948
        %v950 = vpop.f32.mrf.mxu0
        %951 = vdwg.mxu0
        %v952 = vsel %vm794, %v949, -1e+30
        %v953 = vsel %vm797, %v952, -inf
        %954 = vmax.xlane.f32.xlu0 %v953
        %v955 = vpop.xlane.xlu0 %954
        %v956 = vsub.f32 %v952, %v955
        %v957 = vmul.f32 %v956, 1.442695
        %v958 = vpow.pop %v957
        %v959 = vsel %vm797, %v958, 0.0
        %960 = vadd.xlane.f32.xlu0 %v959
        %v961 = vpop.xlane.xlu0 %960
        %v962 = vpack.c.bf16 %v958, %v958
        %v964 = vunpack.c.l.b16 %v796
        %v965 = vpack.c.b16 %v964, %v964
        %966 = vrot.lane.b32.xlu0 %v965, 120
        %v967 = vpop.permute.xlu0 %966
        %v969 = vsel %vm797, %v962, 0
        %v972 = vsel %vm831, %v967, 0
        %974 = vmatpush.bf16.msra.mxu0 0
        %975 = vmatpush.bf16.msra.mxu0 0
        %976 = vmatpush.bf16.msra.mxu0 0
        %977 = vmatpush.bf16.msra.mxu0 0
        %978 = vmatpush.bf16.msra.mxu0 0
        %979 = vmatpush.bf16.msra.mxu0 0
        %980 = vmatpush.bf16.msra.mxu0 0
        %981 = vmatpush.bf16.msra.mxu0 %v972
        %982 = vmatmul.bf16.gmra.mxu0 %v969
        %v983 = vpop.f32.mrf.mxu0
        %v984 = vadd.f32 0.0, %v983
        %v985 = vpop.f32.mrf.mxu0
        %986 = vdwg.mxu0
        // While loop
        $region112: #{tpu_custom_call.1} parent=83 // loop_pre_header
          _
        $region113: #{tpu_custom_call.1} parent=83 // loop_header
          %s988 = sphi 0, %s990
          %p989 = scmp.ge.s32.totalorder %s988, %s38
          %v993 = vphi %v955, %v1029
          %v994 = vphi %v961, %v1040
          %v995 = vphi %v984, %v1067
        $region114: #{tpu_custom_call.1} parent=83 // loop_header_branch
          %992 = sbr.rel (%p989) target = $region118
        $region115: #{tpu_custom_call.1} parent=83 // loop_body
          %s996 = smul.u32 %s988, 8
          %s997 = sshra.s32 %s996, 3
          %s998 = sand.u32 %s996, 7
          %s999 = smul.addr %s997, 4
          %s1000 = scalar_lea.vmem [#allocation2], %s999
          %v1001 = vld [vmem:[%s1000] sm:$0xf]
          %s1002 = smul.addr %s997, 4
          %s1003 = scalar_lea.vmem [#allocation3], %s1002
          %v1004 = vld [vmem:[%s1003] sm:$0xf]
          %v1006 = vunpack.c.l.b16 %v1001
          %v1007 = vpack.c.b16 %v1006, %v1006
          %1008 = vrot.lane.b32.xlu0 %v1007, 120
          %v1009 = vpop.permute.xlu0 %1008
          %v1011 = vsel %vm797, %v1009, 0
          %1013 = vmatpush.bf16.xpose.msra.mxu0 0
          %1014 = vmatpush.bf16.xpose.msra.mxu0 0
          %1015 = vmatpush.bf16.xpose.msra.mxu0 0
          %1016 = vmatpush.bf16.xpose.msra.mxu0 0
          %1017 = vmatpush.bf16.xpose.msra.mxu0 0
          %1018 = vmatpush.bf16.xpose.msra.mxu0 0
          %1019 = vmatpush.bf16.xpose.msra.mxu0 0
          %1020 = vmatpush.bf16.xpose.msra.mxu0 %v1011
          %1021 = vmatmul.bf16.gmra.mxu0 %v934
          %v1022 = vpop.f32.mrf.mxu0
          %v1023 = vadd.f32 0.0, %v1022
          %v1024 = vpop.f32.mrf.mxu0
          %1025 = vdwg.mxu0
          %v1026 = vsel %vm797, %v1023, -inf
          %1027 = vmax.xlane.f32.xlu0 %v1026
          %v1028 = vpop.xlane.xlu0 %1027
          %v1029 = vmax.f32 %v993, %v1028
          %v1030 = vsub.f32 %v993, %v1029
          %v1031 = vmul.f32 %v1030, 1.442695
          %v1032 = vpow.pop %v1031
          %v1033 = vsub.f32 %v1023, %v1029
          %v1034 = vmul.f32 %v1033, 1.442695
          %v1035 = vpow.pop %v1034
          %v1036 = vmul.f32 %v1032, %v994
          %v1037 = vsel %vm797, %v1035, 0.0
          %1038 = vadd.xlane.f32.xlu0 %v1037
          %v1039 = vpop.xlane.xlu0 %1038
          %v1040 = vadd.f32 %v1036, %v1039
          %v1041 = vmul.f32 %v1032, %v995
          %v1042 = vpack.c.bf16 %v1035, %v1035
          %v1044 = vunpack.c.l.b16 %v1004
          %v1045 = vpack.c.b16 %v1044, %v1044
          %1046 = vrot.lane.b32.xlu0 %v1045, 120
          %v1047 = vpop.permute.xlu0 %1046
          %v1049 = vsel %vm797, %v1042, 0
          %v1052 = vsel %vm831, %v1047, 0
          %1054 = vmatpush.bf16.msra.mxu0 0
          %1055 = vmatpush.bf16.msra.mxu0 0
          %1056 = vmatpush.bf16.msra.mxu0 0
          %1057 = vmatpush.bf16.msra.mxu0 0
          %1058 = vmatpush.bf16.msra.mxu0 0
          %1059 = vmatpush.bf16.msra.mxu0 0
          %1060 = vmatpush.bf16.msra.mxu0 0
          %1061 = vmatpush.bf16.msra.mxu0 %v1052
          %1062 = vmatmul.bf16.gmra.mxu0 %v1049
          %v1063 = vpop.f32.mrf.mxu0
          %v1064 = vadd.f32 0.0, %v1063
          %v1065 = vpop.f32.mrf.mxu0
          %1066 = vdwg.mxu0
          %v1067 = vadd.f32 %v1041, %v1064
        $region116: #{tpu_custom_call.1} parent=83 // loop_footer
          %s990 = sadd.s32 %s988, 1
        $region117: #{tpu_custom_call.1} parent=83 // loop_footer_branch
          %987 = sbr.rel target = $region113
        $region118: #{tpu_custom_call.1} parent=83 // loop_exit
          _
        %v1068 = vrcp.pop %v994
        %v1069 = vmul.f32 %v995, %v1068
        %v1070 = vpack.c.bf16 %v1069, %v1069
        %v1071 = vld [vmem:[#allocation12 + $0x4] sm:$0xf]
        %v1073 = vsel %vm797, %v1070, 0
        %v1076 = vsel %vm831, %v1071, 0
        %1078 = vmatpush.bf16.msra.mxu0 0
        %1079 = vmatpush.bf16.msra.mxu0 0
        %1080 = vmatpush.bf16.msra.mxu0 0
        %1081 = vmatpush.bf16.msra.mxu0 0
        %1082 = vmatpush.bf16.msra.mxu0 0
        %1083 = vmatpush.bf16.msra.mxu0 0
        %1084 = vmatpush.bf16.msra.mxu0 0
        %1085 = vmatpush.bf16.msra.mxu0 %v1076
        %1086 = vmatmul.bf16.gmra.mxu0 %v1073
        %v1087 = vpop.f32.mrf.mxu0
        %v1088 = vadd.f32 0.0, %v1087
        %v1089 = vpop.f32.mrf.mxu0
        %1090 = vdwg.mxu0
        %v1092 = vsel %vm797, %v921, 0
        %v1095 = vsel %vm831, %v922, 0
        %1097 = vmatpush.bf16.msra.mxu0 0
        %1098 = vmatpush.bf16.msra.mxu0 0
        %1099 = vmatpush.bf16.msra.mxu0 0
        %1100 = vmatpush.bf16.msra.mxu0 0
        %1101 = vmatpush.bf16.msra.mxu0 0
        %1102 = vmatpush.bf16.msra.mxu0 0
        %1103 = vmatpush.bf16.msra.mxu0 0
        %1104 = vmatpush.bf16.msra.mxu0 %v1095
        %1105 = vmatmul.bf16.gmra.mxu0 %v1092
        %v1106 = vpop.f32.mrf.mxu0
        %v1107 = vadd.f32 %v1088, %v1106
        %v1108 = vpop.f32.mrf.mxu0
        %1109 = vdwg.mxu0
        %1110 = vrot.lane.b32.xlu0 %v925, 112
        %v1111 = vpop.permute.xlu0 %1110
        %1112 = vrot.lane.b32.xlu0 %v930, 112
        %v1113 = vpop.permute.xlu0 %1112
        %v1115 = vsel %vm797, %v1111, 0
        %v1118 = vsel %vm797, %v1113, 0
        %1120 = vmatpush.bf16.xpose.msra.mxu0 0
        %1121 = vmatpush.bf16.xpose.msra.mxu0 0
        %1122 = vmatpush.bf16.xpose.msra.mxu0 0
        %1123 = vmatpush.bf16.xpose.msra.mxu0 0
        %1124 = vmatpush.bf16.xpose.msra.mxu0 0
        %1125 = vmatpush.bf16.xpose.msra.mxu0 0
        %1126 = vmatpush.bf16.xpose.msra.mxu0 0
        %1127 = vmatpush.bf16.xpose.msra.mxu0 %v1118
        %1128 = vmatmul.bf16.gmra.mxu0 %v1115
        %v1129 = vpop.f32.mrf.mxu0
        %v1130 = vadd.f32 0.0, %v1129
        %v1131 = vpop.f32.mrf.mxu0
        %1132 = vdwg.mxu0
        %v1133 = vsel %vm794, %v1130, -1e+30
        %v1134 = vsel %vm797, %v1133, -inf
        %1135 = vmax.xlane.f32.xlu0 %v1134
        %v1136 = vpop.xlane.xlu0 %1135
        %v1137 = vsub.f32 %v1133, %v1136
        %v1138 = vmul.f32 %v1137, 1.442695
        %v1139 = vpow.pop %v1138
        %v1140 = vsel %vm797, %v1139, 0.0
        %1141 = vadd.xlane.f32.xlu0 %v1140
        %v1142 = vpop.xlane.xlu0 %1141
        %v1143 = vpack.c.bf16 %v1139, %v1139
        %1144 = vrot.lane.b32.xlu0 %v965, 112
        %v1145 = vpop.permute.xlu0 %1144
        %v1147 = vsel %vm797, %v1143, 0
        %v1150 = vsel %vm831, %v1145, 0
        %1152 = vmatpush.bf16.msra.mxu0 0
        %1153 = vmatpush.bf16.msra.mxu0 0
        %1154 = vmatpush.bf16.msra.mxu0 0
        %1155 = vmatpush.bf16.msra.mxu0 0
        %1156 = vmatpush.bf16.msra.mxu0 0
        %1157 = vmatpush.bf16.msra.mxu0 0
        %1158 = vmatpush.bf16.msra.mxu0 0
        %1159 = vmatpush.bf16.msra.mxu0 %v1150
        %1160 = vmatmul.bf16.gmra.mxu0 %v1147
        %v1161 = vpop.f32.mrf.mxu0
        %v1162 = vadd.f32 0.0, %v1161
        %v1163 = vpop.f32.mrf.mxu0
        %1164 = vdwg.mxu0
        // While loop
        $region119: #{tpu_custom_call.1} parent=83 // loop_pre_header
          _
        $region120: #{tpu_custom_call.1} parent=83 // loop_header
          %s1166 = sphi 0, %s1168
          %p1167 = scmp.ge.s32.totalorder %s1166, %s38
          %v1171 = vphi %v1136, %v1207
          %v1172 = vphi %v1142, %v1218
          %v1173 = vphi %v1162, %v1245
        $region121: #{tpu_custom_call.1} parent=83 // loop_header_branch
          %1170 = sbr.rel (%p1167) target = $region125
        $region122: #{tpu_custom_call.1} parent=83 // loop_body
          %s1174 = smul.u32 %s1166, 8
          %s1175 = sshra.s32 %s1174, 3
          %s1176 = sand.u32 %s1174, 7
          %s1177 = smul.addr %s1175, 4
          %s1178 = scalar_lea.vmem [#allocation2], %s1177
          %v1179 = vld [vmem:[%s1178] sm:$0xf]
          %s1180 = smul.addr %s1175, 4
          %s1181 = scalar_lea.vmem [#allocation3], %s1180
          %v1182 = vld [vmem:[%s1181] sm:$0xf]
          %v1184 = vunpack.c.l.b16 %v1179
          %v1185 = vpack.c.b16 %v1184, %v1184
          %1186 = vrot.lane.b32.xlu0 %v1185, 112
          %v1187 = vpop.permute.xlu0 %1186
          %v1189 = vsel %vm797, %v1187, 0
          %1191 = vmatpush.bf16.xpose.msra.mxu0 0
          %1192 = vmatpush.bf16.xpose.msra.mxu0 0
          %1193 = vmatpush.bf16.xpose.msra.mxu0 0
          %1194 = vmatpush.bf16.xpose.msra.mxu0 0
          %1195 = vmatpush.bf16.xpose.msra.mxu0 0
          %1196 = vmatpush.bf16.xpose.msra.mxu0 0
          %1197 = vmatpush.bf16.xpose.msra.mxu0 0
          %1198 = vmatpush.bf16.xpose.msra.mxu0 %v1189
          %1199 = vmatmul.bf16.gmra.mxu0 %v1115
          %v1200 = vpop.f32.mrf.mxu0
          %v1201 = vadd.f32 0.0, %v1200
          %v1202 = vpop.f32.mrf.mxu0
          %1203 = vdwg.mxu0
          %v1204 = vsel %vm797, %v1201, -inf
          %1205 = vmax.xlane.f32.xlu0 %v1204
          %v1206 = vpop.xlane.xlu0 %1205
          %v1207 = vmax.f32 %v1171, %v1206
          %v1208 = vsub.f32 %v1171, %v1207
          %v1209 = vmul.f32 %v1208, 1.442695
          %v1210 = vpow.pop %v1209
          %v1211 = vsub.f32 %v1201, %v1207
          %v1212 = vmul.f32 %v1211, 1.442695
          %v1213 = vpow.pop %v1212
          %v1214 = vmul.f32 %v1210, %v1172
          %v1215 = vsel %vm797, %v1213, 0.0
          %1216 = vadd.xlane.f32.xlu0 %v1215
          %v1217 = vpop.xlane.xlu0 %1216
          %v1218 = vadd.f32 %v1214, %v1217
          %v1219 = vmul.f32 %v1210, %v1173
          %v1220 = vpack.c.bf16 %v1213, %v1213
          %v1222 = vunpack.c.l.b16 %v1182
          %v1223 = vpack.c.b16 %v1222, %v1222
          %1224 = vrot.lane.b32.xlu0 %v1223, 112
          %v1225 = vpop.permute.xlu0 %1224
          %v1227 = vsel %vm797, %v1220, 0
          %v1230 = vsel %vm831, %v1225, 0
          %1232 = vmatpush.bf16.msra.mxu0 0
          %1233 = vmatpush.bf16.msra.mxu0 0
          %1234 = vmatpush.bf16.msra.mxu0 0
          %1235 = vmatpush.bf16.msra.mxu0 0
          %1236 = vmatpush.bf16.msra.mxu0 0
          %1237 = vmatpush.bf16.msra.mxu0 0
          %1238 = vmatpush.bf16.msra.mxu0 0
          %1239 = vmatpush.bf16.msra.mxu0 %v1230
          %1240 = vmatmul.bf16.gmra.mxu0 %v1227
          %v1241 = vpop.f32.mrf.mxu0
          %v1242 = vadd.f32 0.0, %v1241
          %v1243 = vpop.f32.mrf.mxu0
          %1244 = vdwg.mxu0
          %v1245 = vadd.f32 %v1219, %v1242
        $region123: #{tpu_custom_call.1} parent=83 // loop_footer
          %s1168 = sadd.s32 %s1166, 1
        $region124: #{tpu_custom_call.1} parent=83 // loop_footer_branch
          %1165 = sbr.rel target = $region120
        $region125: #{tpu_custom_call.1} parent=83 // loop_exit
          _
        %v1246 = vrcp.pop %v1172
        %v1247 = vmul.f32 %v1173, %v1246
        %v1248 = vpack.c.bf16 %v1247, %v1247
        %v1249 = vld [vmem:[#allocation12 + $0x8] sm:$0xf]
        %v1251 = vsel %vm797, %v1248, 0
        %v1254 = vsel %vm831, %v1249, 0
        %1256 = vmatpush.bf16.msra.mxu0 0
        %1257 = vmatpush.bf16.msra.mxu0 0
        %1258 = vmatpush.bf16.msra.mxu0 0
        %1259 = vmatpush.bf16.msra.mxu0 0
        %1260 = vmatpush.bf16.msra.mxu0 0
        %1261 = vmatpush.bf16.msra.mxu0 0
        %1262 = vmatpush.bf16.msra.mxu0 0
        %1263 = vmatpush.bf16.msra.mxu0 %v1254
        %1264 = vmatmul.bf16.gmra.mxu0 %v1251
        %v1265 = vpop.f32.mrf.mxu0
        %v1266 = vadd.f32 0.0, %v1265
        %v1267 = vpop.f32.mrf.mxu0
        %1268 = vdwg.mxu0
        %v1269 = vadd.f32 %v1107, %v1266
        %1270 = vrot.lane.b32.xlu0 %v925, 104
        %v1271 = vpop.permute.xlu0 %1270
        %1272 = vrot.lane.b32.xlu0 %v930, 104
        %v1273 = vpop.permute.xlu0 %1272
        %v1275 = vsel %vm797, %v1271, 0
        %v1278 = vsel %vm797, %v1273, 0
        %1280 = vmatpush.bf16.xpose.msra.mxu0 0
        %1281 = vmatpush.bf16.xpose.msra.mxu0 0
        %1282 = vmatpush.bf16.xpose.msra.mxu0 0
        %1283 = vmatpush.bf16.xpose.msra.mxu0 0
        %1284 = vmatpush.bf16.xpose.msra.mxu0 0
        %1285 = vmatpush.bf16.xpose.msra.mxu0 0
        %1286 = vmatpush.bf16.xpose.msra.mxu0 0
        %1287 = vmatpush.bf16.xpose.msra.mxu0 %v1278
        %1288 = vmatmul.bf16.gmra.mxu0 %v1275
        %v1289 = vpop.f32.mrf.mxu0
        %v1290 = vadd.f32 0.0, %v1289
        %v1291 = vpop.f32.mrf.mxu0
        %1292 = vdwg.mxu0
        %v1293 = vsel %vm794, %v1290, -1e+30
        %v1294 = vsel %vm797, %v1293, -inf
        %1295 = vmax.xlane.f32.xlu0 %v1294
        %v1296 = vpop.xlane.xlu0 %1295
        %v1297 = vsub.f32 %v1293, %v1296
        %v1298 = vmul.f32 %v1297, 1.442695
        %v1299 = vpow.pop %v1298
        %v1300 = vsel %vm797, %v1299, 0.0
        %1301 = vadd.xlane.f32.xlu0 %v1300
        %v1302 = vpop.xlane.xlu0 %1301
        %v1303 = vpack.c.bf16 %v1299, %v1299
        %1304 = vrot.lane.b32.xlu0 %v965, 104
        %v1305 = vpop.permute.xlu0 %1304
        %v1307 = vsel %vm797, %v1303, 0
        %v1310 = vsel %vm831, %v1305, 0
        %1312 = vmatpush.bf16.msra.mxu0 0
        %1313 = vmatpush.bf16.msra.mxu0 0
        %1314 = vmatpush.bf16.msra.mxu0 0
        %1315 = vmatpush.bf16.msra.mxu0 0
        %1316 = vmatpush.bf16.msra.mxu0 0
        %1317 = vmatpush.bf16.msra.mxu0 0
        %1318 = vmatpush.bf16.msra.mxu0 0
        %1319 = vmatpush.bf16.msra.mxu0 %v1310
        %1320 = vmatmul.bf16.gmra.mxu0 %v1307
        %v1321 = vpop.f32.mrf.mxu0
        %v1322 = vadd.f32 0.0, %v1321
        %v1323 = vpop.f32.mrf.mxu0
        %1324 = vdwg.mxu0
        // While loop
        $region126: #{tpu_custom_call.1} parent=83 // loop_pre_header
          _
        $region127: #{tpu_custom_call.1} parent=83 // loop_header
          %s1326 = sphi 0, %s1328
          %p1327 = scmp.ge.s32.totalorder %s1326, %s38
          %v1331 = vphi %v1296, %v1367
          %v1332 = vphi %v1302, %v1378
          %v1333 = vphi %v1322, %v1405
        $region128: #{tpu_custom_call.1} parent=83 // loop_header_branch
          %1330 = sbr.rel (%p1327) target = $region132
        $region129: #{tpu_custom_call.1} parent=83 // loop_body
          %s1334 = smul.u32 %s1326, 8
          %s1335 = sshra.s32 %s1334, 3
          %s1336 = sand.u32 %s1334, 7
          %s1337 = smul.addr %s1335, 4
          %s1338 = scalar_lea.vmem [#allocation2], %s1337
          %v1339 = vld [vmem:[%s1338] sm:$0xf]
          %s1340 = smul.addr %s1335, 4
          %s1341 = scalar_lea.vmem [#allocation3], %s1340
          %v1342 = vld [vmem:[%s1341] sm:$0xf]
          %v1344 = vunpack.c.l.b16 %v1339
          %v1345 = vpack.c.b16 %v1344, %v1344
          %1346 = vrot.lane.b32.xlu0 %v1345, 104
          %v1347 = vpop.permute.xlu0 %1346
          %v1349 = vsel %vm797, %v1347, 0
          %1351 = vmatpush.bf16.xpose.msra.mxu0 0
          %1352 = vmatpush.bf16.xpose.msra.mxu0 0
          %1353 = vmatpush.bf16.xpose.msra.mxu0 0
          %1354 = vmatpush.bf16.xpose.msra.mxu0 0
          %1355 = vmatpush.bf16.xpose.msra.mxu0 0
          %1356 = vmatpush.bf16.xpose.msra.mxu0 0
          %1357 = vmatpush.bf16.xpose.msra.mxu0 0
          %1358 = vmatpush.bf16.xpose.msra.mxu0 %v1349
          %1359 = vmatmul.bf16.gmra.mxu0 %v1275
          %v1360 = vpop.f32.mrf.mxu0
          %v1361 = vadd.f32 0.0, %v1360
          %v1362 = vpop.f32.mrf.mxu0
          %1363 = vdwg.mxu0
          %v1364 = vsel %vm797, %v1361, -inf
          %1365 = vmax.xlane.f32.xlu0 %v1364
          %v1366 = vpop.xlane.xlu0 %1365
          %v1367 = vmax.f32 %v1331, %v1366
          %v1368 = vsub.f32 %v1331, %v1367
          %v1369 = vmul.f32 %v1368, 1.442695
          %v1370 = vpow.pop %v1369
          %v1371 = vsub.f32 %v1361, %v1367
          %v1372 = vmul.f32 %v1371, 1.442695
          %v1373 = vpow.pop %v1372
          %v1374 = vmul.f32 %v1370, %v1332
          %v1375 = vsel %vm797, %v1373, 0.0
          %1376 = vadd.xlane.f32.xlu0 %v1375
          %v1377 = vpop.xlane.xlu0 %1376
          %v1378 = vadd.f32 %v1374, %v1377
          %v1379 = vmul.f32 %v1370, %v1333
          %v1380 = vpack.c.bf16 %v1373, %v1373
          %v1382 = vunpack.c.l.b16 %v1342
          %v1383 = vpack.c.b16 %v1382, %v1382
          %1384 = vrot.lane.b32.xlu0 %v1383, 104
          %v1385 = vpop.permute.xlu0 %1384
          %v1387 = vsel %vm797, %v1380, 0
          %v1390 = vsel %vm831, %v1385, 0
          %1392 = vmatpush.bf16.msra.mxu0 0
          %1393 = vmatpush.bf16.msra.mxu0 0
          %1394 = vmatpush.bf16.msra.mxu0 0
          %1395 = vmatpush.bf16.msra.mxu0 0
          %1396 = vmatpush.bf16.msra.mxu0 0
          %1397 = vmatpush.bf16.msra.mxu0 0
          %1398 = vmatpush.bf16.msra.mxu0 0
          %1399 = vmatpush.bf16.msra.mxu0 %v1390
          %1400 = vmatmul.bf16.gmra.mxu0 %v1387
          %v1401 = vpop.f32.mrf.mxu0
          %v1402 = vadd.f32 0.0, %v1401
          %v1403 = vpop.f32.mrf.mxu0
          %1404 = vdwg.mxu0
          %v1405 = vadd.f32 %v1379, %v1402
        $region130: #{tpu_custom_call.1} parent=83 // loop_footer
          %s1328 = sadd.s32 %s1326, 1
        $region131: #{tpu_custom_call.1} parent=83 // loop_footer_branch
          %1325 = sbr.rel target = $region127
        $region132: #{tpu_custom_call.1} parent=83 // loop_exit
          _
        %v1406 = vrcp.pop %v1332
        %v1407 = vmul.f32 %v1333, %v1406
        %v1408 = vpack.c.bf16 %v1407, %v1407
        %v1409 = vld [vmem:[#allocation12 + $0xc] sm:$0xf]
        %v1411 = vsel %vm797, %v1408, 0
        %v1414 = vsel %vm831, %v1409, 0
        %1416 = vmatpush.bf16.msra.mxu0 0
        %1417 = vmatpush.bf16.msra.mxu0 0
        %1418 = vmatpush.bf16.msra.mxu0 0
        %1419 = vmatpush.bf16.msra.mxu0 0
        %1420 = vmatpush.bf16.msra.mxu0 0
        %1421 = vmatpush.bf16.msra.mxu0 0
        %1422 = vmatpush.bf16.msra.mxu0 0
        %1423 = vmatpush.bf16.msra.mxu0 %v1414
        %1424 = vmatmul.bf16.gmra.mxu0 %v1411
        %v1425 = vpop.f32.mrf.mxu0
        %v1426 = vadd.f32 0.0, %v1425
        %v1427 = vpop.f32.mrf.mxu0
        %1428 = vdwg.mxu0
        %v1429 = vadd.f32 %v1269, %v1426
        %v1430 = vld [vmem:[%s11] sm:$0x1]
        %v1432 = vperm.slane %v1430, 0
        %v1434 = vadd.f32 %v1429, %v1432
        %v1435 = vadd.f32 %v1434, %v658
        %v1436 = vld [vmem:[#allocation9] sm:$0x1]
        %v1437 = vld [vmem:[#allocation10] sm:$0x1]
        %v1438 = vmul.f32 %v1435, %v662
        %v1439 = vsel %vm665, %v1438, 0.0
        %1440 = vadd.xlane.f32.xlu0 %v1439
        %v1441 = vpop.xlane.xlu0 %1440
        %v1442 = vmul.f32 %v1441, %v669
        %v1443 = vsub.f32 %v1435, %v1442
        %v1444 = vmul.f32 %v1443, %v662
        %v1445 = vmul.f32 %v1444, %v1444
        %v1446 = vsel %vm665, %v1445, 0.0
        %1447 = vadd.xlane.f32.xlu0 %v1446
        %v1448 = vpop.xlane.xlu0 %1447
        %v1449 = vmul.f32 %v1448, %v677
        %v1450 = vrsqrt.pop %v1449
        %v1451 = vmul.f32 %v1450, %v1449
        %v1452 = vmul.f32 %v1451, %v1450
        %v1453 = vmul.f32 0.5, %v1452
        %v1454 = vsub.f32 1.5, %v1453
        %v1455 = vmul.f32 %v1450, %v1454
        %v1456 = vmul.f32 %v1449, %v1455
        %vm1457 = vcmp.eq.f32.partialorder %v1449, inf
        %v1458 = vsel %vm1457, %v1449, %v1456
        %vm1459 = vcmp.eq.f32.partialorder %v1449, 0.0
        %v1460 = vand.u32 %v1449, 2147483648
        %v1461 = vsel %vm1459, %v1460, %v1458
        %v1462 = vadd.f32 %v1461, 1e-05
        %v1463 = vrcp.pop %v1462
        %v1464 = vmul.f32 %v1443, %v1463
        %v1466 = vperm.slane %v1436, 0
        %v1468 = vmul.f32 %v1464, %v1466
        %v1470 = vperm.slane %v1437, 0
        %v1472 = vadd.f32 %v1468, %v1470
        %v1473 = vmul.f32 %v1472, %v662
        %v1474 = vpack.c.bf16 %v1473, %v1473
        %v1475 = vld [vmem:[%s12] sm:$0xf]
        %v1476 = vld [vmem:[%s12 + $0x4] sm:$0xf]
        %v1477 = vld [vmem:[%s12 + $0x8] sm:$0xf]
        %v1478 = vld [vmem:[%s12 + $0xc] sm:$0xf]
        %v1479 = vld [vmem:[%s13] sm:$0x1]
        %v1481 = vperm.slane %v1479, 0
        %v1487 = vunpack.c.l.b16 %v1475
        %v1488 = vunpack.c.l.b16 %v1476
        %v1489 = vunpack.c.l.b16 %v1477
        %v1490 = vunpack.c.l.b16 %v1478
        %v1491 = vpack.c.b16 %v1488, %v1487
        %v1492 = vpack.c.b16 %v1490, %v1489
        %v1496 = vsel %vm665, %v1474, 0
        %1498 = vmatpush.bf16.msra.mxu0 0
        %1499 = vmatpush.bf16.msra.mxu0 0
        %1500 = vmatpush.bf16.msra.mxu0 0
        %1501 = vmatpush.bf16.msra.mxu0 0
        %1502 = vmatpush.bf16.msra.mxu0 0
        %1503 = vmatpush.bf16.msra.mxu0 0
        %1504 = vmatpush.bf16.msra.mxu0 %v1492
        %1505 = vmatpush.bf16.msra.mxu0 %v1491
        %1506 = vmatmul.bf16.gmra.mxu0 %v1496
        %v1507 = vpop.f32.mrf.mxu0
        %v1508 = vadd.f32 %v1481, %v1507
        %v1509 = vpop.f32.mrf.mxu0
        %1510 = vdwg.mxu0
        %v1511 = vpack.c.bf16 %v1508, %v1508
        %v1512 = vunpack.c.l.bf16 %v1511
        %v1513 = vmul.f32 %v1512, 0.5
        %v1514 = vpack.c.bf16 %v1513, %v1513
        %v1515 = vmul.f32 %v1512, 0.044677734
        %v1516 = vpack.c.bf16 %v1515, %v1515
        %v1517 = vunpack.c.l.bf16 %v1516
        %v1518 = vmul.f32 %v1517, %v1512
        %v1519 = vpack.c.bf16 %v1518, %v1518
        %v1520 = vunpack.c.l.bf16 %v1519
        %v1521 = vmul.f32 %v1520, %v1512
        %v1522 = vpack.c.bf16 %v1521, %v1521
        %v1523 = vunpack.c.l.bf16 %v1522
        %v1524 = vadd.f32 %v1512, %v1523
        %v1525 = vpack.c.bf16 %v1524, %v1524
        %v1526 = vunpack.c.l.bf16 %v1525
        %v1527 = vmul.f32 %v1526, 0.796875
        %v1528 = vpack.c.bf16 %v1527, %v1527
        %v1529 = vunpack.c.l.bf16 %v1528
        %v1530 = vtanh.pop %v1529
        %v1531 = vpack.c.bf16 %v1530, %v1530
        %v1532 = vunpack.c.l.bf16 %v1531
        %v1533 = vadd.f32 %v1532, 1.0
        %v1534 = vpack.c.bf16 %v1533, %v1533
        %v1535 = vunpack.c.l.bf16 %v1514
        %v1536 = vunpack.c.l.bf16 %v1534
        %v1537 = vmul.f32 %v1535, %v1536
        %v1538 = vpack.c.bf16 %v1537, %v1537
        %v1539 = vld [vmem:[%s14] sm:$0xf]
        %v1540 = vld [vmem:[%s14 + $0x4] sm:$0xf]
        %v1541 = vld [vmem:[%s14 + $0x8] sm:$0xf]
        %v1542 = vld [vmem:[%s14 + $0xc] sm:$0xf]
        %v1543 = vld [vmem:[%s14 + $0x10] sm:$0xf]
        %v1544 = vld [vmem:[%s14 + $0x14] sm:$0xf]
        %v1545 = vld [vmem:[%s14 + $0x18] sm:$0xf]
        %v1546 = vld [vmem:[%s14 + $0x1c] sm:$0xf]
        %s1547 = scalar_lea.vmem %s12, 16
        %v1548 = vld [vmem:[%s1547] sm:$0xf]
        %v1549 = vld [vmem:[%s1547 + $0x4] sm:$0xf]
        %v1550 = vld [vmem:[%s1547 + $0x8] sm:$0xf]
        %v1551 = vld [vmem:[%s1547 + $0xc] sm:$0xf]
        %s1552 = scalar_lea.vmem %s13, 1
        %v1553 = vld [vmem:[%s1552] sm:$0x1]
        %v1555 = vperm.slane %v1553, 0
        %v1561 = vunpack.c.l.b16 %v1548
        %v1562 = vunpack.c.l.b16 %v1549
        %v1563 = vunpack.c.l.b16 %v1550
        %v1564 = vunpack.c.l.b16 %v1551
        %v1565 = vpack.c.b16 %v1562, %v1561
        %v1566 = vpack.c.b16 %v1564, %v1563
        %1569 = vmatpush.bf16.msra.mxu0 0
        %1570 = vmatpush.bf16.msra.mxu0 0
        %1571 = vmatpush.bf16.msra.mxu0 0
        %1572 = vmatpush.bf16.msra.mxu0 0
        %1573 = vmatpush.bf16.msra.mxu0 0
        %1574 = vmatpush.bf16.msra.mxu0 0
        %1575 = vmatpush.bf16.msra.mxu0 %v1566
        %1576 = vmatpush.bf16.msra.mxu0 %v1565
        %1577 = vmatmul.bf16.gmra.mxu0 %v1496
        %v1578 = vpop.f32.mrf.mxu0
        %v1579 = vadd.f32 %v1555, %v1578
        %v1580 = vpop.f32.mrf.mxu0
        %1581 = vdwg.mxu0
        %v1582 = vpack.c.bf16 %v1579, %v1579
        %v1583 = vunpack.c.l.bf16 %v1582
        %v1584 = vmul.f32 %v1583, 0.5
        %v1585 = vpack.c.bf16 %v1584, %v1584
        %v1586 = vmul.f32 %v1583, 0.044677734
        %v1587 = vpack.c.bf16 %v1586, %v1586
        %v1588 = vunpack.c.l.bf16 %v1587
        %v1589 = vmul.f32 %v1588, %v1583
        %v1590 = vpack.c.bf16 %v1589, %v1589
        %v1591 = vunpack.c.l.bf16 %v1590
        %v1592 = vmul.f32 %v1591, %v1583
        %v1593 = vpack.c.bf16 %v1592, %v1592
        %v1594 = vunpack.c.l.bf16 %v1593
        %v1595 = vadd.f32 %v1583, %v1594
        %v1596 = vpack.c.bf16 %v1595, %v1595
        %v1597 = vunpack.c.l.bf16 %v1596
        %v1598 = vmul.f32 %v1597, 0.796875
        %v1599 = vpack.c.bf16 %v1598, %v1598
        %v1600 = vunpack.c.l.bf16 %v1599
        %v1601 = vtanh.pop %v1600
        %v1602 = vpack.c.bf16 %v1601, %v1601
        %v1603 = vunpack.c.l.bf16 %v1602
        %v1604 = vadd.f32 %v1603, 1.0
        %v1605 = vpack.c.bf16 %v1604, %v1604
        %v1606 = vunpack.c.l.bf16 %v1585
        %v1607 = vunpack.c.l.bf16 %v1605
        %v1608 = vmul.f32 %v1606, %v1607
        %v1609 = vpack.c.bf16 %v1608, %v1608
        %s1610 = scalar_lea.vmem %s14, 32
        %v1611 = vld [vmem:[%s1610] sm:$0xf]
        %v1612 = vld [vmem:[%s1610 + $0x4] sm:$0xf]
        %v1613 = vld [vmem:[%s1610 + $0x8] sm:$0xf]
        %v1614 = vld [vmem:[%s1610 + $0xc] sm:$0xf]
        %v1615 = vld [vmem:[%s1610 + $0x10] sm:$0xf]
        %v1616 = vld [vmem:[%s1610 + $0x14] sm:$0xf]
        %v1617 = vld [vmem:[%s1610 + $0x18] sm:$0xf]
        %v1618 = vld [vmem:[%s1610 + $0x1c] sm:$0xf]
        %v1627 = vunpack.c.l.b16 %v1611
        %v1628 = vunpack.c.l.b16 %v1612
        %v1629 = vunpack.c.l.b16 %v1613
        %v1630 = vunpack.c.l.b16 %v1614
        %v1631 = vunpack.c.l.b16 %v1615
        %v1632 = vunpack.c.l.b16 %v1616
        %v1633 = vunpack.c.l.b16 %v1617
        %v1634 = vunpack.c.l.b16 %v1618
        %v1635 = vpack.c.b16 %v1628, %v1627
        %v1636 = vpack.c.b16 %v1630, %v1629
        %v1637 = vpack.c.b16 %v1632, %v1631
        %v1638 = vpack.c.b16 %v1634, %v1633
        %vm1643 = vcmask 523264
        %v1645 = vsel %vm1643, %v1609, 0
        %1647 = vmatpush.bf16.msra.mxu0 0
        %1648 = vmatpush.bf16.msra.mxu0 0
        %1649 = vmatpush.bf16.msra.mxu0 0
        %1650 = vmatpush.bf16.msra.mxu0 0
        %1651 = vmatpush.bf16.msra.mxu0 %v1638
        %1652 = vmatpush.bf16.msra.mxu0 %v1637
        %1653 = vmatpush.bf16.msra.mxu0 %v1636
        %1654 = vmatpush.bf16.msra.mxu0 %v1635
        %1655 = vmatmul.bf16.gmra.mxu0 %v1645
        %v1656 = vpop.f32.mrf.mxu0
        %v1657 = vadd.f32 0.0, %v1656
        %v1658 = vpop.f32.mrf.mxu0
        %1659 = vdwg.mxu0
        %v1668 = vunpack.c.l.b16 %v1539
        %v1669 = vunpack.c.l.b16 %v1540
        %v1670 = vunpack.c.l.b16 %v1541
        %v1671 = vunpack.c.l.b16 %v1542
        %v1672 = vunpack.c.l.b16 %v1543
        %v1673 = vunpack.c.l.b16 %v1544
        %v1674 = vunpack.c.l.b16 %v1545
        %v1675 = vunpack.c.l.b16 %v1546
        %v1676 = vpack.c.b16 %v1669, %v1668
        %v1677 = vpack.c.b16 %v1671, %v1670
        %v1678 = vpack.c.b16 %v1673, %v1672
        %v1679 = vpack.c.b16 %v1675, %v1674
        %v1685 = vsel %vm1643, %v1538, 0
        %1687 = vmatpush.bf16.msra.mxu0 0
        %1688 = vmatpush.bf16.msra.mxu0 0
        %1689 = vmatpush.bf16.msra.mxu0 0
        %1690 = vmatpush.bf16.msra.mxu0 0
        %1691 = vmatpush.bf16.msra.mxu0 %v1679
        %1692 = vmatpush.bf16.msra.mxu0 %v1678
        %1693 = vmatpush.bf16.msra.mxu0 %v1677
        %1694 = vmatpush.bf16.msra.mxu0 %v1676
        %1695 = vmatmul.bf16.gmra.mxu0 %v1685
        %v1696 = vpop.f32.mrf.mxu0
        %v1697 = vadd.f32 %v1657, %v1696
        %v1698 = vpop.f32.mrf.mxu0
        %1699 = vdwg.mxu0
        %v1700 = vadd.f32 %v1435, %v1697
        %v1701 = vld [vmem:[%s15] sm:$0x1]
        %v1703 = vperm.slane %v1701, 0
        %v1705 = vadd.f32 %v1700, %v1703
        %1706 = vst.msk [vmem:[%s611] sm:$0xff] %vm665, %v1705
        %s1707 = sand.u32 %s398, 1
        %s1708 = scalar_lea.sflag [#allocation6], %s1707
        %s1709 = sand.u32 %s398, 1
        %s1710 = smul.addr %s1709, 8
        %s1711 = scalar_lea.vmem [#allocation13], %s1710
        // Predicated region
        $region133: #{tpu_custom_call.1} parent=83 // pred_check
          %p1712 = pneg %p408
        $region134: #{tpu_custom_call.1} parent=83 // pred_check_branch
          %1714 = sbr.rel (%p1712) target = $region136
        $region135: #{tpu_custom_call.1} parent=83 // pred_region
          %1716 = vsyncadd %s1708, 0
          %s1717 = smul.addr %s37, 2
          %s1718 = sadd.s32 %s38, %s1717
          %s1719 = smul.addr %s1718, 8
          %s1720 = scalar_lea.hbm %s16, %s1719
          %s1722 = sshll.u32 %s1711, 4
          %s1723 = int_to_ptr.vmem [resolvable:$true] %s1722
          %s1724 = sshll.u32 %s1720, 4
          %s1725 = int_to_ptr.hbm [resolvable:$true] %s1724
          %1727 = dma.vmem_to_hbm [thread:$0]  %s1723, 128, %s1725, %s1708
        $region136: #{tpu_custom_call.1} parent=83 // pred_fallthru
          _
      $region84: #{tpu_custom_call.1} parent=5 // pred_fallthru
        _
      %p1728 = scmp.le.s32.totalorder 2, %s28
      // Predicated region
      $region137: #{tpu_custom_call.1} parent=5 // pred_check
        %p1729 = pneg %p1728
      $region138: #{tpu_custom_call.1} parent=5 // pred_check_branch
        %1731 = sbr.rel (%p1729) target = $region140
      $region139: #{tpu_custom_call.1} parent=5 // pred_region
        %s1732 = ssub.s32 %s28, 2
        // Predicated region
        $region141: #{tpu_custom_call.1} parent=139 // pred_check
          %p1733 = pneg %p414
        $region142: #{tpu_custom_call.1} parent=139 // pred_check_branch
          %1735 = sbr.rel (%p1733) target = $region144
        $region143: #{tpu_custom_call.1} parent=139 // pred_region
          %s1736 = sand.u32 %s399, 1
          %s1737 = scalar_lea.sflag [#allocation6], %s1736
          %s1738 = sand.u32 %s399, 1
          %s1739 = smul.addr %s1738, 8
          %s1740 = scalar_lea.vmem [#allocation13], %s1739
          %1742 = dma.done %s1737, 128
        $region144: #{tpu_custom_call.1} parent=139 // pred_fallthru
          _
      $region140: #{tpu_custom_call.1} parent=5 // pred_fallthru
        _
    $region6: #{tpu_custom_call.1} parent=1 // loop_footer
      %s32 = sadd.s32 1, %s28
    $region7: #{tpu_custom_call.1} parent=1 // loop_footer_branch
      %27 = sbr.rel target = $region3
    $region8: #{tpu_custom_call.1} parent=1 // loop_exit
      _
    %1743 = vsyncpa [#allocation5], 1
    %s1744 = scalar_lea.sflag [#allocation5], 1
    %1745 = vsyncpa %s1744, 1
    %1746 = vsyncpa [#allocation8], 1
    %1747 = vsyncpa [#allocation11], 1
    %1748 = vsyncpa [#allocation6], 1
    %s1749 = scalar_lea.sflag [#allocation6], 1
    %1750 = vsyncpa %s1749, 1

// kernel: tpu_custom_call.1
$region0: #{tpu_custom_call.1}
  #allocation0 [shape = 'u32[]', space=smem, size = 0x4, offset = 0x4, fixed_abs, tag = 'smem constant byte address 0x4 - core index']
  #allocation1 [shape = 'u32[72,128]{1,0:T(1,128)}', space=vmem, size = 0x9000, scoped, tag = 'internal scratch']
  #allocation2 [shape = 'bf16[16,32]{1,0:T(8,128)(2,1)}', space=vmem, size = 0x1000, scoped, tag = 'scratch operand']
  #allocation3 [shape = 'bf16[16,32]{1,0:T(8,128)(2,1)}', space=vmem, size = 0x1000, scoped, tag = 'scratch operand']
  %s0 = inlined_call_operand.vmem [shape: f32[2,16,32], index: 0, kind: input, shape index: {}]
  %s1 = inlined_call_operand.hbm [shape: f32[1,32], index: 1, kind: input, shape index: {}]
  %s2 = inlined_call_operand.vmem [shape: f32[1,32], index: 2, kind: input, shape index: {}]
  %s3 = inlined_call_operand.hbm [shape: f32[1,32], index: 3, kind: input, shape index: {}]
  %s4 = inlined_call_operand.hbm [shape: f32[1,32], index: 4, kind: input, shape index: {}]
  %s5 = inlined_call_operand.hbm [shape: f32[1,32], index: 5, kind: input, shape index: {}]
  %s6 = inlined_call_operand.vmem [shape: bf16[32,32], index: 6, kind: input, shape index: {}]
  %s7 = inlined_call_operand.vmem [shape: f32[1,32], index: 7, kind: input, shape index: {}]
  %s8 = inlined_call_operand.vmem [shape: bf16[32,64], index: 8, kind: input, shape index: {}]
  %s9 = inlined_call_operand.vmem [shape: f32[1,64], index: 9, kind: input, shape index: {}]
  %s10 = inlined_call_operand.hbm [shape: bf16[32,32], index: 10, kind: input, shape index: {}]
  %s11 = inlined_call_operand.vmem [shape: f32[1,32], index: 11, kind: input, shape index: {}]
  %s12 = inlined_call_operand.vmem [shape: bf16[2,32,64], index: 12, kind: input, shape index: {}]
  %s13 = inlined_call_operand.vmem [shape: f32[2,1,64], index: 13, kind: input, shape index: {}]
  %s14 = inlined_call_operand.vmem [shape: bf16[2,64,32], index: 14, kind: input, shape index: {}]
  %s15 = inlined_call_operand.vmem [shape: f32[1,32], index: 15, kind: input, shape index: {}]
  %s16 = inlined_call_operand.hbm [shape: f32[2,16,32], index: 16, kind: output, shape index: {}]
  %s17 = sld [smem:[#allocation0]]
  $region145: #{tpu_custom_call.1} parent=0
    _
  %s19 = ssub.s32 1, %s17
  %s20 = scalar_select 0, %s19, %s17
  $region1: #{tpu_custom_call.1} parent=0
    #allocation4 [shape = 'u8[512]{0}', space=vmem, size = 0x400, scoped, tag = 'input window, operand 1, single buffered']
    #allocation5 [shape = 's32[2]{0}', space=sflag, size = 0x8, scoped, tag = 'scoped memory for tpu_custom_call.1']
    #allocation6 [shape = 's32[2]{0}', space=sflag, size = 0x8, scoped, tag = 'scoped memory for tpu_custom_call.1']
    #allocation7 [shape = 'u8[512]{0}', space=vmem, size = 0x400, scoped, tag = 'input window, operand 3, single buffered']
    #allocation8 [shape = 's32[1]{0}', space=sflag, size = 0x4, scoped, tag = 'scoped memory for tpu_custom_call.1']
    #allocation9 [shape = 'u8[512]{0}', space=vmem, size = 0x400, scoped, tag = 'input window, operand 4, single buffered']
    #allocation10 [shape = 'u8[512]{0}', space=vmem, size = 0x400, scoped, tag = 'input window, operand 5, single buffered']
    #allocation11 [shape = 's32[1]{0}', space=sflag, size = 0x4, scoped, tag = 'scoped memory for tpu_custom_call.1']
    #allocation12 [shape = 'u8[8192]{0}', space=vmem, size = 0x2000, scoped, tag = 'input window, operand 10, single buffered']
    #allocation13 [shape = 'u8[8192]{0}', space=vmem, size = 0x2000, scoped, tag = 'output window, operand 0']
    %21 = vsyncpa [#allocation5], 0
    %22 = vsyncpa [#allocation8], 0
    %23 = vsyncpa [#allocation11], 0
    %24 = vsyncpa [#allocation6], 0
    %s25 = scalar_lea.sflag [#allocation6], 1
    %26 = vsyncpa %s25, 0
    loop: start=0, step=1, limit=6
    $region2: #{tpu_custom_call.1} parent=1 // loop_pre_header
      _
    $region3: #{tpu_custom_call.1} parent=1 // loop_header
      %s28 = sphi 0, %s32
      %p29 = scmp.ge.s32.totalorder %s28, 6
      %s35 = sphi 0, %s47
      %s36 = sphi 0, %s43
      %s37 = sphi 0, %s35
      %s38 = sphi 0, %s36
      %s39 = sphi 0, %s37
      %s40 = sphi 0, %s38
      %s52 = sphi 0, %s54
      %s55 = sphi 0, %s52
      %s56 = sphi 0, %s55
      %s72 = sphi 0, %s56
      %s76 = sphi 0, %s76
      %s78 = sphi 0, %s76
      %s79 = sphi 0, %s78
      %s93 = sphi 0, %s79
      %s97 = sphi 0, %s97
      %s99 = sphi 0, %s97
      %s100 = sphi 0, %s99
      %s114 = sphi 0, %s100
      %s118 = sphi 0, %s118
      %s120 = sphi 0, %s118
      %s121 = sphi 0, %s120
      %s135 = sphi 0, %s121
      %s139 = sphi 0, %s139
      %s141 = sphi 0, %s139
      %s142 = sphi 0, %s141
      %s156 = sphi 0, %s142
      %s160 = sphi 0, %s160
      %s162 = sphi 0, %s160
      %s163 = sphi 0, %s162
      %s177 = sphi 0, %s163
      %s181 = sphi 0, %s181
      %s183 = sphi 0, %s181
      %s184 = sphi 0, %s183
      %s198 = sphi 0, %s184
      %s202 = sphi 0, %s202
      %s204 = sphi 0, %s202
      %s205 = sphi 0, %s204
      %s219 = sphi 0, %s205
      %s223 = sphi 0, %s223
      %s225 = sphi 0, %s223
      %s226 = sphi 0, %s225
      %s240 = sphi 0, %s226
      %s244 = sphi 0, %s244
      %s246 = sphi 0, %s244
      %s247 = sphi 0, %s246
      %s261 = sphi 0, %s247
      %s265 = sphi 0, %s265
      %s267 = sphi 0, %s265
      %s268 = sphi 0, %s267
      %s282 = sphi 0, %s268
      %s286 = sphi 0, %s286
      %s288 = sphi 0, %s286
      %s289 = sphi 0, %s288
      %s303 = sphi 0, %s289
      %s307 = sphi 0, %s307
      %s309 = sphi 0, %s307
      %s310 = sphi 0, %s309
      %s324 = sphi 0, %s310
      %s328 = sphi 0, %s328
      %s330 = sphi 0, %s328
      %s331 = sphi 0, %s330
      %s345 = sphi 0, %s331
      %s349 = sphi 0, %s349
      %s351 = sphi 0, %s349
      %s352 = sphi 0, %s351
      %s366 = sphi 0, %s352
      %s370 = sphi 0, %s370
      %s372 = sphi 0, %s370
      %s373 = sphi 0, %s372
      %s387 = sphi 0, %s373
      %s395 = sphi 0, %s397
      %s398 = sphi 0, %s395
      %s399 = sphi 0, %s398
      %s415 = sphi 0, %s399
    $region4: #{tpu_custom_call.1} parent=1 // loop_header_branch
      %31 = sbr.rel (%p29) target = $region8
    $region5: #{tpu_custom_call.1} parent=1 // loop_body
      %s33 = ssub.s32 %s28, 1
      %s34 = ssub.s32 %s28, 2
      %s41 = sadd.s32 1, %s36
      %p42 = scmp.ge.s32.totalorder %s41, 2
      %s43 = scalar_select %p42, 0, %s41
      %s44 = sadd.s32 1, %s35
      %s45 = scalar_select %p42, %s44, %s35
      %p46 = scmp.ge.s32.totalorder %s45, 2
      %s47 = scalar_select %p46, 0, %s45
      %s48 = ssub.s32 %s35, %s47
      %s49 = ssub.s32 %s36, %s43
      %s50 = sor.u32 %s48, %s49
      %p51 = scmp.eq.s32.totalorder %s50, 0
      %s53 = sadd.s32 %s52, 1
      %s54 = scalar_select %p51, %s52, %s53
      %p57 = pneg %p51
      %p58 = scmp.eq.s32.totalorder %s28, 3
      %p59 = por %p57, %p58
      %p60 = scmp.ne.s32.totalorder %s52, %s55
      %p61 = scmp.eq.s32.totalorder %s28, 0
      %p62 = por %p60, %p61
      %p63 = scmp.ne.s32.totalorder %s52, %s55
      %p64 = scmp.eq.s32.totalorder %s33, 3
      %p65 = por %p63, %p64
      %p66 = scmp.ne.s32.totalorder %s55, %s56
      %p67 = scmp.eq.s32.totalorder %s33, 0
      %p68 = por %p66, %p67
      %p69 = scmp.ne.s32.totalorder %s55, %s56
      %p70 = scmp.eq.s32.totalorder %s34, 3
      %p71 = por %p69, %p70
      %p73 = scmp.ne.s32.totalorder %s56, %s72
      %p74 = scmp.eq.s32.totalorder %s34, 0
      %p75 = por %p73, %p74
      %s77 = sadd.s32 %s76, 1
      %p80 = scmp.eq.s32.totalorder %s28, 3
      %p81 = scmp.ne.s32.totalorder %s76, %s78
      %p82 = scmp.eq.s32.totalorder %s28, 0
      %p83 = por %p81, %p82
      %p84 = scmp.ne.s32.totalorder %s76, %s78
      %p85 = scmp.eq.s32.totalorder %s33, 3
      %p86 = por %p84, %p85
      %p87 = scmp.ne.s32.totalorder %s78, %s79
      %p88 = scmp.eq.s32.totalorder %s33, 0
      %p89 = por %p87, %p88
      %p90 = scmp.ne.s32.totalorder %s78, %s79
      %p91 = scmp.eq.s32.totalorder %s34, 3
      %p92 = por %p90, %p91
      %p94 = scmp.ne.s32.totalorder %s79, %s93
      %p95 = scmp.eq.s32.totalorder %s34, 0
      %p96 = por %p94, %p95
      %s98 = sadd.s32 %s97, 1
      %p101 = scmp.eq.s32.totalorder %s28, 3
      %p102 = scmp.ne.s32.totalorder %s97, %s99
      %p103 = scmp.eq.s32.totalorder %s28, 0
      %p104 = por %p102, %p103
      %p105 = scmp.ne.s32.totalorder %s97, %s99
      %p106 = scmp.eq.s32.totalorder %s33, 3
      %p107 = por %p105, %p106
      %p108 = scmp.ne.s32.totalorder %s99, %s100
      %p109 = scmp.eq.s32.totalorder %s33, 0
      %p110 = por %p108, %p109
      %p111 = scmp.ne.s32.totalorder %s99, %s100
      %p112 = scmp.eq.s32.totalorder %s34, 3
      %p113 = por %p111, %p112
      %p115 = scmp.ne.s32.totalorder %s100, %s114
      %p116 = scmp.eq.s32.totalorder %s34, 0
      %p117 = por %p115, %p116
      %s119 = sadd.s32 %s118, 1
      %p122 = scmp.eq.s32.totalorder %s28, 3
      %p123 = scmp.ne.s32.totalorder %s118, %s120
      %p124 = scmp.eq.s32.totalorder %s28, 0
      %p125 = por %p123, %p124
      %p126 = scmp.ne.s32.totalorder %s118, %s120
      %p127 = scmp.eq.s32.totalorder %s33, 3
      %p128 = por %p126, %p127
      %p129 = scmp.ne.s32.totalorder %s120, %s121
      %p130 = scmp.eq.s32.totalorder %s33, 0
      %p131 = por %p129, %p130
      %p132 = scmp.ne.s32.totalorder %s120, %s121
      %p133 = scmp.eq.s32.totalorder %s34, 3
      %p134 = por %p132, %p133
      %p136 = scmp.ne.s32.totalorder %s121, %s135
      %p137 = scmp.eq.s32.totalorder %s34, 0
      %p138 = por %p136, %p137
      %s140 = sadd.s32 %s139, 1
      %p143 = scmp.eq.s32.totalorder %s28, 3
      %p144 = scmp.ne.s32.totalorder %s139, %s141
      %p145 = scmp.eq.s32.totalorder %s28, 0
      %p146 = por %p144, %p145
      %p147 = scmp.ne.s32.totalorder %s139, %s141
      %p148 = scmp.eq.s32.totalorder %s33, 3
      %p149 = por %p147, %p148
      %p150 = scmp.ne.s32.totalorder %s141, %s142
      %p151 = scmp.eq.s32.totalorder %s33, 0
      %p152 = por %p150, %p151
      %p153 = scmp.ne.s32.totalorder %s141, %s142
      %p154 = scmp.eq.s32.totalorder %s34, 3
      %p155 = por %p153, %p154
      %p157 = scmp.ne.s32.totalorder %s142, %s156
      %p158 = scmp.eq.s32.totalorder %s34, 0
      %p159 = por %p157, %p158
      %s161 = sadd.s32 %s160, 1
      %p164 = scmp.eq.s32.totalorder %s28, 3
      %p165 = scmp.ne.s32.totalorder %s160, %s162
      %p166 = scmp.eq.s32.totalorder %s28, 0
      %p167 = por %p165, %p166
      %p168 = scmp.ne.s32.totalorder %s160, %s162
      %p169 = scmp.eq.s32.totalorder %s33, 3
      %p170 = por %p168, %p169
      %p171 = scmp.ne.s32.totalorder %s162, %s163
      %p172 = scmp.eq.s32.totalorder %s33, 0
      %p173 = por %p171, %p172
      %p174 = scmp.ne.s32.totalorder %s162, %s163
      %p175 = scmp.eq.s32.totalorder %s34, 3
      %p176 = por %p174, %p175
      %p178 = scmp.ne.s32.totalorder %s163, %s177
      %p179 = scmp.eq.s32.totalorder %s34, 0
      %p180 = por %p178, %p179
      %s182 = sadd.s32 %s181, 1
      %p185 = scmp.eq.s32.totalorder %s28, 3
      %p186 = scmp.ne.s32.totalorder %s181, %s183
      %p187 = scmp.eq.s32.totalorder %s28, 0
      %p188 = por %p186, %p187
      %p189 = scmp.ne.s32.totalorder %s181, %s183
      %p190 = scmp.eq.s32.totalorder %s33, 3
      %p191 = por %p189, %p190
      %p192 = scmp.ne.s32.totalorder %s183, %s184
      %p193 = scmp.eq.s32.totalorder %s33, 0
      %p194 = por %p192, %p193
      %p195 = scmp.ne.s32.totalorder %s183, %s184
      %p196 = scmp.eq.s32.totalorder %s34, 3
      %p197 = por %p195, %p196
      %p199 = scmp.ne.s32.totalorder %s184, %s198
      %p200 = scmp.eq.s32.totalorder %s34, 0
      %p201 = por %p199, %p200
      %s203 = sadd.s32 %s202, 1
      %p206 = scmp.eq.s32.totalorder %s28, 3
      %p207 = scmp.ne.s32.totalorder %s202, %s204
      %p208 = scmp.eq.s32.totalorder %s28, 0
      %p209 = por %p207, %p208
      %p210 = scmp.ne.s32.totalorder %s202, %s204
      %p211 = scmp.eq.s32.totalorder %s33, 3
      %p212 = por %p210, %p211
      %p213 = scmp.ne.s32.totalorder %s204, %s205
      %p214 = scmp.eq.s32.totalorder %s33, 0
      %p215 = por %p213, %p214
      %p216 = scmp.ne.s32.totalorder %s204, %s205
      %p217 = scmp.eq.s32.totalorder %s34, 3
      %p218 = por %p216, %p217
      %p220 = scmp.ne.s32.totalorder %s205, %s219
      %p221 = scmp.eq.s32.totalorder %s34, 0
      %p222 = por %p220, %p221
      %s224 = sadd.s32 %s223, 1
      %p227 = scmp.eq.s32.totalorder %s28, 3
      %p228 = scmp.ne.s32.totalorder %s223, %s225
      %p229 = scmp.eq.s32.totalorder %s28, 0
      %p230 = por %p228, %p229
      %p231 = scmp.ne.s32.totalorder %s223, %s225
      %p232 = scmp.eq.s32.totalorder %s33, 3
      %p233 = por %p231, %p232
      %p234 = scmp.ne.s32.totalorder %s225, %s226
      %p235 = scmp.eq.s32.totalorder %s33, 0
      %p236 = por %p234, %p235
      %p237 = scmp.ne.s32.totalorder %s225, %s226
      %p238 = scmp.eq.s32.totalorder %s34, 3
      %p239 = por %p237, %p238
      %p241 = scmp.ne.s32.totalorder %s226, %s240
      %p242 = scmp.eq.s32.totalorder %s34, 0
      %p243 = por %p241, %p242
      %s245 = sadd.s32 %s244, 1
      %p248 = scmp.eq.s32.totalorder %s28, 3
      %p249 = scmp.ne.s32.totalorder %s244, %s246
      %p250 = scmp.eq.s32.totalorder %s28, 0
      %p251 = por %p249, %p250
      %p252 = scmp.ne.s32.totalorder %s244, %s246
      %p253 = scmp.eq.s32.totalorder %s33, 3
      %p254 = por %p252, %p253
      %p255 = scmp.ne.s32.totalorder %s246, %s247
      %p256 = scmp.eq.s32.totalorder %s33, 0
      %p257 = por %p255, %p256
      %p258 = scmp.ne.s32.totalorder %s246, %s247
      %p259 = scmp.eq.s32.totalorder %s34, 3
      %p260 = por %p258, %p259
      %p262 = scmp.ne.s32.totalorder %s247, %s261
      %p263 = scmp.eq.s32.totalorder %s34, 0
      %p264 = por %p262, %p263
      %s266 = sadd.s32 %s265, 1
      %p269 = scmp.eq.s32.totalorder %s28, 3
      %p270 = scmp.ne.s32.totalorder %s265, %s267
      %p271 = scmp.eq.s32.totalorder %s28, 0
      %p272 = por %p270, %p271
      %p273 = scmp.ne.s32.totalorder %s265, %s267
      %p274 = scmp.eq.s32.totalorder %s33, 3
      %p275 = por %p273, %p274
      %p276 = scmp.ne.s32.totalorder %s267, %s268
      %p277 = scmp.eq.s32.totalorder %s33, 0
      %p278 = por %p276, %p277
      %p279 = scmp.ne.s32.totalorder %s267, %s268
      %p280 = scmp.eq.s32.totalorder %s34, 3
      %p281 = por %p279, %p280
      %p283 = scmp.ne.s32.totalorder %s268, %s282
      %p284 = scmp.eq.s32.totalorder %s34, 0
      %p285 = por %p283, %p284
      %s287 = sadd.s32 %s286, 1
      %p290 = scmp.eq.s32.totalorder %s28, 3
      %p291 = scmp.ne.s32.totalorder %s286, %s288
      %p292 = scmp.eq.s32.totalorder %s28, 0
      %p293 = por %p291, %p292
      %p294 = scmp.ne.s32.totalorder %s286, %s288
      %p295 = scmp.eq.s32.totalorder %s33, 3
      %p296 = por %p294, %p295
      %p297 = scmp.ne.s32.totalorder %s288, %s289
      %p298 = scmp.eq.s32.totalorder %s33, 0
      %p299 = por %p297, %p298
      %p300 = scmp.ne.s32.totalorder %s288, %s289
      %p301 = scmp.eq.s32.totalorder %s34, 3
      %p302 = por %p300, %p301
      %p304 = scmp.ne.s32.totalorder %s289, %s303
      %p305 = scmp.eq.s32.totalorder %s34, 0
      %p306 = por %p304, %p305
      %s308 = sadd.s32 %s307, 1
      %p311 = scmp.eq.s32.totalorder %s28, 3
      %p312 = scmp.ne.s32.totalorder %s307, %s309
      %p313 = scmp.eq.s32.totalorder %s28, 0
      %p314 = por %p312, %p313
      %p315 = scmp.ne.s32.totalorder %s307, %s309
      %p316 = scmp.eq.s32.totalorder %s33, 3
      %p317 = por %p315, %p316
      %p318 = scmp.ne.s32.totalorder %s309, %s310
      %p319 = scmp.eq.s32.totalorder %s33, 0
      %p320 = por %p318, %p319
      %p321 = scmp.ne.s32.totalorder %s309, %s310
      %p322 = scmp.eq.s32.totalorder %s34, 3
      %p323 = por %p321, %p322
      %p325 = scmp.ne.s32.totalorder %s310, %s324
      %p326 = scmp.eq.s32.totalorder %s34, 0
      %p327 = por %p325, %p326
      %s329 = sadd.s32 %s328, 1
      %p332 = scmp.eq.s32.totalorder %s28, 3
      %p333 = scmp.ne.s32.totalorder %s328, %s330
      %p334 = scmp.eq.s32.totalorder %s28, 0
      %p335 = por %p333, %p334
      %p336 = scmp.ne.s32.totalorder %s328, %s330
      %p337 = scmp.eq.s32.totalorder %s33, 3
      %p338 = por %p336, %p337
      %p339 = scmp.ne.s32.totalorder %s330, %s331
      %p340 = scmp.eq.s32.totalorder %s33, 0
      %p341 = por %p339, %p340
      %p342 = scmp.ne.s32.totalorder %s330, %s331
      %p343 = scmp.eq.s32.totalorder %s34, 3
      %p344 = por %p342, %p343
      %p346 = scmp.ne.s32.totalorder %s331, %s345
      %p347 = scmp.eq.s32.totalorder %s34, 0
      %p348 = por %p346, %p347
      %s350 = sadd.s32 %s349, 1
      %p353 = scmp.eq.s32.totalorder %s28, 3
      %p354 = scmp.ne.s32.totalorder %s349, %s351
      %p355 = scmp.eq.s32.totalorder %s28, 0
      %p356 = por %p354, %p355
      %p357 = scmp.ne.s32.totalorder %s349, %s351
      %p358 = scmp.eq.s32.totalorder %s33, 3
      %p359 = por %p357, %p358
      %p360 = scmp.ne.s32.totalorder %s351, %s352
      %p361 = scmp.eq.s32.totalorder %s33, 0
      %p362 = por %p360, %p361
      %p363 = scmp.ne.s32.totalorder %s351, %s352
      %p364 = scmp.eq.s32.totalorder %s34, 3
      %p365 = por %p363, %p364
      %p367 = scmp.ne.s32.totalorder %s352, %s366
      %p368 = scmp.eq.s32.totalorder %s34, 0
      %p369 = por %p367, %p368
      %s371 = sadd.s32 %s370, 1
      %p374 = scmp.eq.s32.totalorder %s28, 3
      %p375 = scmp.ne.s32.totalorder %s370, %s372
      %p376 = scmp.eq.s32.totalorder %s28, 0
      %p377 = por %p375, %p376
      %p378 = scmp.ne.s32.totalorder %s370, %s372
      %p379 = scmp.eq.s32.totalorder %s33, 3
      %p380 = por %p378, %p379
      %p381 = scmp.ne.s32.totalorder %s372, %s373
      %p382 = scmp.eq.s32.totalorder %s33, 0
      %p383 = por %p381, %p382
      %p384 = scmp.ne.s32.totalorder %s372, %s373
      %p385 = scmp.eq.s32.totalorder %s34, 3
      %p386 = por %p384, %p385
      %p388 = scmp.ne.s32.totalorder %s373, %s387
      %p389 = scmp.eq.s32.totalorder %s34, 0
      %p390 = por %p388, %p389
      %s391 = ssub.s32 %s35, %s47
      %s392 = ssub.s32 %s36, %s43
      %s393 = sor.u32 %s391, %s392
      %p394 = scmp.eq.s32.totalorder %s393, 0
      %s396 = sadd.s32 %s395, 1
      %s397 = scalar_select %p394, %s395, %s396
      %p400 = pneg %p394
      %p401 = scmp.eq.s32.totalorder %s28, 3
      %p402 = por %p400, %p401
      %p403 = scmp.ne.s32.totalorder %s395, %s398
      %p404 = scmp.eq.s32.totalorder %s28, 0
      %p405 = por %p403, %p404
      %p406 = scmp.ne.s32.totalorder %s395, %s398
      %p407 = scmp.eq.s32.totalorder %s33, 3
      %p408 = por %p406, %p407
      %p409 = scmp.ne.s32.totalorder %s398, %s399
      %p410 = scmp.eq.s32.totalorder %s33, 0
      %p411 = por %p409, %p410
      %p412 = scmp.ne.s32.totalorder %s398, %s399
      %p413 = scmp.eq.s32.totalorder %s34, 3
      %p414 = por %p412, %p413
      %p416 = scmp.ne.s32.totalorder %s399, %s415
      %p417 = scmp.eq.s32.totalorder %s34, 0
      %p418 = por %p416, %p417
      %p419 = scmp.le.s32.totalorder 1, %s28
      %p420 = scmp.lt.s32.totalorder %s28, 5
      %p421 = pnand %p419, %p420
      %p422 = pneg %p421
      // Predicated region
      $region9: #{tpu_custom_call.1} parent=5 // pred_check
        _
      $region10: #{tpu_custom_call.1} parent=5 // pred_check_branch
        %424 = sbr.rel (%p421) target = $region12
      $region11: #{tpu_custom_call.1} parent=5 // pred_region
        %s425 = ssub.s32 %s28, 1
        // Predicated region
        $region13: #{tpu_custom_call.1} parent=11 // pred_check
          %p426 = pneg %p89
        $region14: #{tpu_custom_call.1} parent=11 // pred_check_branch
          %428 = sbr.rel (%p426) target = $region16
        $region15: #{tpu_custom_call.1} parent=11 // pred_region
          %430 = vsyncadd [#allocation5], 0
          %s432 = sshll.u32 %s1, 4
          %s433 = int_to_ptr.hbm [resolvable:$true] %s432
          %s434 = sshll.u32 [#allocation4], 4
          %s435 = int_to_ptr.vmem [resolvable:$true] %s434
          %437 = dma.hbm_to_vmem [thread:$0]  %s433, 16, %s435, [#allocation5]
        $region16: #{tpu_custom_call.1} parent=11 // pred_fallthru
          _
        // Predicated region
        $region17: #{tpu_custom_call.1} parent=11 // pred_check
          %p438 = pneg %p110
        $region18: #{tpu_custom_call.1} parent=11 // pred_check_branch
          %440 = sbr.rel (%p438) target = $region20
        $region19: #{tpu_custom_call.1} parent=11 // pred_region
          _
        $region20: #{tpu_custom_call.1} parent=11 // pred_fallthru
          _
        // Predicated region
        $region21: #{tpu_custom_call.1} parent=11 // pred_check
          %p441 = pneg %p131
        $region22: #{tpu_custom_call.1} parent=11 // pred_check_branch
          %443 = sbr.rel (%p441) target = $region24
        $region23: #{tpu_custom_call.1} parent=11 // pred_region
          %445 = vsyncadd [#allocation8], 0
          %s447 = sshll.u32 %s3, 4
          %s448 = int_to_ptr.hbm [resolvable:$true] %s447
          %s449 = sshll.u32 [#allocation7], 4
          %s450 = int_to_ptr.vmem [resolvable:$true] %s449
          %452 = dma.hbm_to_vmem [thread:$0]  %s448, 16, %s450, [#allocation8]
        $region24: #{tpu_custom_call.1} parent=11 // pred_fallthru
          _
        // Predicated region
        $region25: #{tpu_custom_call.1} parent=11 // pred_check
          %p453 = pneg %p152
        $region26: #{tpu_custom_call.1} parent=11 // pred_check_branch
          %455 = sbr.rel (%p453) target = $region28
        $region27: #{tpu_custom_call.1} parent=11 // pred_region
          %457 = vsyncadd [#allocation8], 0
          %s459 = sshll.u32 %s4, 4
          %s460 = int_to_ptr.hbm [resolvable:$true] %s459
          %s461 = sshll.u32 [#allocation9], 4
          %s462 = int_to_ptr.vmem [resolvable:$true] %s461
          %464 = dma.hbm_to_vmem [thread:$0]  %s460, 16, %s462, [#allocation8]
        $region28: #{tpu_custom_call.1} parent=11 // pred_fallthru
          _
        // Predicated region
        $region29: #{tpu_custom_call.1} parent=11 // pred_check
          %p465 = pneg %p173
        $region30: #{tpu_custom_call.1} parent=11 // pred_check_branch
          %467 = sbr.rel (%p465) target = $region32
        $region31: #{tpu_custom_call.1} parent=11 // pred_region
          %469 = vsyncadd [#allocation11], 0
          %s471 = sshll.u32 %s5, 4
          %s472 = int_to_ptr.hbm [resolvable:$true] %s471
          %s473 = sshll.u32 [#allocation10], 4
          %s474 = int_to_ptr.vmem [resolvable:$true] %s473
          %476 = dma.hbm_to_vmem [thread:$0]  %s472, 16, %s474, [#allocation11]
        $region32: #{tpu_custom_call.1} parent=11 // pred_fallthru
          _
        // Predicated region
        $region33: #{tpu_custom_call.1} parent=11 // pred_check
          %p477 = pneg %p194
        $region34: #{tpu_custom_call.1} parent=11 // pred_check_branch
          %479 = sbr.rel (%p477) target = $region36
        $region35: #{tpu_custom_call.1} parent=11 // pred_region
          _
        $region36: #{tpu_custom_call.1} parent=11 // pred_fallthru
          _
        // Predicated region
        $region37: #{tpu_custom_call.1} parent=11 // pred_check
          %p480 = pneg %p215
        $region38: #{tpu_custom_call.1} parent=11 // pred_check_branch
          %482 = sbr.rel (%p480) target = $region40
        $region39: #{tpu_custom_call.1} parent=11 // pred_region
          _
        $region40: #{tpu_custom_call.1} parent=11 // pred_fallthru
          _
        // Predicated region
        $region41: #{tpu_custom_call.1} parent=11 // pred_check
          %p483 = pneg %p236
        $region42: #{tpu_custom_call.1} parent=11 // pred_check_branch
          %485 = sbr.rel (%p483) target = $region44
        $region43: #{tpu_custom_call.1} parent=11 // pred_region
          _
        $region44: #{tpu_custom_call.1} parent=11 // pred_fallthru
          _
        // Predicated region
        $region45: #{tpu_custom_call.1} parent=11 // pred_check
          %p486 = pneg %p257
        $region46: #{tpu_custom_call.1} parent=11 // pred_check_branch
          %488 = sbr.rel (%p486) target = $region48
        $region47: #{tpu_custom_call.1} parent=11 // pred_region
          _
        $region48: #{tpu_custom_call.1} parent=11 // pred_fallthru
          _
        // Predicated region
        $region49: #{tpu_custom_call.1} parent=11 // pred_check
          %p489 = pneg %p278
        $region50: #{tpu_custom_call.1} parent=11 // pred_check_branch
          %491 = sbr.rel (%p489) target = $region52
        $region51: #{tpu_custom_call.1} parent=11 // pred_region
          %493 = vsyncadd [#allocation11], 0
          %s494 = sshll.u32 %s10, 4
          %s495 = int_to_ptr.hbm [resolvable:$true] %s494
          %s496 = sshll.u32 [#allocation12], 4
          %s497 = int_to_ptr.vmem [resolvable:$true] %s496
          %502 = dma.hbm_to_vmem [thread:$0]  %s495, 256, %s497, [#allocation11], 64, 64, 4
        $region52: #{tpu_custom_call.1} parent=11 // pred_fallthru
          _
        // Predicated region
        $region53: #{tpu_custom_call.1} parent=11 // pred_check
          %p503 = pneg %p299
        $region54: #{tpu_custom_call.1} parent=11 // pred_check_branch
          %505 = sbr.rel (%p503) target = $region56
        $region55: #{tpu_custom_call.1} parent=11 // pred_region
          _
        $region56: #{tpu_custom_call.1} parent=11 // pred_fallthru
          _
        // Predicated region
        $region57: #{tpu_custom_call.1} parent=11 // pred_check
          %p506 = pneg %p320
        $region58: #{tpu_custom_call.1} parent=11 // pred_check_branch
          %508 = sbr.rel (%p506) target = $region60
        $region59: #{tpu_custom_call.1} parent=11 // pred_region
          _
        $region60: #{tpu_custom_call.1} parent=11 // pred_fallthru
          _
        // Predicated region
        $region61: #{tpu_custom_call.1} parent=11 // pred_check
          %p509 = pneg %p341
        $region62: #{tpu_custom_call.1} parent=11 // pred_check_branch
          %511 = sbr.rel (%p509) target = $region64
        $region63: #{tpu_custom_call.1} parent=11 // pred_region
          _
        $region64: #{tpu_custom_call.1} parent=11 // pred_fallthru
          _
        // Predicated region
        $region65: #{tpu_custom_call.1} parent=11 // pred_check
          %p512 = pneg %p362
        $region66: #{tpu_custom_call.1} parent=11 // pred_check_branch
          %514 = sbr.rel (%p512) target = $region68
        $region67: #{tpu_custom_call.1} parent=11 // pred_region
          _
        $region68: #{tpu_custom_call.1} parent=11 // pred_fallthru
          _
        // Predicated region
        $region69: #{tpu_custom_call.1} parent=11 // pred_check
          %p515 = pneg %p383
        $region70: #{tpu_custom_call.1} parent=11 // pred_check_branch
          %517 = sbr.rel (%p515) target = $region72
        $region71: #{tpu_custom_call.1} parent=11 // pred_region
          _
        $region72: #{tpu_custom_call.1} parent=11 // pred_fallthru
          _
      $region12: #{tpu_custom_call.1} parent=5 // pred_fallthru
        _
      %p518 = scmp.lt.s32.totalorder %s28, 4
      // Predicated region
      $region73: #{tpu_custom_call.1} parent=5 // pred_check
        %p519 = pneg %p518
      $region74: #{tpu_custom_call.1} parent=5 // pred_check_branch
        %521 = sbr.rel (%p519) target = $region76
      $region75: #{tpu_custom_call.1} parent=5 // pred_region
        // Predicated region
        $region77: #{tpu_custom_call.1} parent=75 // pred_check
          %p522 = pneg %p62
        $region78: #{tpu_custom_call.1} parent=75 // pred_check_branch
          %524 = sbr.rel (%p522) target = $region80
        $region79: #{tpu_custom_call.1} parent=75 // pred_region
          %p525 = scmp.lt.s32.totalorder %s35, 1
          %s526 = scalar_select %p525, %s35, 1
          %p527 = scmp.lt.s32.totalorder %s36, 1
          %s528 = scalar_select %p527, %s36, 1
          %s529 = smul.addr %s526, 2
          %s530 = sadd.s32 %s528, %s529
          %s531 = smul.addr %s530, 8
          %s532 = scalar_lea.vmem %s0, %s531
        $region80: #{tpu_custom_call.1} parent=75 // pred_fallthru
          _
      $region76: #{tpu_custom_call.1} parent=5 // pred_fallthru
        _
      %p533 = scmp.le.s32.totalorder 1, %s28
      %p534 = scmp.lt.s32.totalorder %s28, 5
      %p535 = pnand %p533, %p534
      %p536 = pneg %p535
      // Predicated region
      $region81: #{tpu_custom_call.1} parent=5 // pred_check
        _
      $region82: #{tpu_custom_call.1} parent=5 // pred_check_branch
        %538 = sbr.rel (%p535) target = $region84
      $region83: #{tpu_custom_call.1} parent=5 // pred_region
        %s539 = ssub.s32 %s28, 1
        // Predicated region
        $region85: #{tpu_custom_call.1} parent=83 // pred_check
          %p540 = pneg %p89
        $region86: #{tpu_custom_call.1} parent=83 // pred_check_branch
          %542 = sbr.rel (%p540) target = $region88
        $region87: #{tpu_custom_call.1} parent=83 // pred_region
          %544 = dma.done [#allocation5], 16
        $region88: #{tpu_custom_call.1} parent=83 // pred_fallthru
          _
        // Predicated region
        $region89: #{tpu_custom_call.1} parent=83 // pred_check
          %p545 = pneg %p131
        $region90: #{tpu_custom_call.1} parent=83 // pred_check_branch
          %547 = sbr.rel (%p545) target = $region92
        $region91: #{tpu_custom_call.1} parent=83 // pred_region
          %549 = dma.done [#allocation8], 16
        $region92: #{tpu_custom_call.1} parent=83 // pred_fallthru
          _
        // Predicated region
        $region93: #{tpu_custom_call.1} parent=83 // pred_check
          %p550 = pneg %p152
        $region94: #{tpu_custom_call.1} parent=83 // pred_check_branch
          %552 = sbr.rel (%p550) target = $region96
        $region95: #{tpu_custom_call.1} parent=83 // pred_region
          %554 = dma.done [#allocation8], 16
        $region96: #{tpu_custom_call.1} parent=83 // pred_fallthru
          _
        // Predicated region
        $region97: #{tpu_custom_call.1} parent=83 // pred_check
          %p555 = pneg %p173
        $region98: #{tpu_custom_call.1} parent=83 // pred_check_branch
          %557 = sbr.rel (%p555) target = $region100
        $region99: #{tpu_custom_call.1} parent=83 // pred_region
          %559 = dma.done [#allocation11], 16
        $region100: #{tpu_custom_call.1} parent=83 // pred_fallthru
          _
        // Predicated region
        $region101: #{tpu_custom_call.1} parent=83 // pred_check
          %p560 = pneg %p278
        $region102: #{tpu_custom_call.1} parent=83 // pred_check_branch
          %562 = sbr.rel (%p560) target = $region104
        $region103: #{tpu_custom_call.1} parent=83 // pred_region
          %564 = dma.done [#allocation11], 256
        $region104: #{tpu_custom_call.1} parent=83 // pred_fallthru
          _
        %p565 = scmp.lt.s32.totalorder %s37, 1
        %s566 = scalar_select %p565, %s37, 1
        %p567 = scmp.lt.s32.totalorder %s38, 1
        %s568 = scalar_select %p567, %s38, 1
        %s569 = smul.addr %s566, 2
        %s570 = sadd.s32 %s568, %s569
        %s571 = smul.addr %s570, 8
        %s572 = scalar_lea.vmem %s0, %s571
        %p573 = pneg %p68
        %p574 = pneg %p65
        %p575 = pneg %p89
        %p576 = pneg %p86
        %p577 = pneg %p110
        %p578 = pneg %p107
        %p579 = pneg %p131
        %p580 = pneg %p128
        %p581 = pneg %p152
        %p582 = pneg %p149
        %p583 = pneg %p173
        %p584 = pneg %p170
        %p585 = pneg %p194
        %p586 = pneg %p191
        %p587 = pneg %p215
        %p588 = pneg %p212
        %p589 = pneg %p236
        %p590 = pneg %p233
        %p591 = pneg %p257
        %p592 = pneg %p254
        %p593 = pneg %p278
        %p594 = pneg %p275
        %p595 = pneg %p299
        %p596 = pneg %p296
        %p597 = pneg %p320
        %p598 = pneg %p317
        %p599 = pneg %p341
        %p600 = pneg %p338
        %p601 = pneg %p362
        %p602 = pneg %p359
        %p603 = pneg %p383
        %p604 = pneg %p380
        %p605 = pneg %p411
        %p606 = pneg %p408
        %s607 = sand.u32 %s398, 1
        %s608 = scalar_lea.sflag [#allocation6], %s607
        %s609 = sand.u32 %s398, 1
        %s610 = smul.addr %s609, 8
        %s611 = scalar_lea.vmem [#allocation13], %s610
        %p612 = scmp.lt.s32.totalorder %s37, 1
        %s613 = scalar_select %p612, %s37, 1
        %p614 = scmp.lt.s32.totalorder %s38, 1
        %s615 = scalar_select %p614, %s38, 1
        %s616 = smul.addr %s613, 2
        %s617 = sadd.s32 %s615, %s616
        %s618 = smul.addr %s617, 8
        %s619 = scalar_lea.vmem %s0, %s618
        %v621 = vld [vmem:[#allocation4] sm:$0x1]
        %vm622 = vcmask 253952
        %v623 = vsel %vm622, %v621, 0.0
        %624 = vadd.xlane.f32.xlu0 %v623
        %v625 = vpop.xlane.xlu0 %624
        %v626 = vrcp.pop %v625
        %v627 = vmul.f32 %v625, %v626
        %v628 = vsub.f32 1.0, %v627
        %v629 = vmul.f32 %v626, %v628
        %v630 = vadd.f32 %v626, %v629
        %vm631 = vweird.f32 %v625
        %vm632 = vweird.f32 %v626
        %vm633 = vmor %vm631, %vm632
        %v634 = vsel %vm633, %v626, %v630
        %v635 = vand.u32 2147483647, %v625
        %vm636 = vcmp.eq.f32.partialorder %v635, 8.507059e+37
        %v637 = vand.u32 %v625, 2147483648
        %v638 = vor.u32 1.1754944e-38, %v637
        %v639 = vsel %vm636, %v638, %v634
        %v640 = vmul.f32 1.0, %v639
        %v641 = vsub.f32 %v625, 1.0
        %v642 = vmax.f32 %v641, 1.0
        %v643 = vrcp.pop %v642
        %v644 = vmul.f32 %v642, %v643
        %v645 = vsub.f32 1.0, %v644
        %v646 = vmul.f32 %v643, %v645
        %v647 = vadd.f32 %v643, %v646
        %vm648 = vweird.f32 %v642
        %vm649 = vweird.f32 %v643
        %vm650 = vmor %vm648, %vm649
        %v651 = vsel %vm650, %v643, %v647
        %v652 = vand.u32 2147483647, %v642
        %vm653 = vcmp.eq.f32.partialorder %v652, 8.507059e+37
        %v654 = vand.u32 %v642, 2147483648
        %v655 = vor.u32 1.1754944e-38, %v654
        %v656 = vsel %vm653, %v655, %v651
        %v657 = vmul.f32 1.0, %v656
        %v658 = vld [vmem:[%s619] sm:$0xff]
        %v659 = vld [vmem:[%s2] sm:$0x1]
        %v660 = vld [vmem:[#allocation7] sm:$0x1]
        %v662 = vperm.slane %v621, 0
        %v664 = vmul.f32 %v658, %v662
        %vm665 = vcmask 261120
        %v666 = vsel %vm665, %v664, 0.0
        %667 = vadd.xlane.f32.xlu0 %v666
        %v668 = vpop.xlane.xlu0 %667
        %v669 = vperm.slane %v640, 0
        %v670 = vmul.f32 %v668, %v669
        %v671 = vsub.f32 %v658, %v670
        %v672 = vmul.f32 %v671, %v662
        %v673 = vmul.f32 %v672, %v672
        %v674 = vsel %vm665, %v673, 0.0
        %675 = vadd.xlane.f32.xlu0 %v674
        %v676 = vpop.xlane.xlu0 %675
        %v677 = vperm.slane %v657, 0
        %v678 = vmul.f32 %v676, %v677
        %v679 = vrsqrt.pop %v678
        %v680 = vmul.f32 %v679, %v678
        %v681 = vmul.f32 %v680, %v679
        %v682 = vmul.f32 0.5, %v681
        %v683 = vsub.f32 1.5, %v682
        %v684 = vmul.f32 %v679, %v683
        %v685 = vmul.f32 %v678, %v684
        %vm686 = vcmp.eq.f32.partialorder %v678, inf
        %v687 = vsel %vm686, %v678, %v685
        %vm688 = vcmp.eq.f32.partialorder %v678, 0.0
        %v689 = vand.u32 %v678, 2147483648
        %v690 = vsel %vm688, %v689, %v687
        %v691 = vadd.f32 %v690, 1e-05
        %v692 = vrcp.pop %v691
        %v693 = vmul.f32 %v671, %v692
        %v695 = vperm.slane %v659, 0
        %v697 = vmul.f32 %v693, %v695
        %v699 = vperm.slane %v660, 0
        %v701 = vadd.f32 %v697, %v699
        %v702 = vmul.f32 %v701, %v662
        %v703 = vpack.c.bf16 %v702, %v702
        %s704 = smul.u32 %s38, 8
        %v705 = vld [vmem:[%s8] sm:$0xf]
        %v706 = vld [vmem:[%s8 + $0x4] sm:$0xf]
        %v707 = vld [vmem:[%s8 + $0x8] sm:$0xf]
        %v708 = vld [vmem:[%s8 + $0xc] sm:$0xf]
        %v709 = vld [vmem:[%s9] sm:$0x1]
        %v711 = vperm.slane %v709, 0
        %v717 = vunpack.c.l.b16 %v705
        %v718 = vunpack.c.l.b16 %v706
        %v719 = vunpack.c.l.b16 %v707
        %v720 = vunpack.c.l.b16 %v708
        %v721 = vpack.c.b16 %v718, %v717
        %v722 = vpack.c.b16 %v720, %v719
        %v726 = vsel %vm665, %v703, 0
        %728 = vmatpush.bf16.msra.mxu0 0
        %729 = vmatpush.bf16.msra.mxu0 0
        %730 = vmatpush.bf16.msra.mxu0 0
        %731 = vmatpush.bf16.msra.mxu0 0
        %732 = vmatpush.bf16.msra.mxu0 0
        %733 = vmatpush.bf16.msra.mxu0 0
        %734 = vmatpush.bf16.msra.mxu0 %v722
        %735 = vmatpush.bf16.msra.mxu0 %v721
        %736 = vmatmul.bf16.gmra.mxu0 %v726
        %v737 = vpop.f32.mrf.mxu0
        %v738 = vadd.f32 %v711, %v737
        %v739 = vpop.f32.mrf.mxu0
        %740 = vdwg.mxu0
        %v741 = vpack.c.bf16 %v738, %v738
        %s742 = sshra.s32 %s704, 3
        %s743 = sand.u32 %s704, 7
        %s744 = smul.addr %s742, 4
        %s745 = scalar_lea.vmem [#allocation2], %s744
        %vm746 = vcmask 257024
        %747 = vst.msk [vmem:[%s745] sm:$0xf] %vm746, %v741
        %749 = vrot.lane.b32.xlu0 %v741, 96
        %v750 = vpop.permute.xlu0 %749
        %s752 = smul.addr %s742, 4
        %s753 = scalar_lea.vmem [#allocation3], %s752
        %754 = vst.msk [vmem:[%s753] sm:$0xf] %vm746, %v750
        %v755 = vld [vmem:[%s6] sm:$0xf]
        %v756 = vld [vmem:[%s6 + $0x4] sm:$0xf]
        %v757 = vld [vmem:[%s6 + $0x8] sm:$0xf]
        %v758 = vld [vmem:[%s6 + $0xc] sm:$0xf]
        %v759 = vld [vmem:[%s7] sm:$0x1]
        %v761 = vperm.slane %v759, 0
        %v767 = vunpack.c.l.b16 %v755
        %v768 = vunpack.c.l.b16 %v756
        %v769 = vunpack.c.l.b16 %v757
        %v770 = vunpack.c.l.b16 %v758
        %v771 = vpack.c.b16 %v768, %v767
        %v772 = vpack.c.b16 %v770, %v769
        %775 = vmatpush.bf16.msra.mxu0 0
        %776 = vmatpush.bf16.msra.mxu0 0
        %777 = vmatpush.bf16.msra.mxu0 0
        %778 = vmatpush.bf16.msra.mxu0 0
        %779 = vmatpush.bf16.msra.mxu0 0
        %780 = vmatpush.bf16.msra.mxu0 0
        %781 = vmatpush.bf16.msra.mxu0 %v772
        %782 = vmatpush.bf16.msra.mxu0 %v771
        %783 = vmatmul.bf16.gmra.mxu0 %v726
        %v784 = vpop.f32.mrf.mxu0
        %v785 = vadd.f32 %v761, %v784
        %v786 = vpop.f32.mrf.mxu0
        %787 = vdwg.mxu0
        %v788 = vmul.f32 %v785, 0.35355338
        %v789 = vpack.c.bf16 %v788, %v788
        %v790 = vlaneseq
        %v791 = vshrl.u32 %v790, 7
        %v792 = vlaneseq
        %v793 = vand.u32 %v792, 127
        %vm794 = vcmp.le.s32.totalorder %v793, %v791
        %v795 = vld [vmem:[%s745] sm:$0xf]
        %v796 = vld [vmem:[%s753] sm:$0xf]
        %vm797 = vcmask 64512
        %v799 = vsel %vm797, %v789, 0
        %v802 = vsel %vm797, %v795, 0
        %804 = vmatpush.bf16.xpose.msra.mxu0 0
        %805 = vmatpush.bf16.xpose.msra.mxu0 0
        %806 = vmatpush.bf16.xpose.msra.mxu0 0
        %807 = vmatpush.bf16.xpose.msra.mxu0 0
        %808 = vmatpush.bf16.xpose.msra.mxu0 0
        %809 = vmatpush.bf16.xpose.msra.mxu0 0
        %810 = vmatpush.bf16.xpose.msra.mxu0 0
        %811 = vmatpush.bf16.xpose.msra.mxu0 %v802
        %812 = vmatmul.bf16.gmra.mxu0 %v799
        %v813 = vpop.f32.mrf.mxu0
        %v814 = vadd.f32 0.0, %v813
        %v815 = vpop.f32.mrf.mxu0
        %816 = vdwg.mxu0
        %v817 = vsel %vm794, %v814, -1e+30
        %v818 = vsel %vm797, %v817, -inf
        %819 = vmax.xlane.f32.xlu0 %v818
        %v820 = vpop.xlane.xlu0 %819
        %v821 = vsub.f32 %v817, %v820
        %v822 = vmul.f32 %v821, 1.442695
        %v823 = vpow.pop %v822
        %v824 = vsel %vm797, %v823, 0.0
        %825 = vadd.xlane.f32.xlu0 %v824
        %v826 = vpop.xlane.xlu0 %825
        %v827 = vpack.c.bf16 %v823, %v823
        %v829 = vsel %vm797, %v827, 0
        %vm831 = vcmask 1043456
        %v833 = vsel %vm831, %v796, 0
        %835 = vmatpush.bf16.msra.mxu0 0
        %836 = vmatpush.bf16.msra.mxu0 0
        %837 = vmatpush.bf16.msra.mxu0 0
        %838 = vmatpush.bf16.msra.mxu0 0
        %839 = vmatpush.bf16.msra.mxu0 0
        %840 = vmatpush.bf16.msra.mxu0 0
        %841 = vmatpush.bf16.msra.mxu0 0
        %842 = vmatpush.bf16.msra.mxu0 %v833
        %843 = vmatmul.bf16.gmra.mxu0 %v829
        %v844 = vpop.f32.mrf.mxu0
        %v845 = vadd.f32 0.0, %v844
        %v846 = vpop.f32.mrf.mxu0
        %847 = vdwg.mxu0
        // While loop
        $region105: #{tpu_custom_call.1} parent=83 // loop_pre_header
          _
        $region106: #{tpu_custom_call.1} parent=83 // loop_header
          %s849 = sphi 0, %s851
          %p850 = scmp.ge.s32.totalorder %s849, %s38
          %v854 = vphi %v820, %v885
          %v855 = vphi %v826, %v896
          %v856 = vphi %v845, %v918
        $region107: #{tpu_custom_call.1} parent=83 // loop_header_branch
          %853 = sbr.rel (%p850) target = $region111
        $region108: #{tpu_custom_call.1} parent=83 // loop_body
          %s857 = smul.u32 %s849, 8
          %s858 = sshra.s32 %s857, 3
          %s859 = sand.u32 %s857, 7
          %s860 = smul.addr %s858, 4
          %s861 = scalar_lea.vmem [#allocation2], %s860
          %v862 = vld [vmem:[%s861] sm:$0xf]
          %s863 = smul.addr %s858, 4
          %s864 = scalar_lea.vmem [#allocation3], %s863
          %v865 = vld [vmem:[%s864] sm:$0xf]
          %v867 = vsel %vm797, %v862, 0
          %869 = vmatpush.bf16.xpose.msra.mxu0 0
          %870 = vmatpush.bf16.xpose.msra.mxu0 0
          %871 = vmatpush.bf16.xpose.msra.mxu0 0
          %872 = vmatpush.bf16.xpose.msra.mxu0 0
          %873 = vmatpush.bf16.xpose.msra.mxu0 0
          %874 = vmatpush.bf16.xpose.msra.mxu0 0
          %875 = vmatpush.bf16.xpose.msra.mxu0 0
          %876 = vmatpush.bf16.xpose.msra.mxu0 %v867
          %877 = vmatmul.bf16.gmra.mxu0 %v799
          %v878 = vpop.f32.mrf.mxu0
          %v879 = vadd.f32 0.0, %v878
          %v880 = vpop.f32.mrf.mxu0
          %881 = vdwg.mxu0
          %v882 = vsel %vm797, %v879, -inf
          %883 = vmax.xlane.f32.xlu0 %v882
          %v884 = vpop.xlane.xlu0 %883
          %v885 = vmax.f32 %v854, %v884
          %v886 = vsub.f32 %v854, %v885
          %v887 = vmul.f32 %v886, 1.442695
          %v888 = vpow.pop %v887
          %v889 = vsub.f32 %v879, %v885
          %v890 = vmul.f32 %v889, 1.442695
          %v891 = vpow.pop %v890
          %v892 = vmul.f32 %v888, %v855
          %v893 = vsel %vm797, %v891, 0.0
          %894 = vadd.xlane.f32.xlu0 %v893
          %v895 = vpop.xlane.xlu0 %894
          %v896 = vadd.f32 %v892, %v895
          %v897 = vmul.f32 %v888, %v856
          %v898 = vpack.c.bf16 %v891, %v891
          %v900 = vsel %vm797, %v898, 0
          %v903 = vsel %vm831, %v865, 0
          %905 = vmatpush.bf16.msra.mxu0 0
          %906 = vmatpush.bf16.msra.mxu0 0
          %907 = vmatpush.bf16.msra.mxu0 0
          %908 = vmatpush.bf16.msra.mxu0 0
          %909 = vmatpush.bf16.msra.mxu0 0
          %910 = vmatpush.bf16.msra.mxu0 0
          %911 = vmatpush.bf16.msra.mxu0 0
          %912 = vmatpush.bf16.msra.mxu0 %v903
          %913 = vmatmul.bf16.gmra.mxu0 %v900
          %v914 = vpop.f32.mrf.mxu0
          %v915 = vadd.f32 0.0, %v914
          %v916 = vpop.f32.mrf.mxu0
          %917 = vdwg.mxu0
          %v918 = vadd.f32 %v897, %v915
        $region109: #{tpu_custom_call.1} parent=83 // loop_footer
          %s851 = sadd.s32 %s849, 1
        $region110: #{tpu_custom_call.1} parent=83 // loop_footer_branch
          %848 = sbr.rel target = $region106
        $region111: #{tpu_custom_call.1} parent=83 // loop_exit
          _
        %v919 = vrcp.pop %v855
        %v920 = vmul.f32 %v856, %v919
        %v921 = vpack.c.bf16 %v920, %v920
        %v922 = vld [vmem:[#allocation12] sm:$0xf]
        %v924 = vunpack.c.l.b16 %v789
        %v925 = vpack.c.b16 %v924, %v924
        %926 = vrot.lane.b32.xlu0 %v925, 120
        %v927 = vpop.permute.xlu0 %926
        %v929 = vunpack.c.l.b16 %v795
        %v930 = vpack.c.b16 %v929, %v929
        %931 = vrot.lane.b32.xlu0 %v930, 120
        %v932 = vpop.permute.xlu0 %931
        %v934 = vsel %vm797, %v927, 0
        %v937 = vsel %vm797, %v932, 0
        %939 = vmatpush.bf16.xpose.msra.mxu0 0
        %940 = vmatpush.bf16.xpose.msra.mxu0 0
        %941 = vmatpush.bf16.xpose.msra.mxu0 0
        %942 = vmatpush.bf16.xpose.msra.mxu0 0
        %943 = vmatpush.bf16.xpose.msra.mxu0 0
        %944 = vmatpush.bf16.xpose.msra.mxu0 0
        %945 = vmatpush.bf16.xpose.msra.mxu0 0
        %946 = vmatpush.bf16.xpose.msra.mxu0 %v937
        %947 = vmatmul.bf16.gmra.mxu0 %v934
        %v948 = vpop.f32.mrf.mxu0
        %v949 = vadd.f32 0.0, %v948
        %v950 = vpop.f32.mrf.mxu0
        %951 = vdwg.mxu0
        %v952 = vsel %vm794, %v949, -1e+30
        %v953 = vsel %vm797, %v952, -inf
        %954 = vmax.xlane.f32.xlu0 %v953
        %v955 = vpop.xlane.xlu0 %954
        %v956 = vsub.f32 %v952, %v955
        %v957 = vmul.f32 %v956, 1.442695
        %v958 = vpow.pop %v957
        %v959 = vsel %vm797, %v958, 0.0
        %960 = vadd.xlane.f32.xlu0 %v959
        %v961 = vpop.xlane.xlu0 %960
        %v962 = vpack.c.bf16 %v958, %v958
        %v964 = vunpack.c.l.b16 %v796
        %v965 = vpack.c.b16 %v964, %v964
        %966 = vrot.lane.b32.xlu0 %v965, 120
        %v967 = vpop.permute.xlu0 %966
        %v969 = vsel %vm797, %v962, 0
        %v972 = vsel %vm831, %v967, 0
        %974 = vmatpush.bf16.msra.mxu0 0
        %975 = vmatpush.bf16.msra.mxu0 0
        %976 = vmatpush.bf16.msra.mxu0 0
        %977 = vmatpush.bf16.msra.mxu0 0
        %978 = vmatpush.bf16.msra.mxu0 0
        %979 = vmatpush.bf16.msra.mxu0 0
        %980 = vmatpush.bf16.msra.mxu0 0
        %981 = vmatpush.bf16.msra.mxu0 %v972
        %982 = vmatmul.bf16.gmra.mxu0 %v969
        %v983 = vpop.f32.mrf.mxu0
        %v984 = vadd.f32 0.0, %v983
        %v985 = vpop.f32.mrf.mxu0
        %986 = vdwg.mxu0
        // While loop
        $region112: #{tpu_custom_call.1} parent=83 // loop_pre_header
          _
        $region113: #{tpu_custom_call.1} parent=83 // loop_header
          %s988 = sphi 0, %s990
          %p989 = scmp.ge.s32.totalorder %s988, %s38
          %v993 = vphi %v955, %v1029
          %v994 = vphi %v961, %v1040
          %v995 = vphi %v984, %v1067
        $region114: #{tpu_custom_call.1} parent=83 // loop_header_branch
          %992 = sbr.rel (%p989) target = $region118
        $region115: #{tpu_custom_call.1} parent=83 // loop_body
          %s996 = smul.u32 %s988, 8
          %s997 = sshra.s32 %s996, 3
          %s998 = sand.u32 %s996, 7
          %s999 = smul.addr %s997, 4
          %s1000 = scalar_lea.vmem [#allocation2], %s999
          %v1001 = vld [vmem:[%s1000] sm:$0xf]
          %s1002 = smul.addr %s997, 4
          %s1003 = scalar_lea.vmem [#allocation3], %s1002
          %v1004 = vld [vmem:[%s1003] sm:$0xf]
          %v1006 = vunpack.c.l.b16 %v1001
          %v1007 = vpack.c.b16 %v1006, %v1006
          %1008 = vrot.lane.b32.xlu0 %v1007, 120
          %v1009 = vpop.permute.xlu0 %1008
          %v1011 = vsel %vm797, %v1009, 0
          %1013 = vmatpush.bf16.xpose.msra.mxu0 0
          %1014 = vmatpush.bf16.xpose.msra.mxu0 0
          %1015 = vmatpush.bf16.xpose.msra.mxu0 0
          %1016 = vmatpush.bf16.xpose.msra.mxu0 0
          %1017 = vmatpush.bf16.xpose.msra.mxu0 0
          %1018 = vmatpush.bf16.xpose.msra.mxu0 0
          %1019 = vmatpush.bf16.xpose.msra.mxu0 0
          %1020 = vmatpush.bf16.xpose.msra.mxu0 %v1011
          %1021 = vmatmul.bf16.gmra.mxu0 %v934
          %v1022 = vpop.f32.mrf.mxu0
          %v1023 = vadd.f32 0.0, %v1022
          %v1024 = vpop.f32.mrf.mxu0
          %1025 = vdwg.mxu0
          %v1026 = vsel %vm797, %v1023, -inf
          %1027 = vmax.xlane.f32.xlu0 %v1026
          %v1028 = vpop.xlane.xlu0 %1027
          %v1029 = vmax.f32 %v993, %v1028
          %v1030 = vsub.f32 %v993, %v1029
          %v1031 = vmul.f32 %v1030, 1.442695
          %v1032 = vpow.pop %v1031
          %v1033 = vsub.f32 %v1023, %v1029
          %v1034 = vmul.f32 %v1033, 1.442695
          %v1035 = vpow.pop %v1034
          %v1036 = vmul.f32 %v1032, %v994
          %v1037 = vsel %vm797, %v1035, 0.0
          %1038 = vadd.xlane.f32.xlu0 %v1037
          %v1039 = vpop.xlane.xlu0 %1038
          %v1040 = vadd.f32 %v1036, %v1039
          %v1041 = vmul.f32 %v1032, %v995
          %v1042 = vpack.c.bf16 %v1035, %v1035
          %v1044 = vunpack.c.l.b16 %v1004
          %v1045 = vpack.c.b16 %v1044, %v1044
          %1046 = vrot.lane.b32.xlu0 %v1045, 120
          %v1047 = vpop.permute.xlu0 %1046
          %v1049 = vsel %vm797, %v1042, 0
          %v1052 = vsel %vm831, %v1047, 0
          %1054 = vmatpush.bf16.msra.mxu0 0
          %1055 = vmatpush.bf16.msra.mxu0 0
          %1056 = vmatpush.bf16.msra.mxu0 0
          %1057 = vmatpush.bf16.msra.mxu0 0
          %1058 = vmatpush.bf16.msra.mxu0 0
          %1059 = vmatpush.bf16.msra.mxu0 0
          %1060 = vmatpush.bf16.msra.mxu0 0
          %1061 = vmatpush.bf16.msra.mxu0 %v1052
          %1062 = vmatmul.bf16.gmra.mxu0 %v1049
          %v1063 = vpop.f32.mrf.mxu0
          %v1064 = vadd.f32 0.0, %v1063
          %v1065 = vpop.f32.mrf.mxu0
          %1066 = vdwg.mxu0
          %v1067 = vadd.f32 %v1041, %v1064
        $region116: #{tpu_custom_call.1} parent=83 // loop_footer
          %s990 = sadd.s32 %s988, 1
        $region117: #{tpu_custom_call.1} parent=83 // loop_footer_branch
          %987 = sbr.rel target = $region113
        $region118: #{tpu_custom_call.1} parent=83 // loop_exit
          _
        %v1068 = vrcp.pop %v994
        %v1069 = vmul.f32 %v995, %v1068
        %v1070 = vpack.c.bf16 %v1069, %v1069
        %v1071 = vld [vmem:[#allocation12 + $0x4] sm:$0xf]
        %v1073 = vsel %vm797, %v1070, 0
        %v1076 = vsel %vm831, %v1071, 0
        %1078 = vmatpush.bf16.msra.mxu0 0
        %1079 = vmatpush.bf16.msra.mxu0 0
        %1080 = vmatpush.bf16.msra.mxu0 0
        %1081 = vmatpush.bf16.msra.mxu0 0
        %1082 = vmatpush.bf16.msra.mxu0 0
        %1083 = vmatpush.bf16.msra.mxu0 0
        %1084 = vmatpush.bf16.msra.mxu0 0
        %1085 = vmatpush.bf16.msra.mxu0 %v1076
        %1086 = vmatmul.bf16.gmra.mxu0 %v1073
        %v1087 = vpop.f32.mrf.mxu0
        %v1088 = vadd.f32 0.0, %v1087
        %v1089 = vpop.f32.mrf.mxu0
        %1090 = vdwg.mxu0
        %v1092 = vsel %vm797, %v921, 0
        %v1095 = vsel %vm831, %v922, 0
        %1097 = vmatpush.bf16.msra.mxu0 0
        %1098 = vmatpush.bf16.msra.mxu0 0
        %1099 = vmatpush.bf16.msra.mxu0 0
        %1100 = vmatpush.bf16.msra.mxu0 0
        %1101 = vmatpush.bf16.msra.mxu0 0
        %1102 = vmatpush.bf16.msra.mxu0 0
        %1103 = vmatpush.bf16.msra.mxu0 0
        %1104 = vmatpush.bf16.msra.mxu0 %v1095
        %1105 = vmatmul.bf16.gmra.mxu0 %v1092
        %v1106 = vpop.f32.mrf.mxu0
        %v1107 = vadd.f32 %v1088, %v1106
        %v1108 = vpop.f32.mrf.mxu0
        %1109 = vdwg.mxu0
        %1110 = vrot.lane.b32.xlu0 %v925, 112
        %v1111 = vpop.permute.xlu0 %1110
        %1112 = vrot.lane.b32.xlu0 %v930, 112
        %v1113 = vpop.permute.xlu0 %1112
        %v1115 = vsel %vm797, %v1111, 0
        %v1118 = vsel %vm797, %v1113, 0
        %1120 = vmatpush.bf16.xpose.msra.mxu0 0
        %1121 = vmatpush.bf16.xpose.msra.mxu0 0
        %1122 = vmatpush.bf16.xpose.msra.mxu0 0
        %1123 = vmatpush.bf16.xpose.msra.mxu0 0
        %1124 = vmatpush.bf16.xpose.msra.mxu0 0
        %1125 = vmatpush.bf16.xpose.msra.mxu0 0
        %1126 = vmatpush.bf16.xpose.msra.mxu0 0
        %1127 = vmatpush.bf16.xpose.msra.mxu0 %v1118
        %1128 = vmatmul.bf16.gmra.mxu0 %v1115
        %v1129 = vpop.f32.mrf.mxu0
        %v1130 = vadd.f32 0.0, %v1129
        %v1131 = vpop.f32.mrf.mxu0
        %1132 = vdwg.mxu0
        %v1133 = vsel %vm794, %v1130, -1e+30
        %v1134 = vsel %vm797, %v1133, -inf
        %1135 = vmax.xlane.f32.xlu0 %v1134
        %v1136 = vpop.xlane.xlu0 %1135
        %v1137 = vsub.f32 %v1133, %v1136
        %v1138 = vmul.f32 %v1137, 1.442695
        %v1139 = vpow.pop %v1138
        %v1140 = vsel %vm797, %v1139, 0.0
        %1141 = vadd.xlane.f32.xlu0 %v1140
        %v1142 = vpop.xlane.xlu0 %1141
        %v1143 = vpack.c.bf16 %v1139, %v1139
        %1144 = vrot.lane.b32.xlu0 %v965, 112
        %v1145 = vpop.permute.xlu0 %1144
        %v1147 = vsel %vm797, %v1143, 0
        %v1150 = vsel %vm831, %v1145, 0
        %1152 = vmatpush.bf16.msra.mxu0 0
        %1153 = vmatpush.bf16.msra.mxu0 0
        %1154 = vmatpush.bf16.msra.mxu0 0
        %1155 = vmatpush.bf16.msra.mxu0 0
        %1156 = vmatpush.bf16.msra.mxu0 0
        %1157 = vmatpush.bf16.msra.mxu0 0
        %1158 = vmatpush.bf16.msra.mxu0 0
        %1159 = vmatpush.bf16.msra.mxu0 %v1150
        %1160 = vmatmul.bf16.gmra.mxu0 %v1147
        %v1161 = vpop.f32.mrf.mxu0
        %v1162 = vadd.f32 0.0, %v1161
        %v1163 = vpop.f32.mrf.mxu0
        %1164 = vdwg.mxu0
        // While loop
        $region119: #{tpu_custom_call.1} parent=83 // loop_pre_header
          _
        $region120: #{tpu_custom_call.1} parent=83 // loop_header
          %s1166 = sphi 0, %s1168
          %p1167 = scmp.ge.s32.totalorder %s1166, %s38
          %v1171 = vphi %v1136, %v1207
          %v1172 = vphi %v1142, %v1218
          %v1173 = vphi %v1162, %v1245
        $region121: #{tpu_custom_call.1} parent=83 // loop_header_branch
          %1170 = sbr.rel (%p1167) target = $region125
        $region122: #{tpu_custom_call.1} parent=83 // loop_body
          %s1174 = smul.u32 %s1166, 8
          %s1175 = sshra.s32 %s1174, 3
          %s1176 = sand.u32 %s1174, 7
          %s1177 = smul.addr %s1175, 4
          %s1178 = scalar_lea.vmem [#allocation2], %s1177
          %v1179 = vld [vmem:[%s1178] sm:$0xf]
          %s1180 = smul.addr %s1175, 4
          %s1181 = scalar_lea.vmem [#allocation3], %s1180
          %v1182 = vld [vmem:[%s1181] sm:$0xf]
          %v1184 = vunpack.c.l.b16 %v1179
          %v1185 = vpack.c.b16 %v1184, %v1184
          %1186 = vrot.lane.b32.xlu0 %v1185, 112
          %v1187 = vpop.permute.xlu0 %1186
          %v1189 = vsel %vm797, %v1187, 0
          %1191 = vmatpush.bf16.xpose.msra.mxu0 0
          %1192 = vmatpush.bf16.xpose.msra.mxu0 0
          %1193 = vmatpush.bf16.xpose.msra.mxu0 0
          %1194 = vmatpush.bf16.xpose.msra.mxu0 0
          %1195 = vmatpush.bf16.xpose.msra.mxu0 0
          %1196 = vmatpush.bf16.xpose.msra.mxu0 0
          %1197 = vmatpush.bf16.xpose.msra.mxu0 0
          %1198 = vmatpush.bf16.xpose.msra.mxu0 %v1189
          %1199 = vmatmul.bf16.gmra.mxu0 %v1115
          %v1200 = vpop.f32.mrf.mxu0
          %v1201 = vadd.f32 0.0, %v1200
          %v1202 = vpop.f32.mrf.mxu0
          %1203 = vdwg.mxu0
          %v1204 = vsel %vm797, %v1201, -inf
          %1205 = vmax.xlane.f32.xlu0 %v1204
          %v1206 = vpop.xlane.xlu0 %1205
          %v1207 = vmax.f32 %v1171, %v1206
          %v1208 = vsub.f32 %v1171, %v1207
          %v1209 = vmul.f32 %v1208, 1.442695
          %v1210 = vpow.pop %v1209
          %v1211 = vsub.f32 %v1201, %v1207
          %v1212 = vmul.f32 %v1211, 1.442695
          %v1213 = vpow.pop %v1212
          %v1214 = vmul.f32 %v1210, %v1172
          %v1215 = vsel %vm797, %v1213, 0.0
          %1216 = vadd.xlane.f32.xlu0 %v1215
          %v1217 = vpop.xlane.xlu0 %1216
          %v1218 = vadd.f32 %v1214, %v1217
          %v1219 = vmul.f32 %v1210, %v1173
          %v1220 = vpack.c.bf16 %v1213, %v1213
          %v1222 = vunpack.c.l.b16 %v1182
          %v1223 = vpack.c.b16 %v1222, %v1222
          %1224 = vrot.lane.b32.xlu0 %v1223, 112
          %v1225 = vpop.permute.xlu0 %1224
          %v1227 = vsel %vm797, %v1220, 0
          %v1230 = vsel %vm831, %v1225, 0
          %1232 = vmatpush.bf16.msra.mxu0 0
          %1233 = vmatpush.bf16.msra.mxu0 0
          %1234 = vmatpush.bf16.msra.mxu0 0
          %1235 = vmatpush.bf16.msra.mxu0 0
          %1236 = vmatpush.bf16.msra.mxu0 0
          %1237 = vmatpush.bf16.msra.mxu0 0
          %1238 = vmatpush.bf16.msra.mxu0 0
          %1239 = vmatpush.bf16.msra.mxu0 %v1230
          %1240 = vmatmul.bf16.gmra.mxu0 %v1227
          %v1241 = vpop.f32.mrf.mxu0
          %v1242 = vadd.f32 0.0, %v1241
          %v1243 = vpop.f32.mrf.mxu0
          %1244 = vdwg.mxu0
          %v1245 = vadd.f32 %v1219, %v1242
        $region123: #{tpu_custom_call.1} parent=83 // loop_footer
          %s1168 = sadd.s32 %s1166, 1
        $region124: #{tpu_custom_call.1} parent=83 // loop_footer_branch
          %1165 = sbr.rel target = $region120
        $region125: #{tpu_custom_call.1} parent=83 // loop_exit
          _
        %v1246 = vrcp.pop %v1172
        %v1247 = vmul.f32 %v1173, %v1246
        %v1248 = vpack.c.bf16 %v1247, %v1247
        %v1249 = vld [vmem:[#allocation12 + $0x8] sm:$0xf]
        %v1251 = vsel %vm797, %v1248, 0
        %v1254 = vsel %vm831, %v1249, 0
        %1256 = vmatpush.bf16.msra.mxu0 0
        %1257 = vmatpush.bf16.msra.mxu0 0
        %1258 = vmatpush.bf16.msra.mxu0 0
        %1259 = vmatpush.bf16.msra.mxu0 0
        %1260 = vmatpush.bf16.msra.mxu0 0
        %1261 = vmatpush.bf16.msra.mxu0 0
        %1262 = vmatpush.bf16.msra.mxu0 0
        %1263 = vmatpush.bf16.msra.mxu0 %v1254
        %1264 = vmatmul.bf16.gmra.mxu0 %v1251
        %v1265 = vpop.f32.mrf.mxu0
        %v1266 = vadd.f32 0.0, %v1265
        %v1267 = vpop.f32.mrf.mxu0
        %1268 = vdwg.mxu0
        %v1269 = vadd.f32 %v1107, %v1266
        %1270 = vrot.lane.b32.xlu0 %v925, 104
        %v1271 = vpop.permute.xlu0 %1270
        %1272 = vrot.lane.b32.xlu0 %v930, 104
        %v1273 = vpop.permute.xlu0 %1272
        %v1275 = vsel %vm797, %v1271, 0
        %v1278 = vsel %vm797, %v1273, 0
        %1280 = vmatpush.bf16.xpose.msra.mxu0 0
        %1281 = vmatpush.bf16.xpose.msra.mxu0 0
        %1282 = vmatpush.bf16.xpose.msra.mxu0 0
        %1283 = vmatpush.bf16.xpose.msra.mxu0 0
        %1284 = vmatpush.bf16.xpose.msra.mxu0 0
        %1285 = vmatpush.bf16.xpose.msra.mxu0 0
        %1286 = vmatpush.bf16.xpose.msra.mxu0 0
        %1287 = vmatpush.bf16.xpose.msra.mxu0 %v1278
        %1288 = vmatmul.bf16.gmra.mxu0 %v1275
        %v1289 = vpop.f32.mrf.mxu0
        %v1290 = vadd.f32 0.0, %v1289
        %v1291 = vpop.f32.mrf.mxu0
        %1292 = vdwg.mxu0
        %v1293 = vsel %vm794, %v1290, -1e+30
        %v1294 = vsel %vm797, %v1293, -inf
        %1295 = vmax.xlane.f32.xlu0 %v1294
        %v1296 = vpop.xlane.xlu0 %1295
        %v1297 = vsub.f32 %v1293, %v1296
        %v1298 = vmul.f32 %v1297, 1.442695
        %v1299 = vpow.pop %v1298
        %v1300 = vsel %vm797, %v1299, 0.0
        %1301 = vadd.xlane.f32.xlu0 %v1300
        %v1302 = vpop.xlane.xlu0 %1301
        %v1303 = vpack.c.bf16 %v1299, %v1299
        %1304 = vrot.lane.b32.xlu0 %v965, 104
        %v1305 = vpop.permute.xlu0 %1304
        %v1307 = vsel %vm797, %v1303, 0
        %v1310 = vsel %vm831, %v1305, 0
        %1312 = vmatpush.bf16.msra.mxu0 0
        %1313 = vmatpush.bf16.msra.mxu0 0
        %1314 = vmatpush.bf16.msra.mxu0 0
        %1315 = vmatpush.bf16.msra.mxu0 0
        %1316 = vmatpush.bf16.msra.mxu0 0
        %1317 = vmatpush.bf16.msra.mxu0 0
        %1318 = vmatpush.bf16.msra.mxu0 0
        %1319 = vmatpush.bf16.msra.mxu0 %v1310
        %1320 = vmatmul.bf16.gmra.mxu0 %v1307
        %v1321 = vpop.f32.mrf.mxu0
        %v1322 = vadd.f32 0.0, %v1321
        %v1323 = vpop.f32.mrf.mxu0
        %1324 = vdwg.mxu0
        // While loop
        $region126: #{tpu_custom_call.1} parent=83 // loop_pre_header
          _
        $region127: #{tpu_custom_call.1} parent=83 // loop_header
          %s1326 = sphi 0, %s1328
          %p1327 = scmp.ge.s32.totalorder %s1326, %s38
          %v1331 = vphi %v1296, %v1367
          %v1332 = vphi %v1302, %v1378
          %v1333 = vphi %v1322, %v1405
        $region128: #{tpu_custom_call.1} parent=83 // loop_header_branch
          %1330 = sbr.rel (%p1327) target = $region132
        $region129: #{tpu_custom_call.1} parent=83 // loop_body
          %s1334 = smul.u32 %s1326, 8
          %s1335 = sshra.s32 %s1334, 3
          %s1336 = sand.u32 %s1334, 7
          %s1337 = smul.addr %s1335, 4
          %s1338 = scalar_lea.vmem [#allocation2], %s1337
          %v1339 = vld [vmem:[%s1338] sm:$0xf]
          %s1340 = smul.addr %s1335, 4
          %s1341 = scalar_lea.vmem [#allocation3], %s1340
          %v1342 = vld [vmem:[%s1341] sm:$0xf]
          %v1344 = vunpack.c.l.b16 %v1339
          %v1345 = vpack.c.b16 %v1344, %v1344
          %1346 = vrot.lane.b32.xlu0 %v1345, 104
          %v1347 = vpop.permute.xlu0 %1346
          %v1349 = vsel %vm797, %v1347, 0
          %1351 = vmatpush.bf16.xpose.msra.mxu0 0
          %1352 = vmatpush.bf16.xpose.msra.mxu0 0
          %1353 = vmatpush.bf16.xpose.msra.mxu0 0
          %1354 = vmatpush.bf16.xpose.msra.mxu0 0
          %1355 = vmatpush.bf16.xpose.msra.mxu0 0
          %1356 = vmatpush.bf16.xpose.msra.mxu0 0
          %1357 = vmatpush.bf16.xpose.msra.mxu0 0
          %1358 = vmatpush.bf16.xpose.msra.mxu0 %v1349
          %1359 = vmatmul.bf16.gmra.mxu0 %v1275
          %v1360 = vpop.f32.mrf.mxu0
          %v1361 = vadd.f32 0.0, %v1360
          %v1362 = vpop.f32.mrf.mxu0
          %1363 = vdwg.mxu0
          %v1364 = vsel %vm797, %v1361, -inf
          %1365 = vmax.xlane.f32.xlu0 %v1364
          %v1366 = vpop.xlane.xlu0 %1365
          %v1367 = vmax.f32 %v1331, %v1366
          %v1368 = vsub.f32 %v1331, %v1367
          %v1369 = vmul.f32 %v1368, 1.442695
          %v1370 = vpow.pop %v1369
          %v1371 = vsub.f32 %v1361, %v1367
          %v1372 = vmul.f32 %v1371, 1.442695
          %v1373 = vpow.pop %v1372
          %v1374 = vmul.f32 %v1370, %v1332
          %v1375 = vsel %vm797, %v1373, 0.0
          %1376 = vadd.xlane.f32.xlu0 %v1375
          %v1377 = vpop.xlane.xlu0 %1376
          %v1378 = vadd.f32 %v1374, %v1377
          %v1379 = vmul.f32 %v1370, %v1333
          %v1380 = vpack.c.bf16 %v1373, %v1373
          %v1382 = vunpack.c.l.b16 %v1342
          %v1383 = vpack.c.b16 %v1382, %v1382
          %1384 = vrot.lane.b32.xlu0 %v1383, 104
          %v1385 = vpop.permute.xlu0 %1384
          %v1387 = vsel %vm797, %v1380, 0
          %v1390 = vsel %vm831, %v1385, 0
          %1392 = vmatpush.bf16.msra.mxu0 0
          %1393 = vmatpush.bf16.msra.mxu0 0
          %1394 = vmatpush.bf16.msra.mxu0 0
          %1395 = vmatpush.bf16.msra.mxu0 0
          %1396 = vmatpush.bf16.msra.mxu0 0
          %1397 = vmatpush.bf16.msra.mxu0 0
          %1398 = vmatpush.bf16.msra.mxu0 0
          %1399 = vmatpush.bf16.msra.mxu0 %v1390
          %1400 = vmatmul.bf16.gmra.mxu0 %v1387
          %v1401 = vpop.f32.mrf.mxu0
          %v1402 = vadd.f32 0.0, %v1401
          %v1403 = vpop.f32.mrf.mxu0
          %1404 = vdwg.mxu0
          %v1405 = vadd.f32 %v1379, %v1402
        $region130: #{tpu_custom_call.1} parent=83 // loop_footer
          %s1328 = sadd.s32 %s1326, 1
        $region131: #{tpu_custom_call.1} parent=83 // loop_footer_branch
          %1325 = sbr.rel target = $region127
        $region132: #{tpu_custom_call.1} parent=83 // loop_exit
          _
        %v1406 = vrcp.pop %v1332
        %v1407 = vmul.f32 %v1333, %v1406
        %v1408 = vpack.c.bf16 %v1407, %v1407
        %v1409 = vld [vmem:[#allocation12 + $0xc] sm:$0xf]
        %v1411 = vsel %vm797, %v1408, 0
        %v1414 = vsel %vm831, %v1409, 0
        %1416 = vmatpush.bf16.msra.mxu0 0
        %1417 = vmatpush.bf16.msra.mxu0 0
        %1418 = vmatpush.bf16.msra.mxu0 0
        %1419 = vmatpush.bf16.msra.mxu0 0
        %1420 = vmatpush.bf16.msra.mxu0 0
        %1421 = vmatpush.bf16.msra.mxu0 0
        %1422 = vmatpush.bf16.msra.mxu0 0
        %1423 = vmatpush.bf16.msra.mxu0 %v1414
        %1424 = vmatmul.bf16.gmra.mxu0 %v1411
        %v1425 = vpop.f32.mrf.mxu0
        %v1426 = vadd.f32 0.0, %v1425
        %v1427 = vpop.f32.mrf.mxu0
        %1428 = vdwg.mxu0
        %v1429 = vadd.f32 %v1269, %v1426
        %v1430 = vld [vmem:[%s11] sm:$0x1]
        %v1432 = vperm.slane %v1430, 0
        %v1434 = vadd.f32 %v1429, %v1432
        %v1435 = vadd.f32 %v1434, %v658
        %v1436 = vld [vmem:[#allocation9] sm:$0x1]
        %v1437 = vld [vmem:[#allocation10] sm:$0x1]
        %v1438 = vmul.f32 %v1435, %v662
        %v1439 = vsel %vm665, %v1438, 0.0
        %1440 = vadd.xlane.f32.xlu0 %v1439
        %v1441 = vpop.xlane.xlu0 %1440
        %v1442 = vmul.f32 %v1441, %v669
        %v1443 = vsub.f32 %v1435, %v1442
        %v1444 = vmul.f32 %v1443, %v662
        %v1445 = vmul.f32 %v1444, %v1444
        %v1446 = vsel %vm665, %v1445, 0.0
        %1447 = vadd.xlane.f32.xlu0 %v1446
        %v1448 = vpop.xlane.xlu0 %1447
        %v1449 = vmul.f32 %v1448, %v677
        %v1450 = vrsqrt.pop %v1449
        %v1451 = vmul.f32 %v1450, %v1449
        %v1452 = vmul.f32 %v1451, %v1450
        %v1453 = vmul.f32 0.5, %v1452
        %v1454 = vsub.f32 1.5, %v1453
        %v1455 = vmul.f32 %v1450, %v1454
        %v1456 = vmul.f32 %v1449, %v1455
        %vm1457 = vcmp.eq.f32.partialorder %v1449, inf
        %v1458 = vsel %vm1457, %v1449, %v1456
        %vm1459 = vcmp.eq.f32.partialorder %v1449, 0.0
        %v1460 = vand.u32 %v1449, 2147483648
        %v1461 = vsel %vm1459, %v1460, %v1458
        %v1462 = vadd.f32 %v1461, 1e-05
        %v1463 = vrcp.pop %v1462
        %v1464 = vmul.f32 %v1443, %v1463
        %v1466 = vperm.slane %v1436, 0
        %v1468 = vmul.f32 %v1464, %v1466
        %v1470 = vperm.slane %v1437, 0
        %v1472 = vadd.f32 %v1468, %v1470
        %v1473 = vmul.f32 %v1472, %v662
        %v1474 = vpack.c.bf16 %v1473, %v1473
        %v1475 = vld [vmem:[%s12] sm:$0xf]
        %v1476 = vld [vmem:[%s12 + $0x4] sm:$0xf]
        %v1477 = vld [vmem:[%s12 + $0x8] sm:$0xf]
        %v1478 = vld [vmem:[%s12 + $0xc] sm:$0xf]
        %v1479 = vld [vmem:[%s13] sm:$0x1]
        %v1481 = vperm.slane %v1479, 0
        %v1487 = vunpack.c.l.b16 %v1475
        %v1488 = vunpack.c.l.b16 %v1476
        %v1489 = vunpack.c.l.b16 %v1477
        %v1490 = vunpack.c.l.b16 %v1478
        %v1491 = vpack.c.b16 %v1488, %v1487
        %v1492 = vpack.c.b16 %v1490, %v1489
        %v1496 = vsel %vm665, %v1474, 0
        %1498 = vmatpush.bf16.msra.mxu0 0
        %1499 = vmatpush.bf16.msra.mxu0 0
        %1500 = vmatpush.bf16.msra.mxu0 0
        %1501 = vmatpush.bf16.msra.mxu0 0
        %1502 = vmatpush.bf16.msra.mxu0 0
        %1503 = vmatpush.bf16.msra.mxu0 0
        %1504 = vmatpush.bf16.msra.mxu0 %v1492
        %1505 = vmatpush.bf16.msra.mxu0 %v1491
        %1506 = vmatmul.bf16.gmra.mxu0 %v1496
        %v1507 = vpop.f32.mrf.mxu0
        %v1508 = vadd.f32 %v1481, %v1507
        %v1509 = vpop.f32.mrf.mxu0
        %1510 = vdwg.mxu0
        %v1511 = vpack.c.bf16 %v1508, %v1508
        %v1512 = vunpack.c.l.bf16 %v1511
        %v1513 = vmul.f32 %v1512, 0.5
        %v1514 = vpack.c.bf16 %v1513, %v1513
        %v1515 = vmul.f32 %v1512, 0.044677734
        %v1516 = vpack.c.bf16 %v1515, %v1515
        %v1517 = vunpack.c.l.bf16 %v1516
        %v1518 = vmul.f32 %v1517, %v1512
        %v1519 = vpack.c.bf16 %v1518, %v1518
        %v1520 = vunpack.c.l.bf16 %v1519
        %v1521 = vmul.f32 %v1520, %v1512
        %v1522 = vpack.c.bf16 %v1521, %v1521
        %v1523 = vunpack.c.l.bf16 %v1522
        %v1524 = vadd.f32 %v1512, %v1523
        %v1525 = vpack.c.bf16 %v1524, %v1524
        %v1526 = vunpack.c.l.bf16 %v1525
        %v1527 = vmul.f32 %v1526, 0.796875
        %v1528 = vpack.c.bf16 %v1527, %v1527
        %v1529 = vunpack.c.l.bf16 %v1528
        %v1530 = vtanh.pop %v1529
        %v1531 = vpack.c.bf16 %v1530, %v1530
        %v1532 = vunpack.c.l.bf16 %v1531
        %v1533 = vadd.f32 %v1532, 1.0
        %v1534 = vpack.c.bf16 %v1533, %v1533
        %v1535 = vunpack.c.l.bf16 %v1514
        %v1536 = vunpack.c.l.bf16 %v1534
        %v1537 = vmul.f32 %v1535, %v1536
        %v1538 = vpack.c.bf16 %v1537, %v1537
        %v1539 = vld [vmem:[%s14] sm:$0xf]
        %v1540 = vld [vmem:[%s14 + $0x4] sm:$0xf]
        %v1541 = vld [vmem:[%s14 + $0x8] sm:$0xf]
        %v1542 = vld [vmem:[%s14 + $0xc] sm:$0xf]
        %v1543 = vld [vmem:[%s14 + $0x10] sm:$0xf]
        %v1544 = vld [vmem:[%s14 + $0x14] sm:$0xf]
        %v1545 = vld [vmem:[%s14 + $0x18] sm:$0xf]
        %v1546 = vld [vmem:[%s14 + $0x1c] sm:$0xf]
        %s1547 = scalar_lea.vmem %s12, 16
        %v1548 = vld [vmem:[%s1547] sm:$0xf]
        %v1549 = vld [vmem:[%s1547 + $0x4] sm:$0xf]
        %v1550 = vld [vmem:[%s1547 + $0x8] sm:$0xf]
        %v1551 = vld [vmem:[%s1547 + $0xc] sm:$0xf]
        %s1552 = scalar_lea.vmem %s13, 1
        %v1553 = vld [vmem:[%s1552] sm:$0x1]
        %v1555 = vperm.slane %v1553, 0
        %v1561 = vunpack.c.l.b16 %v1548
        %v1562 = vunpack.c.l.b16 %v1549
        %v1563 = vunpack.c.l.b16 %v1550
        %v1564 = vunpack.c.l.b16 %v1551
        %v1565 = vpack.c.b16 %v1562, %v1561
        %v1566 = vpack.c.b16 %v1564, %v1563
        %1569 = vmatpush.bf16.msra.mxu0 0
        %1570 = vmatpush.bf16.msra.mxu0 0
        %1571 = vmatpush.bf16.msra.mxu0 0
        %1572 = vmatpush.bf16.msra.mxu0 0
        %1573 = vmatpush.bf16.msra.mxu0 0
        %1574 = vmatpush.bf16.msra.mxu0 0
        %1575 = vmatpush.bf16.msra.mxu0 %v1566
        %1576 = vmatpush.bf16.msra.mxu0 %v1565
        %1577 = vmatmul.bf16.gmra.mxu0 %v1496
        %v1578 = vpop.f32.mrf.mxu0
        %v1579 = vadd.f32 %v1555, %v1578
        %v1580 = vpop.f32.mrf.mxu0
        %1581 = vdwg.mxu0
        %v1582 = vpack.c.bf16 %v1579, %v1579
        %v1583 = vunpack.c.l.bf16 %v1582
        %v1584 = vmul.f32 %v1583, 0.5
        %v1585 = vpack.c.bf16 %v1584, %v1584
        %v1586 = vmul.f32 %v1583, 0.044677734
        %v1587 = vpack.c.bf16 %v1586, %v1586
        %v1588 = vunpack.c.l.bf16 %v1587
        %v1589 = vmul.f32 %v1588, %v1583
        %v1590 = vpack.c.bf16 %v1589, %v1589
        %v1591 = vunpack.c.l.bf16 %v1590
        %v1592 = vmul.f32 %v1591, %v1583
        %v1593 = vpack.c.bf16 %v1592, %v1592
        %v1594 = vunpack.c.l.bf16 %v1593
        %v1595 = vadd.f32 %v1583, %v1594
        %v1596 = vpack.c.bf16 %v1595, %v1595
        %v1597 = vunpack.c.l.bf16 %v1596
        %v1598 = vmul.f32 %v1597, 0.796875
        %v1599 = vpack.c.bf16 %v1598, %v1598
        %v1600 = vunpack.c.l.bf16 %v1599
        %v1601 = vtanh.pop %v1600
        %v1602 = vpack.c.bf16 %v1601, %v1601
        %v1603 = vunpack.c.l.bf16 %v1602
        %v1604 = vadd.f32 %v1603, 1.0
        %v1605 = vpack.c.bf16 %v1604, %v1604
        %v1606 = vunpack.c.l.bf16 %v1585
        %v1607 = vunpack.c.l.bf16 %v1605
        %v1608 = vmul.f32 %v1606, %v1607
        %v1609 = vpack.c.bf16 %v1608, %v1608
        %s1610 = scalar_lea.vmem %s14, 32
        %v1611 = vld [vmem:[%s1610] sm:$0xf]
        %v1612 = vld [vmem:[%s1610 + $0x4] sm:$0xf]
        %v1613 = vld [vmem:[%s1610 + $0x8] sm:$0xf]
        %v1614 = vld [vmem:[%s1610 + $0xc] sm:$0xf]
        %v1615 = vld [vmem:[%s1610 + $0x10] sm:$0xf]
        %v1616 = vld [vmem:[%s1610 + $0x14] sm:$0xf]
        %v1617 = vld [vmem:[%s1610 + $0x18] sm:$0xf]
        %v1618 = vld [vmem:[%s1610 + $0x1c] sm:$0xf]
        %v1627 = vunpack.c.l.b16 %v1611
        %v1628 = vunpack.c.l.b16 %v1612
        %v1629 = vunpack.c.l.b16 %v1613
        %v1630 = vunpack.c.l.b16 %v1614
        %v1631 = vunpack.c.l.b16 %v1615
        %v1632 = vunpack.c.l.b16 %v1616
        %v1633 = vunpack.c.l.b16 %v1617
        %v1634 = vunpack.c.l.b16 %v1618
        %v1635 = vpack.c.b16 %v1628, %v1627
        %v1636 = vpack.c.b16 %v1630, %v1629
        %v1637 = vpack.c.b16 %v1632, %v1631
        %v1638 = vpack.c.b16 %v1634, %v1633
        %vm1643 = vcmask 523264
        %v1645 = vsel %vm1643, %v1609, 0
        %1647 = vmatpush.bf16.msra.mxu0 0
        %1648 = vmatpush.bf16.msra.mxu0 0
        %1649 = vmatpush.bf16.msra.mxu0 0
        %1650 = vmatpush.bf16.msra.mxu0 0
        %1651 = vmatpush.bf16.msra.mxu0 %v1638
        %1652 = vmatpush.bf16.msra.mxu0 %v1637
        %1653 = vmatpush.bf16.msra.mxu0 %v1636
        %1654 = vmatpush.bf16.msra.mxu0 %v1635
        %1655 = vmatmul.bf16.gmra.mxu0 %v1645
        %v1656 = vpop.f32.mrf.mxu0
        %v1657 = vadd.f32 0.0, %v1656
        %v1658 = vpop.f32.mrf.mxu0
        %1659 = vdwg.mxu0
        %v1668 = vunpack.c.l.b16 %v1539
        %v1669 = vunpack.c.l.b16 %v1540
        %v1670 = vunpack.c.l.b16 %v1541
        %v1671 = vunpack.c.l.b16 %v1542
        %v1672 = vunpack.c.l.b16 %v1543
        %v1673 = vunpack.c.l.b16 %v1544
        %v1674 = vunpack.c.l.b16 %v1545
        %v1675 = vunpack.c.l.b16 %v1546
        %v1676 = vpack.c.b16 %v1669, %v1668
        %v1677 = vpack.c.b16 %v1671, %v1670
        %v1678 = vpack.c.b16 %v1673, %v1672
        %v1679 = vpack.c.b16 %v1675, %v1674
        %v1685 = vsel %vm1643, %v1538, 0
        %1687 = vmatpush.bf16.msra.mxu0 0
        %1688 = vmatpush.bf16.msra.mxu0 0
        %1689 = vmatpush.bf16.msra.mxu0 0
        %1690 = vmatpush.bf16.msra.mxu0 0
        %1691 = vmatpush.bf16.msra.mxu0 %v1679
        %1692 = vmatpush.bf16.msra.mxu0 %v1678
        %1693 = vmatpush.bf16.msra.mxu0 %v1677
        %1694 = vmatpush.bf16.msra.mxu0 %v1676
        %1695 = vmatmul.bf16.gmra.mxu0 %v1685
        %v1696 = vpop.f32.mrf.mxu0
        %v1697 = vadd.f32 %v1657, %v1696
        %v1698 = vpop.f32.mrf.mxu0
        %1699 = vdwg.mxu0
        %v1700 = vadd.f32 %v1435, %v1697
        %v1701 = vld [vmem:[%s15] sm:$0x1]
        %v1703 = vperm.slane %v1701, 0
        %v1705 = vadd.f32 %v1700, %v1703
        %1706 = vst.msk [vmem:[%s611] sm:$0xff] %vm665, %v1705
        %s1707 = sand.u32 %s398, 1
        %s1708 = scalar_lea.sflag [#allocation6], %s1707
        %s1709 = sand.u32 %s398, 1
        %s1710 = smul.addr %s1709, 8
        %s1711 = scalar_lea.vmem [#allocation13], %s1710
        // Predicated region
        $region133: #{tpu_custom_call.1} parent=83 // pred_check
          %p1712 = pneg %p408
        $region134: #{tpu_custom_call.1} parent=83 // pred_check_branch
          %1714 = sbr.rel (%p1712) target = $region136
        $region135: #{tpu_custom_call.1} parent=83 // pred_region
          %1716 = vsyncadd %s1708, 0
          %s1717 = smul.addr %s37, 2
          %s1718 = sadd.s32 %s38, %s1717
          %s1719 = smul.addr %s1718, 8
          %s1720 = scalar_lea.hbm %s16, %s1719
          %s1722 = sshll.u32 %s1711, 4
          %s1723 = int_to_ptr.vmem [resolvable:$true] %s1722
          %s1724 = sshll.u32 %s1720, 4
          %s1725 = int_to_ptr.hbm [resolvable:$true] %s1724
          %1727 = dma.vmem_to_hbm [thread:$0]  %s1723, 128, %s1725, %s1708
        $region136: #{tpu_custom_call.1} parent=83 // pred_fallthru
          _
      $region84: #{tpu_custom_call.1} parent=5 // pred_fallthru
        _
      %p1728 = scmp.le.s32.totalorder 2, %s28
      // Predicated region
      $region137: #{tpu_custom_call.1} parent=5 // pred_check
        %p1729 = pneg %p1728
      $region138: #{tpu_custom_call.1} parent=5 // pred_check_branch
        %1731 = sbr.rel (%p1729) target = $region140
      $region139: #{tpu_custom_call.1} parent=5 // pred_region
        %s1732 = ssub.s32 %s28, 2
        // Predicated region
        $region141: #{tpu_custom_call.1} parent=139 // pred_check
          %p1733 = pneg %p414
        $region142: #{tpu_custom_call.1} parent=139 // pred_check_branch
          %1735 = sbr.rel (%p1733) target = $region144
        $region143: #{tpu_custom_call.1} parent=139 // pred_region
          %s1736 = sand.u32 %s399, 1
          %s1737 = scalar_lea.sflag [#allocation6], %s1736
          %s1738 = sand.u32 %s399, 1
          %s1739 = smul.addr %s1738, 8
          %s1740 = scalar_lea.vmem [#allocation13], %s1739
          %1742 = dma.done %s1737, 128
        $region144: #{tpu_custom_call.1} parent=139 // pred_fallthru
          _
      $region140: #{tpu_custom_call.1} parent=5 // pred_fallthru
        _
    $region6: #{tpu_custom_call.1} parent=1 // loop_footer
      %s32 = sadd.s32 1, %s28
    $region7: #{tpu_custom_call.1} parent=1 // loop_footer_branch
      %27 = sbr.rel target = $region3
    $region8: #{tpu_custom_call.1} parent=1 // loop_exit
      _
    %1743 = vsyncpa [#allocation5], 1
    %s1744 = scalar_lea.sflag [#allocation5], 1
    %1745 = vsyncpa %s1744, 1
    %1746 = vsyncpa [#allocation8], 1
    %1747 = vsyncpa [#allocation11], 1
    %1748 = vsyncpa [#allocation6], 1
    %s1749 = scalar_lea.sflag [#allocation6], 1
    %1750 = vsyncpa %s1749, 1

</llo_original>
